<compile_context>
chip_gen: v6e
topology: v6e:2x2x1
jax: 0.10.0
libtpu: 0.0.40
codegen_flags: <defaults>
</compile_context>

<pallas_src>
import functools

import jax
import jax.numpy as jnp
from jax.experimental import pallas as pl
from jax.experimental.pallas import tpu as pltpu


def _round_up(x, m):
    return ((x + m - 1) // m) * m


# -----------------------------------------------------------------------------
# Fused Pallas kernel: all GAT layers + all heads for one batch per grid point.
# -----------------------------------------------------------------------------
def _attention_head(feat, a, mask):
    """feat: (N, F) f32, a: (F, 2) bf16 [a_src | a_dst], mask: (N, N) bool."""
    # Attention logits via a single MXU matmul instead of cross-lane reductions.
    s = jnp.dot(feat.astype(jnp.bfloat16), a,
                preferred_element_type=jnp.float32)               # (N, 2)
    e_src = s[:, 0:1]                                             # (N, 1)
    e_dst = jnp.transpose(s[:, 1:2])                              # (1, N)
    e = e_src + e_dst                                             # (N, N)
    # LeakyReLU(0.2)
    e = jnp.where(e > 0, e, 0.2 * e)
    # Masked softmax over neighbors j.
    e = jnp.where(mask, e, jnp.float32(-1e30))
    e = e - jnp.max(e, axis=-1, keepdims=True)
    p = jnp.where(mask, jnp.exp(e), jnp.float32(0.0))             # (N, N)
    denom = jnp.sum(p, axis=-1, keepdims=True)                    # (N, 1)
    alpha = p * pl.reciprocal(denom + jnp.float32(1e-9), approx=True)
    # Neighborhood aggregation on the MXU.
    out = jnp.dot(alpha.astype(jnp.bfloat16), feat.astype(jnp.bfloat16),
                  preferred_element_type=jnp.float32)             # (N, F)
    return out


def fused_gat_kernel(*refs, num_layers, heads):
    # refs = (x_ref, adj_ref, [w_ref, a_ref] * num_layers, o_ref)
    x_ref, adj_ref = refs[0], refs[1]
    layer_refs = refs[2:2 + 2 * num_layers]
    o_ref = refs[-1]

    x = x_ref[0].astype(jnp.float32)            # (N, Fin)
    adj = adj_ref[0]                            # (N, N)
    mask = adj > jnp.float32(0.0)

    for layer in range(num_layers):
        w_ref = layer_refs[2 * layer]           # (H, Fin_l, Fout_l[_padded]) bf16
        a_ref = layer_refs[2 * layer + 1]       # (H, Fout_l[_padded], 2)     bf16
        last = layer == num_layers - 1
        xb = x.astype(jnp.bfloat16)

        head_outs = []
        for h in range(heads[layer]):
            feat = jnp.dot(xb, w_ref[h],
                           preferred_element_type=jnp.float32)    # (N, Fout)
            head_outs.append(_attention_head(feat, a_ref[h], mask))

        if last:
            # Mean over heads (output layer, no activation).
            x = sum(head_outs) * (1.0 / heads[layer])
        else:
            # Concat heads + activation (ReLU).
            x = jnp.maximum(jnp.concatenate(head_outs, axis=-1), jnp.float32(0.0))

    o_ref[0] = x.astype(o_ref.dtype)            # (N, Fout_padded), lane-dense


# -----------------------------------------------------------------------------
# JAX wrapper: one pallas_call for the whole GATts forward.
# -----------------------------------------------------------------------------
def mfu_gatts_forward(drug_feat, adj, params, *, out_dim=978):
    """drug_feat: (B, N, indim); adj: (B, N, N) -> (B*N, out_dim)."""
    B, N, Fin = drug_feat.shape
    num_layers = len(params)
    heads = tuple(w.shape[0] for (w, _a) in params)
    f_pad = params[-1][0].shape[-1]             # lane-dense padded output width

    in_specs = [
        pl.BlockSpec((1, N, Fin), lambda b: (b, 0, 0)),   # x   (per batch)
        pl.BlockSpec((1, N, N), lambda b: (b, 0, 0)),     # adj (per batch)
    ]
    args = [drug_feat, adj]
    for (w, a) in params:
        # Full-weight blocks with constant index_map: fetched once, resident
        # across the batch grid sweep.
        in_specs.append(pl.BlockSpec(w.shape, lambda b: (0, 0, 0)))
        in_specs.append(pl.BlockSpec(a.shape, lambda b: (0, 0, 0)))
        args.extend([w, a])

    kernel = functools.partial(fused_gat_kernel, num_layers=num_layers, heads=heads)

    out = pl.pallas_call(
        kernel,
        out_shape=jax.ShapeDtypeStruct((B, N, f_pad), jnp.float32),
        grid=(B,),
        in_specs=in_specs,
        out_specs=pl.BlockSpec((1, N, f_pad), lambda b: (b, 0, 0)),
        compiler_params=pltpu.CompilerParams(dimension_semantics=("parallel",)),
    )(*args)

    # GATts.forward: new_drug_feature.reshape([-1, 978]); drop lane padding.
    return out[..., :out_dim].reshape(-1, out_dim)


# -----------------------------------------------------------------------------
# Deterministic parameter init mirroring the GAT __init__ shapes.
# Weights stored in bf16; final layer padded to a multiple of 128 lanes with
# zeros (zero columns/rows are mathematically inert and sliced off afterwards).
# -----------------------------------------------------------------------------
def init_params(key, *, indim, hdim, outdim, heads, layers):
    params = []
    fin = indim
    for layer in range(layers):
        last = layer == layers - 1
        fout = outdim if last else hdim
        fpad = _round_up(fout, 128) if last else fout
        h = heads[layer]
        key, kw, ks, kd = jax.random.split(key, 4)
        w = jax.random.normal(kw, (h, fin, fout), jnp.float32) * (1.0 / jnp.sqrt(fin))
        a_src = jax.random.normal(ks, (h, fout), jnp.float32) * 0.1
        a_dst = jax.random.normal(kd, (h, fout), jnp.float32) * 0.1

        w_p = jnp.zeros((h, fin, fpad), jnp.float32).at[:, :, :fout].set(w)
        a_p = jnp.zeros((h, fpad, 2), jnp.float32)
        a_p = a_p.at[:, :fout, 0].set(a_src).at[:, :fout, 1].set(a_dst)

        params.append((w_p.astype(jnp.bfloat16), a_p.astype(jnp.bfloat16)))
        fin = (fout * h) if not last else fout  # hidden layers concat heads
    return params


# -----------------------------------------------------------------------------
# Example run.
# -----------------------------------------------------------------------------
if __name__ == "__main__":
    # Module-consistent small config:
    #   GATts_layers=2, GATts_head=2, GATts_indim=16, GATts_hdim=32, GATts_outdim=978
    B, N = 2, 8
    INDIM, HDIM, OUTDIM = 16, 32, 978
    LAYERS, HEAD = 2, 2
    heads = [HEAD] * LAYERS

    key = jax.random.PRNGKey(0)
    key, kx = jax.random.split(key)
    drug_feat = jax.random.normal(kx, (B, N, INDIM), jnp.float32)

    # Deterministic adjacency: ring graph with self-loops (graph structure comes
    # from feat_dict in the original pipeline; built synthetically here).
    eye = jnp.eye(N, dtype=jnp.float32)
    ring = jnp.roll(eye, 1, axis=1) + jnp.roll(eye, -1, axis=1)
    adj_single = jnp.clip(eye + ring, 0.0, 1.0)
    adj = jnp.broadcast_to(adj_single, (B, N, N))

    params = init_params(
        key, indim=INDIM, hdim=HDIM, outdim=OUTDIM, heads=heads, layers=LAYERS
    )

    out = mfu_gatts_forward(drug_feat, adj, params, out_dim=OUTDIM)
    out = jax.block_until_ready(out)

    assert out.shape == (B * N, OUTDIM), out.shape
    assert jnp.all(jnp.isfinite(out))
    print("KERNEL_OK")
</pallas_src>

<mosaic_0001>
module attributes {stable_mosaic.version = 11 : i64} {
  func.func @fused_gat_kernel(%arg0: i32, %arg1: memref<1x8x16xf32, #tpu.memory_space<vmem>>, %arg2: memref<1x8x8xf32, #tpu.memory_space<vmem>>, %arg3: memref<2x16x32xbf16, #tpu.memory_space<vmem>>, %arg4: memref<2x32x2xbf16, #tpu.memory_space<vmem>>, %arg5: memref<2x64x1024xbf16, #tpu.memory_space<vmem>>, %arg6: memref<2x1024x2xbf16, #tpu.memory_space<vmem>>, %arg7: memref<1x8x1024xf32, #tpu.memory_space<vmem>>) attributes {dimension_semantics = [#tpu.dimension_semantics<parallel>], iteration_bounds = array<i64: 2>, scalar_prefetch = 0 : i64, scratch_operands = 0 : i64, tpu.core_type = #tpu.core_type<tc>, window_params = [{transform_indices = @transform_0, window_bounds = array<i64: 1, 8, 16>}, {transform_indices = @transform_1, window_bounds = array<i64: 1, 8, 8>}, {pipeline_mode = #tpu.pipeline_mode<synchronous>, transform_indices = @transform_2, window_bounds = array<i64: 2, 16, 32>}, {pipeline_mode = #tpu.pipeline_mode<synchronous>, transform_indices = @transform_3, window_bounds = array<i64: 2, 32, 2>}, {pipeline_mode = #tpu.pipeline_mode<synchronous>, transform_indices = @transform_4, window_bounds = array<i64: 2, 64, 1024>}, {pipeline_mode = #tpu.pipeline_mode<synchronous>, transform_indices = @transform_5, window_bounds = array<i64: 2, 1024, 2>}, {transform_indices = @transform_6, window_bounds = array<i64: 1, 8, 1024>}]} {
    %c0 = arith.constant 0 : index
    %c0_0 = arith.constant 0 : index
    %c0_1 = arith.constant 0 : index
    %0 = vector.load %arg1[%c0, %c0_0, %c0_1] : memref<1x8x16xf32, #tpu.memory_space<vmem>>, vector<1x8x16xf32>
    %1 = vector.shape_cast %0 : vector<1x8x16xf32> to vector<8x16xf32>
    %c0_2 = arith.constant 0 : index
    %c0_3 = arith.constant 0 : index
    %c0_4 = arith.constant 0 : index
    %2 = vector.load %arg2[%c0_2, %c0_3, %c0_4] : memref<1x8x8xf32, #tpu.memory_space<vmem>>, vector<1x8x8xf32>
    %3 = vector.shape_cast %2 : vector<1x8x8xf32> to vector<8x8xf32>
    %cst = arith.constant 0.000000e+00 : f32
    %4 = vector.broadcast %cst : f32 to vector<8x8xf32>
    %5 = arith.cmpf ogt, %3, %4 : vector<8x8xf32>
    %6 = arith.truncf %1 : vector<8x16xf32> to vector<8x16xbf16>
    %c0_5 = arith.constant 0 : index
    %c0_6 = arith.constant 0 : index
    %c0_7 = arith.constant 0 : index
    %7 = vector.load %arg3[%c0_5, %c0_6, %c0_7] : memref<2x16x32xbf16, #tpu.memory_space<vmem>>, vector<1x16x32xbf16>
    %8 = vector.shape_cast %7 : vector<1x16x32xbf16> to vector<16x32xbf16>
    %cst_8 = arith.constant dense<0.000000e+00> : vector<8x32xf32>
    %9 = tpu.matmul %6, %8, %cst_8 {dimension_numbers = #tpu.dot_dimension_numbers<[1], [0], [0], [1], [0, 0, 1, 1], [], []>} : vector<8x16xbf16>, vector<16x32xbf16>, vector<8x32xf32> -> vector<8x32xf32>
    %c0_9 = arith.constant 0 : index
    %c0_10 = arith.constant 0 : index
    %c0_11 = arith.constant 0 : index
    %10 = vector.load %arg4[%c0_9, %c0_10, %c0_11] : memref<2x32x2xbf16, #tpu.memory_space<vmem>>, vector<1x32x2xbf16>
    %11 = vector.shape_cast %10 : vector<1x32x2xbf16> to vector<32x2xbf16>
    %12 = arith.truncf %9 : vector<8x32xf32> to vector<8x32xbf16>
    %cst_12 = arith.constant dense<0.000000e+00> : vector<8x2xf32>
    %13 = tpu.matmul %12, %11, %cst_12 {dimension_numbers = #tpu.dot_dimension_numbers<[1], [0], [0], [1], [0, 0, 1, 1], [], []>} : vector<8x32xbf16>, vector<32x2xbf16>, vector<8x2xf32> -> vector<8x2xf32>
    %14 = vector.extract_strided_slice %13 {offsets = [0, 0], sizes = [8, 1], strides = [1, 1]} : vector<8x2xf32> to vector<8x1xf32>
    %15 = vector.extract_strided_slice %13 {offsets = [0, 1], sizes = [8, 1], strides = [1, 1]} : vector<8x2xf32> to vector<8x1xf32>
    %16 = tpu.transpose %15, [1, 0] : vector<8x1xf32> -> vector<1x8xf32>
    %17 = vector.broadcast %14 : vector<8x1xf32> to vector<8x8xf32>
    %18 = vector.broadcast %16 : vector<1x8xf32> to vector<8x8xf32>
    %19 = arith.addf %17, %18 : vector<8x8xf32>
    %cst_13 = arith.constant 0.000000e+00 : f32
    %20 = vector.broadcast %cst_13 : f32 to vector<8x8xf32>
    %21 = arith.cmpf ogt, %19, %20 : vector<8x8xf32>
    %cst_14 = arith.constant 2.000000e-01 : f32
    %22 = vector.broadcast %cst_14 : f32 to vector<8x8xf32>
    %23 = arith.mulf %22, %19 : vector<8x8xf32>
    %24 = arith.select %21, %19, %23 : vector<8x8xi1>, vector<8x8xf32>
    %cst_15 = arith.constant -1.000000e+30 : f32
    %25 = vector.broadcast %cst_15 : f32 to vector<8x8xf32>
    %26 = arith.select %5, %24, %25 : vector<8x8xi1>, vector<8x8xf32>
    %cst_16 = arith.constant dense<0xFF800000> : vector<8xf32>
    %27 = vector.multi_reduction <maximumf>, %26, %cst_16 [1] : vector<8x8xf32> to vector<8xf32>
    %28 = vector.shape_cast %27 : vector<8xf32> to vector<8x1xf32>
    %29 = vector.broadcast %28 : vector<8x1xf32> to vector<8x8xf32>
    %30 = arith.subf %26, %29 : vector<8x8xf32>
    %31 = math.exp %30 : vector<8x8xf32>
    %cst_17 = arith.constant 0.000000e+00 : f32
    %32 = vector.broadcast %cst_17 : f32 to vector<8x8xf32>
    %33 = arith.select %5, %31, %32 : vector<8x8xi1>, vector<8x8xf32>
    %cst_18 = arith.constant dense<0.000000e+00> : vector<8xf32>
    %34 = vector.multi_reduction <add>, %33, %cst_18 [1] : vector<8x8xf32> to vector<8xf32>
    %35 = vector.shape_cast %34 : vector<8xf32> to vector<8x1xf32>
    %cst_19 = arith.constant 9.99999971E-10 : f32
    %36 = vector.broadcast %cst_19 : f32 to vector<8x1xf32>
    %37 = arith.addf %35, %36 : vector<8x1xf32>
    %38 = tpu.reciprocal %37 {approx = true} : vector<8x1xf32> -> vector<8x1xf32>
    %39 = vector.broadcast %38 : vector<8x1xf32> to vector<8x8xf32>
    %40 = arith.mulf %33, %39 : vector<8x8xf32>
    %41 = arith.truncf %40 : vector<8x8xf32> to vector<8x8xbf16>
    %42 = arith.truncf %9 : vector<8x32xf32> to vector<8x32xbf16>
    %cst_20 = arith.constant dense<0.000000e+00> : vector<8x32xf32>
    %43 = tpu.matmul %41, %42, %cst_20 {dimension_numbers = #tpu.dot_dimension_numbers<[1], [0], [0], [1], [0, 0, 1, 1], [], []>} : vector<8x8xbf16>, vector<8x32xbf16>, vector<8x32xf32> -> vector<8x32xf32>
    %c1 = arith.constant 1 : index
    %c0_21 = arith.constant 0 : index
    %c0_22 = arith.constant 0 : index
    %44 = vector.load %arg3[%c1, %c0_21, %c0_22] : memref<2x16x32xbf16, #tpu.memory_space<vmem>>, vector<1x16x32xbf16>
    %45 = vector.shape_cast %44 : vector<1x16x32xbf16> to vector<16x32xbf16>
    %cst_23 = arith.constant dense<0.000000e+00> : vector<8x32xf32>
    %46 = tpu.matmul %6, %45, %cst_23 {dimension_numbers = #tpu.dot_dimension_numbers<[1], [0], [0], [1], [0, 0, 1, 1], [], []>} : vector<8x16xbf16>, vector<16x32xbf16>, vector<8x32xf32> -> vector<8x32xf32>
    %c1_24 = arith.constant 1 : index
    %c0_25 = arith.constant 0 : index
    %c0_26 = arith.constant 0 : index
    %47 = vector.load %arg4[%c1_24, %c0_25, %c0_26] : memref<2x32x2xbf16, #tpu.memory_space<vmem>>, vector<1x32x2xbf16>
    %48 = vector.shape_cast %47 : vector<1x32x2xbf16> to vector<32x2xbf16>
    %49 = arith.truncf %46 : vector<8x32xf32> to vector<8x32xbf16>
    %cst_27 = arith.constant dense<0.000000e+00> : vector<8x2xf32>
    %50 = tpu.matmul %49, %48, %cst_27 {dimension_numbers = #tpu.dot_dimension_numbers<[1], [0], [0], [1], [0, 0, 1, 1], [], []>} : vector<8x32xbf16>, vector<32x2xbf16>, vector<8x2xf32> -> vector<8x2xf32>
    %51 = vector.extract_strided_slice %50 {offsets = [0, 0], sizes = [8, 1], strides = [1, 1]} : vector<8x2xf32> to vector<8x1xf32>
    %52 = vector.extract_strided_slice %50 {offsets = [0, 1], sizes = [8, 1], strides = [1, 1]} : vector<8x2xf32> to vector<8x1xf32>
    %53 = tpu.transpose %52, [1, 0] : vector<8x1xf32> -> vector<1x8xf32>
    %54 = vector.broadcast %51 : vector<8x1xf32> to vector<8x8xf32>
    %55 = vector.broadcast %53 : vector<1x8xf32> to vector<8x8xf32>
    %56 = arith.addf %54, %55 : vector<8x8xf32>
    %cst_28 = arith.constant 0.000000e+00 : f32
    %57 = vector.broadcast %cst_28 : f32 to vector<8x8xf32>
    %58 = arith.cmpf ogt, %56, %57 : vector<8x8xf32>
    %cst_29 = arith.constant 2.000000e-01 : f32
    %59 = vector.broadcast %cst_29 : f32 to vector<8x8xf32>
    %60 = arith.mulf %59, %56 : vector<8x8xf32>
    %61 = arith.select %58, %56, %60 : vector<8x8xi1>, vector<8x8xf32>
    %cst_30 = arith.constant -1.000000e+30 : f32
    %62 = vector.broadcast %cst_30 : f32 to vector<8x8xf32>
    %63 = arith.select %5, %61, %62 : vector<8x8xi1>, vector<8x8xf32>
    %cst_31 = arith.constant dense<0xFF800000> : vector<8xf32>
    %64 = vector.multi_reduction <maximumf>, %63, %cst_31 [1] : vector<8x8xf32> to vector<8xf32>
    %65 = vector.shape_cast %64 : vector<8xf32> to vector<8x1xf32>
    %66 = vector.broadcast %65 : vector<8x1xf32> to vector<8x8xf32>
    %67 = arith.subf %63, %66 : vector<8x8xf32>
    %68 = math.exp %67 : vector<8x8xf32>
    %cst_32 = arith.constant 0.000000e+00 : f32
    %69 = vector.broadcast %cst_32 : f32 to vector<8x8xf32>
    %70 = arith.select %5, %68, %69 : vector<8x8xi1>, vector<8x8xf32>
    %cst_33 = arith.constant dense<0.000000e+00> : vector<8xf32>
    %71 = vector.multi_reduction <add>, %70, %cst_33 [1] : vector<8x8xf32> to vector<8xf32>
    %72 = vector.shape_cast %71 : vector<8xf32> to vector<8x1xf32>
    %cst_34 = arith.constant 9.99999971E-10 : f32
    %73 = vector.broadcast %cst_34 : f32 to vector<8x1xf32>
    %74 = arith.addf %72, %73 : vector<8x1xf32>
    %75 = tpu.reciprocal %74 {approx = true} : vector<8x1xf32> -> vector<8x1xf32>
    %76 = vector.broadcast %75 : vector<8x1xf32> to vector<8x8xf32>
    %77 = arith.mulf %70, %76 : vector<8x8xf32>
    %78 = arith.truncf %77 : vector<8x8xf32> to vector<8x8xbf16>
    %79 = arith.truncf %46 : vector<8x32xf32> to vector<8x32xbf16>
    %cst_35 = arith.constant dense<0.000000e+00> : vector<8x32xf32>
    %80 = tpu.matmul %78, %79, %cst_35 {dimension_numbers = #tpu.dot_dimension_numbers<[1], [0], [0], [1], [0, 0, 1, 1], [], []>} : vector<8x8xbf16>, vector<8x32xbf16>, vector<8x32xf32> -> vector<8x32xf32>
    %81 = tpu.concatenate %43, %80 in 1 : vector<8x32xf32>, vector<8x32xf32> -> vector<8x64xf32>
    %cst_36 = arith.constant 0.000000e+00 : f32
    %82 = vector.broadcast %cst_36 : f32 to vector<8x64xf32>
    %83 = arith.maximumf %81, %82 : vector<8x64xf32>
    %84 = arith.truncf %83 : vector<8x64xf32> to vector<8x64xbf16>
    %c0_37 = arith.constant 0 : index
    %c0_38 = arith.constant 0 : index
    %c0_39 = arith.constant 0 : index
    %85 = vector.load %arg5[%c0_37, %c0_38, %c0_39] : memref<2x64x1024xbf16, #tpu.memory_space<vmem>>, vector<1x64x1024xbf16>
    %86 = vector.shape_cast %85 : vector<1x64x1024xbf16> to vector<64x1024xbf16>
    %cst_40 = arith.constant dense<0.000000e+00> : vector<8x1024xf32>
    %87 = tpu.matmul %84, %86, %cst_40 {dimension_numbers = #tpu.dot_dimension_numbers<[1], [0], [0], [1], [0, 0, 1, 1], [], []>} : vector<8x64xbf16>, vector<64x1024xbf16>, vector<8x1024xf32> -> vector<8x1024xf32>
    %c0_41 = arith.constant 0 : index
    %c0_42 = arith.constant 0 : index
    %c0_43 = arith.constant 0 : index
    %88 = vector.load %arg6[%c0_41, %c0_42, %c0_43] : memref<2x1024x2xbf16, #tpu.memory_space<vmem>>, vector<1x1024x2xbf16>
    %89 = vector.shape_cast %88 : vector<1x1024x2xbf16> to vector<1024x2xbf16>
    %90 = arith.truncf %87 : vector<8x1024xf32> to vector<8x1024xbf16>
    %cst_44 = arith.constant dense<0.000000e+00> : vector<8x2xf32>
    %91 = tpu.matmul %90, %89, %cst_44 {dimension_numbers = #tpu.dot_dimension_numbers<[1], [0], [0], [1], [0, 0, 1, 1], [], []>} : vector<8x1024xbf16>, vector<1024x2xbf16>, vector<8x2xf32> -> vector<8x2xf32>
    %92 = vector.extract_strided_slice %91 {offsets = [0, 0], sizes = [8, 1], strides = [1, 1]} : vector<8x2xf32> to vector<8x1xf32>
    %93 = vector.extract_strided_slice %91 {offsets = [0, 1], sizes = [8, 1], strides = [1, 1]} : vector<8x2xf32> to vector<8x1xf32>
    %94 = tpu.transpose %93, [1, 0] : vector<8x1xf32> -> vector<1x8xf32>
    %95 = vector.broadcast %92 : vector<8x1xf32> to vector<8x8xf32>
    %96 = vector.broadcast %94 : vector<1x8xf32> to vector<8x8xf32>
    %97 = arith.addf %95, %96 : vector<8x8xf32>
    %cst_45 = arith.constant 0.000000e+00 : f32
    %98 = vector.broadcast %cst_45 : f32 to vector<8x8xf32>
    %99 = arith.cmpf ogt, %97, %98 : vector<8x8xf32>
    %cst_46 = arith.constant 2.000000e-01 : f32
    %100 = vector.broadcast %cst_46 : f32 to vector<8x8xf32>
    %101 = arith.mulf %100, %97 : vector<8x8xf32>
    %102 = arith.select %99, %97, %101 : vector<8x8xi1>, vector<8x8xf32>
    %cst_47 = arith.constant -1.000000e+30 : f32
    %103 = vector.broadcast %cst_47 : f32 to vector<8x8xf32>
    %104 = arith.select %5, %102, %103 : vector<8x8xi1>, vector<8x8xf32>
    %cst_48 = arith.constant dense<0xFF800000> : vector<8xf32>
    %105 = vector.multi_reduction <maximumf>, %104, %cst_48 [1] : vector<8x8xf32> to vector<8xf32>
    %106 = vector.shape_cast %105 : vector<8xf32> to vector<8x1xf32>
    %107 = vector.broadcast %106 : vector<8x1xf32> to vector<8x8xf32>
    %108 = arith.subf %104, %107 : vector<8x8xf32>
    %109 = math.exp %108 : vector<8x8xf32>
    %cst_49 = arith.constant 0.000000e+00 : f32
    %110 = vector.broadcast %cst_49 : f32 to vector<8x8xf32>
    %111 = arith.select %5, %109, %110 : vector<8x8xi1>, vector<8x8xf32>
    %cst_50 = arith.constant dense<0.000000e+00> : vector<8xf32>
    %112 = vector.multi_reduction <add>, %111, %cst_50 [1] : vector<8x8xf32> to vector<8xf32>
    %113 = vector.shape_cast %112 : vector<8xf32> to vector<8x1xf32>
    %cst_51 = arith.constant 9.99999971E-10 : f32
    %114 = vector.broadcast %cst_51 : f32 to vector<8x1xf32>
    %115 = arith.addf %113, %114 : vector<8x1xf32>
    %116 = tpu.reciprocal %115 {approx = true} : vector<8x1xf32> -> vector<8x1xf32>
    %117 = vector.broadcast %116 : vector<8x1xf32> to vector<8x8xf32>
    %118 = arith.mulf %111, %117 : vector<8x8xf32>
    %119 = arith.truncf %118 : vector<8x8xf32> to vector<8x8xbf16>
    %120 = arith.truncf %87 : vector<8x1024xf32> to vector<8x1024xbf16>
    %cst_52 = arith.constant dense<0.000000e+00> : vector<8x1024xf32>
    %121 = tpu.matmul %119, %120, %cst_52 {dimension_numbers = #tpu.dot_dimension_numbers<[1], [0], [0], [1], [0, 0, 1, 1], [], []>} : vector<8x8xbf16>, vector<8x1024xbf16>, vector<8x1024xf32> -> vector<8x1024xf32>
    %c1_53 = arith.constant 1 : index
    %c0_54 = arith.constant 0 : index
    %c0_55 = arith.constant 0 : index
    %122 = vector.load %arg5[%c1_53, %c0_54, %c0_55] : memref<2x64x1024xbf16, #tpu.memory_space<vmem>>, vector<1x64x1024xbf16>
    %123 = vector.shape_cast %122 : vector<1x64x1024xbf16> to vector<64x1024xbf16>
    %cst_56 = arith.constant dense<0.000000e+00> : vector<8x1024xf32>
    %124 = tpu.matmul %84, %123, %cst_56 {dimension_numbers = #tpu.dot_dimension_numbers<[1], [0], [0], [1], [0, 0, 1, 1], [], []>} : vector<8x64xbf16>, vector<64x1024xbf16>, vector<8x1024xf32> -> vector<8x1024xf32>
    %c1_57 = arith.constant 1 : index
    %c0_58 = arith.constant 0 : index
    %c0_59 = arith.constant 0 : index
    %125 = vector.load %arg6[%c1_57, %c0_58, %c0_59] : memref<2x1024x2xbf16, #tpu.memory_space<vmem>>, vector<1x1024x2xbf16>
    %126 = vector.shape_cast %125 : vector<1x1024x2xbf16> to vector<1024x2xbf16>
    %127 = arith.truncf %124 : vector<8x1024xf32> to vector<8x1024xbf16>
    %cst_60 = arith.constant dense<0.000000e+00> : vector<8x2xf32>
    %128 = tpu.matmul %127, %126, %cst_60 {dimension_numbers = #tpu.dot_dimension_numbers<[1], [0], [0], [1], [0, 0, 1, 1], [], []>} : vector<8x1024xbf16>, vector<1024x2xbf16>, vector<8x2xf32> -> vector<8x2xf32>
    %129 = vector.extract_strided_slice %128 {offsets = [0, 0], sizes = [8, 1], strides = [1, 1]} : vector<8x2xf32> to vector<8x1xf32>
    %130 = vector.extract_strided_slice %128 {offsets = [0, 1], sizes = [8, 1], strides = [1, 1]} : vector<8x2xf32> to vector<8x1xf32>
    %131 = tpu.transpose %130, [1, 0] : vector<8x1xf32> -> vector<1x8xf32>
    %132 = vector.broadcast %129 : vector<8x1xf32> to vector<8x8xf32>
    %133 = vector.broadcast %131 : vector<1x8xf32> to vector<8x8xf32>
    %134 = arith.addf %132, %133 : vector<8x8xf32>
    %cst_61 = arith.constant 0.000000e+00 : f32
    %135 = vector.broadcast %cst_61 : f32 to vector<8x8xf32>
    %136 = arith.cmpf ogt, %134, %135 : vector<8x8xf32>
    %cst_62 = arith.constant 2.000000e-01 : f32
    %137 = vector.broadcast %cst_62 : f32 to vector<8x8xf32>
    %138 = arith.mulf %137, %134 : vector<8x8xf32>
    %139 = arith.select %136, %134, %138 : vector<8x8xi1>, vector<8x8xf32>
    %cst_63 = arith.constant -1.000000e+30 : f32
    %140 = vector.broadcast %cst_63 : f32 to vector<8x8xf32>
    %141 = arith.select %5, %139, %140 : vector<8x8xi1>, vector<8x8xf32>
    %cst_64 = arith.constant dense<0xFF800000> : vector<8xf32>
    %142 = vector.multi_reduction <maximumf>, %141, %cst_64 [1] : vector<8x8xf32> to vector<8xf32>
    %143 = vector.shape_cast %142 : vector<8xf32> to vector<8x1xf32>
    %144 = vector.broadcast %143 : vector<8x1xf32> to vector<8x8xf32>
    %145 = arith.subf %141, %144 : vector<8x8xf32>
    %146 = math.exp %145 : vector<8x8xf32>
    %cst_65 = arith.constant 0.000000e+00 : f32
    %147 = vector.broadcast %cst_65 : f32 to vector<8x8xf32>
    %148 = arith.select %5, %146, %147 : vector<8x8xi1>, vector<8x8xf32>
    %cst_66 = arith.constant dense<0.000000e+00> : vector<8xf32>
    %149 = vector.multi_reduction <add>, %148, %cst_66 [1] : vector<8x8xf32> to vector<8xf32>
    %150 = vector.shape_cast %149 : vector<8xf32> to vector<8x1xf32>
    %cst_67 = arith.constant 9.99999971E-10 : f32
    %151 = vector.broadcast %cst_67 : f32 to vector<8x1xf32>
    %152 = arith.addf %150, %151 : vector<8x1xf32>
    %153 = tpu.reciprocal %152 {approx = true} : vector<8x1xf32> -> vector<8x1xf32>
    %154 = vector.broadcast %153 : vector<8x1xf32> to vector<8x8xf32>
    %155 = arith.mulf %148, %154 : vector<8x8xf32>
    %156 = arith.truncf %155 : vector<8x8xf32> to vector<8x8xbf16>
    %157 = arith.truncf %124 : vector<8x1024xf32> to vector<8x1024xbf16>
    %cst_68 = arith.constant dense<0.000000e+00> : vector<8x1024xf32>
    %158 = tpu.matmul %156, %157, %cst_68 {dimension_numbers = #tpu.dot_dimension_numbers<[1], [0], [0], [1], [0, 0, 1, 1], [], []>} : vector<8x8xbf16>, vector<8x1024xbf16>, vector<8x1024xf32> -> vector<8x1024xf32>
    %cst_69 = arith.constant 0.000000e+00 : f32
    %159 = vector.broadcast %cst_69 : f32 to vector<8x1024xf32>
    %160 = arith.addf %159, %121 : vector<8x1024xf32>
    %161 = arith.addf %160, %158 : vector<8x1024xf32>
    %cst_70 = arith.constant 5.000000e-01 : f32
    %162 = vector.broadcast %cst_70 : f32 to vector<8x1024xf32>
    %163 = arith.mulf %161, %162 : vector<8x1024xf32>
    %c0_71 = arith.constant 0 : index
    %c0_72 = arith.constant 0 : index
    %c0_73 = arith.constant 0 : index
    %164 = vector.load %arg7[%c0_71, %c0_72, %c0_73] : memref<1x8x1024xf32, #tpu.memory_space<vmem>>, vector<1x8x1024xf32>
    %165 = vector.shape_cast %164 : vector<1x8x1024xf32> to vector<8x1024xf32>
    %166 = vector.shape_cast %163 : vector<8x1024xf32> to vector<1x8x1024xf32>
    tpu.vector_store %arg7[%c0_71, %c0_72, %c0_73], %166 {strides = array<i32>} : memref<1x8x1024xf32, #tpu.memory_space<vmem>>, vector<1x8x1024xf32>,
    return
  }
  func.func @transform_0(%arg0: i32) -> (i32, i32, i32) {
    %c0_i32 = arith.constant 0 : i32
    %c0_i32_0 = arith.constant 0 : i32
    %c0_i32_1 = arith.constant 0 : i32
    return %arg0, %c0_i32, %c0_i32_0 : i32, i32, i32
  }
  func.func @transform_1(%arg0: i32) -> (i32, i32, i32) {
    %c0_i32 = arith.constant 0 : i32
    %c0_i32_0 = arith.constant 0 : i32
    %c0_i32_1 = arith.constant 0 : i32
    return %arg0, %c0_i32, %c0_i32_0 : i32, i32, i32
  }
  func.func @transform_2(%arg0: i32) -> (i32, i32, i32) {
    %c0_i32 = arith.constant 0 : i32
    %c0_i32_0 = arith.constant 0 : i32
    %c0_i32_1 = arith.constant 0 : i32
    %c0_i32_2 = arith.constant 0 : i32
    return %c0_i32, %c0_i32_0, %c0_i32_1 : i32, i32, i32
  }
  func.func @transform_3(%arg0: i32) -> (i32, i32, i32) {
    %c0_i32 = arith.constant 0 : i32
    %c0_i32_0 = arith.constant 0 : i32
    %c0_i32_1 = arith.constant 0 : i32
    %c0_i32_2 = arith.constant 0 : i32
    return %c0_i32, %c0_i32_0, %c0_i32_1 : i32, i32, i32
  }
  func.func @transform_4(%arg0: i32) -> (i32, i32, i32) {
    %c0_i32 = arith.constant 0 : i32
    %c0_i32_0 = arith.constant 0 : i32
    %c0_i32_1 = arith.constant 0 : i32
    %c0_i32_2 = arith.constant 0 : i32
    return %c0_i32, %c0_i32_0, %c0_i32_1 : i32, i32, i32
  }
  func.func @transform_5(%arg0: i32) -> (i32, i32, i32) {
    %c0_i32 = arith.constant 0 : i32
    %c0_i32_0 = arith.constant 0 : i32
    %c0_i32_1 = arith.constant 0 : i32
    %c0_i32_2 = arith.constant 0 : i32
    return %c0_i32, %c0_i32_0, %c0_i32_1 : i32, i32, i32
  }
  func.func @transform_6(%arg0: i32) -> (i32, i32, i32) {
    %c0_i32 = arith.constant 0 : i32
    %c0_i32_0 = arith.constant 0 : i32
    %c0_i32_1 = arith.constant 0 : i32
    return %arg0, %c0_i32, %c0_i32_0 : i32, i32, i32
  }
}

</mosaic_0001>

<llo_original>
// kernel: tpu_custom_call.1
$region0: #{tpu_custom_call.1}
  #allocation0 [shape = 'u32[]', space=smem, size = 0x4, offset = 0x4, fixed_abs, tag = 'smem constant byte address 0x4 - core index']
  #allocation1 [shape = 'u32[144,128]{1,0:T(1,128)}', space=vmem, size = 0x12000, scoped, tag = 'internal scratch']
  %s0 = inlined_call_operand.vmem [shape: f32[2,8,16], index: 0, kind: input, shape index: {}]
  %s1 = inlined_call_operand.vmem [shape: f32[2,8,8], index: 1, kind: input, shape index: {}]
  %s2 = inlined_call_operand.vmem [shape: bf16[2,16,32], index: 2, kind: input, shape index: {}]
  %s3 = inlined_call_operand.vmem [shape: bf16[2,32,2], index: 3, kind: input, shape index: {}]
  %s4 = inlined_call_operand.vmem [shape: bf16[2,64,1024], index: 4, kind: input, shape index: {}]
  %s5 = inlined_call_operand.vmem [shape: bf16[2,1024,2], index: 5, kind: input, shape index: {}]
  %s6 = inlined_call_operand.hbm [shape: f32[2,8,1024], index: 6, kind: output, shape index: {}]
  %s7 = sld [smem:[#allocation0]]
  $region57: #{tpu_custom_call.1} parent=0
    _
  %s9 = ssub.s32 1, %s7
  %s10 = scalar_select 0, %s9, %s7
  $region1: #{tpu_custom_call.1} parent=0
    #allocation2 [shape = 'u8[65536]{0}', space=vmem, size = 0x10000, scoped, tag = 'output window, operand 0']
    #allocation3 [shape = 's32[2]{0}', space=sflag, size = 0x8, scoped, tag = 'scoped memory for tpu_custom_call.1']
    %11 = vsyncpa [#allocation3], 0
    %s12 = scalar_lea.sflag [#allocation3], 1
    %13 = vsyncpa %s12, 0
    loop: start=0, step=1, limit=4
    $region2: #{tpu_custom_call.1} parent=1 // loop_pre_header
      _
    $region3: #{tpu_custom_call.1} parent=1 // loop_header
      %s15 = sphi 0, %s19
      %p16 = scmp.ge.s32.totalorder %s15, 4
      %s25 = sphi 0, %s27
      %s28 = sphi 0, %s25
      %s29 = sphi 0, %s28
      %s45 = sphi 0, %s29
      %s51 = sphi 0, %s53
      %s54 = sphi 0, %s51
      %s55 = sphi 0, %s54
      %s71 = sphi 0, %s55
      %s75 = sphi 0, %s75
      %s77 = sphi 0, %s75
      %s78 = sphi 0, %s77
      %s92 = sphi 0, %s78
      %s96 = sphi 0, %s96
      %s98 = sphi 0, %s96
      %s99 = sphi 0, %s98
      %s113 = sphi 0, %s99
      %s117 = sphi 0, %s117
      %s119 = sphi 0, %s117
      %s120 = sphi 0, %s119
      %s134 = sphi 0, %s120
      %s138 = sphi 0, %s138
      %s140 = sphi 0, %s138
      %s141 = sphi 0, %s140
      %s155 = sphi 0, %s141
      %s161 = sphi 0, %s163
      %s164 = sphi 0, %s161
      %s165 = sphi 0, %s164
      %s181 = sphi 0, %s165
    $region4: #{tpu_custom_call.1} parent=1 // loop_header_branch
      %18 = sbr.rel (%p16) target = $region8
    $region5: #{tpu_custom_call.1} parent=1 // loop_body
      %s20 = ssub.s32 %s15, 1
      %s21 = ssub.s32 %s15, 2
      %s22 = sadd.s32 %s15, 1
      %s23 = ssub.s32 %s15, %s22
      %p24 = scmp.eq.s32.totalorder %s23, 0
      %s26 = sadd.s32 %s25, 1
      %s27 = scalar_select %p24, %s25, %s26
      %p30 = pneg %p24
      %p31 = scmp.eq.s32.totalorder %s15, 1
      %p32 = por %p30, %p31
      %p33 = scmp.ne.s32.totalorder %s25, %s28
      %p34 = scmp.eq.s32.totalorder %s15, 0
      %p35 = por %p33, %p34
      %p36 = scmp.ne.s32.totalorder %s25, %s28
      %p37 = scmp.eq.s32.totalorder %s20, 1
      %p38 = por %p36, %p37
      %p39 = scmp.ne.s32.totalorder %s28, %s29
      %p40 = scmp.eq.s32.totalorder %s20, 0
      %p41 = por %p39, %p40
      %p42 = scmp.ne.s32.totalorder %s28, %s29
      %p43 = scmp.eq.s32.totalorder %s21, 1
      %p44 = por %p42, %p43
      %p46 = scmp.ne.s32.totalorder %s29, %s45
      %p47 = scmp.eq.s32.totalorder %s21, 0
      %p48 = por %p46, %p47
      %s49 = ssub.s32 %s15, %s22
      %p50 = scmp.eq.s32.totalorder %s49, 0
      %s52 = sadd.s32 %s51, 1
      %s53 = scalar_select %p50, %s51, %s52
      %p56 = pneg %p50
      %p57 = scmp.eq.s32.totalorder %s15, 1
      %p58 = por %p56, %p57
      %p59 = scmp.ne.s32.totalorder %s51, %s54
      %p60 = scmp.eq.s32.totalorder %s15, 0
      %p61 = por %p59, %p60
      %p62 = scmp.ne.s32.totalorder %s51, %s54
      %p63 = scmp.eq.s32.totalorder %s20, 1
      %p64 = por %p62, %p63
      %p65 = scmp.ne.s32.totalorder %s54, %s55
      %p66 = scmp.eq.s32.totalorder %s20, 0
      %p67 = por %p65, %p66
      %p68 = scmp.ne.s32.totalorder %s54, %s55
      %p69 = scmp.eq.s32.totalorder %s21, 1
      %p70 = por %p68, %p69
      %p72 = scmp.ne.s32.totalorder %s55, %s71
      %p73 = scmp.eq.s32.totalorder %s21, 0
      %p74 = por %p72, %p73
      %s76 = sadd.s32 %s75, 1
      %p79 = scmp.eq.s32.totalorder %s15, 1
      %p80 = scmp.ne.s32.totalorder %s75, %s77
      %p81 = scmp.eq.s32.totalorder %s15, 0
      %p82 = por %p80, %p81
      %p83 = scmp.ne.s32.totalorder %s75, %s77
      %p84 = scmp.eq.s32.totalorder %s20, 1
      %p85 = por %p83, %p84
      %p86 = scmp.ne.s32.totalorder %s77, %s78
      %p87 = scmp.eq.s32.totalorder %s20, 0
      %p88 = por %p86, %p87
      %p89 = scmp.ne.s32.totalorder %s77, %s78
      %p90 = scmp.eq.s32.totalorder %s21, 1
      %p91 = por %p89, %p90
      %p93 = scmp.ne.s32.totalorder %s78, %s92
      %p94 = scmp.eq.s32.totalorder %s21, 0
      %p95 = por %p93, %p94
      %s97 = sadd.s32 %s96, 1
      %p100 = scmp.eq.s32.totalorder %s15, 1
      %p101 = scmp.ne.s32.totalorder %s96, %s98
      %p102 = scmp.eq.s32.totalorder %s15, 0
      %p103 = por %p101, %p102
      %p104 = scmp.ne.s32.totalorder %s96, %s98
      %p105 = scmp.eq.s32.totalorder %s20, 1
      %p106 = por %p104, %p105
      %p107 = scmp.ne.s32.totalorder %s98, %s99
      %p108 = scmp.eq.s32.totalorder %s20, 0
      %p109 = por %p107, %p108
      %p110 = scmp.ne.s32.totalorder %s98, %s99
      %p111 = scmp.eq.s32.totalorder %s21, 1
      %p112 = por %p110, %p111
      %p114 = scmp.ne.s32.totalorder %s99, %s113
      %p115 = scmp.eq.s32.totalorder %s21, 0
      %p116 = por %p114, %p115
      %s118 = sadd.s32 %s117, 1
      %p121 = scmp.eq.s32.totalorder %s15, 1
      %p122 = scmp.ne.s32.totalorder %s117, %s119
      %p123 = scmp.eq.s32.totalorder %s15, 0
      %p124 = por %p122, %p123
      %p125 = scmp.ne.s32.totalorder %s117, %s119
      %p126 = scmp.eq.s32.totalorder %s20, 1
      %p127 = por %p125, %p126
      %p128 = scmp.ne.s32.totalorder %s119, %s120
      %p129 = scmp.eq.s32.totalorder %s20, 0
      %p130 = por %p128, %p129
      %p131 = scmp.ne.s32.totalorder %s119, %s120
      %p132 = scmp.eq.s32.totalorder %s21, 1
      %p133 = por %p131, %p132
      %p135 = scmp.ne.s32.totalorder %s120, %s134
      %p136 = scmp.eq.s32.totalorder %s21, 0
      %p137 = por %p135, %p136
      %s139 = sadd.s32 %s138, 1
      %p142 = scmp.eq.s32.totalorder %s15, 1
      %p143 = scmp.ne.s32.totalorder %s138, %s140
      %p144 = scmp.eq.s32.totalorder %s15, 0
      %p145 = por %p143, %p144
      %p146 = scmp.ne.s32.totalorder %s138, %s140
      %p147 = scmp.eq.s32.totalorder %s20, 1
      %p148 = por %p146, %p147
      %p149 = scmp.ne.s32.totalorder %s140, %s141
      %p150 = scmp.eq.s32.totalorder %s20, 0
      %p151 = por %p149, %p150
      %p152 = scmp.ne.s32.totalorder %s140, %s141
      %p153 = scmp.eq.s32.totalorder %s21, 1
      %p154 = por %p152, %p153
      %p156 = scmp.ne.s32.totalorder %s141, %s155
      %p157 = scmp.eq.s32.totalorder %s21, 0
      %p158 = por %p156, %p157
      %s159 = ssub.s32 %s15, %s22
      %p160 = scmp.eq.s32.totalorder %s159, 0
      %s162 = sadd.s32 %s161, 1
      %s163 = scalar_select %p160, %s161, %s162
      %p166 = pneg %p160
      %p167 = scmp.eq.s32.totalorder %s15, 1
      %p168 = por %p166, %p167
      %p169 = scmp.ne.s32.totalorder %s161, %s164
      %p170 = scmp.eq.s32.totalorder %s15, 0
      %p171 = por %p169, %p170
      %p172 = scmp.ne.s32.totalorder %s161, %s164
      %p173 = scmp.eq.s32.totalorder %s20, 1
      %p174 = por %p172, %p173
      %p175 = scmp.ne.s32.totalorder %s164, %s165
      %p176 = scmp.eq.s32.totalorder %s20, 0
      %p177 = por %p175, %p176
      %p178 = scmp.ne.s32.totalorder %s164, %s165
      %p179 = scmp.eq.s32.totalorder %s21, 1
      %p180 = por %p178, %p179
      %p182 = scmp.ne.s32.totalorder %s165, %s181
      %p183 = scmp.eq.s32.totalorder %s21, 0
      %p184 = por %p182, %p183
      %p185 = scmp.le.s32.totalorder 1, %s15
      %p186 = scmp.lt.s32.totalorder %s15, 3
      %p187 = pnand %p185, %p186
      %p188 = pneg %p187
      // Predicated region
      $region9: #{tpu_custom_call.1} parent=5 // pred_check
        _
      $region10: #{tpu_custom_call.1} parent=5 // pred_check_branch
        %190 = sbr.rel (%p187) target = $region12
      $region11: #{tpu_custom_call.1} parent=5 // pred_region
        %s191 = ssub.s32 %s15, 1
        // Predicated region
        $region13: #{tpu_custom_call.1} parent=11 // pred_check
          %p192 = pneg %p88
        $region14: #{tpu_custom_call.1} parent=11 // pred_check_branch
          %194 = sbr.rel (%p192) target = $region16
        $region15: #{tpu_custom_call.1} parent=11 // pred_region
          _
        $region16: #{tpu_custom_call.1} parent=11 // pred_fallthru
          _
        // Predicated region
        $region17: #{tpu_custom_call.1} parent=11 // pred_check
          %p195 = pneg %p109
        $region18: #{tpu_custom_call.1} parent=11 // pred_check_branch
          %197 = sbr.rel (%p195) target = $region20
        $region19: #{tpu_custom_call.1} parent=11 // pred_region
          _
        $region20: #{tpu_custom_call.1} parent=11 // pred_fallthru
          _
        // Predicated region
        $region21: #{tpu_custom_call.1} parent=11 // pred_check
          %p198 = pneg %p130
        $region22: #{tpu_custom_call.1} parent=11 // pred_check_branch
          %200 = sbr.rel (%p198) target = $region24
        $region23: #{tpu_custom_call.1} parent=11 // pred_region
          _
        $region24: #{tpu_custom_call.1} parent=11 // pred_fallthru
          _
        // Predicated region
        $region25: #{tpu_custom_call.1} parent=11 // pred_check
          %p201 = pneg %p151
        $region26: #{tpu_custom_call.1} parent=11 // pred_check_branch
          %203 = sbr.rel (%p201) target = $region28
        $region27: #{tpu_custom_call.1} parent=11 // pred_region
          _
        $region28: #{tpu_custom_call.1} parent=11 // pred_fallthru
          _
      $region12: #{tpu_custom_call.1} parent=5 // pred_fallthru
        _
      %p204 = scmp.lt.s32.totalorder %s15, 2
      // Predicated region
      $region29: #{tpu_custom_call.1} parent=5 // pred_check
        %p205 = pneg %p204
      $region30: #{tpu_custom_call.1} parent=5 // pred_check_branch
        %207 = sbr.rel (%p205) target = $region32
      $region31: #{tpu_custom_call.1} parent=5 // pred_region
        // Predicated region
        $region33: #{tpu_custom_call.1} parent=31 // pred_check
          %p208 = pneg %p35
        $region34: #{tpu_custom_call.1} parent=31 // pred_check_branch
          %210 = sbr.rel (%p208) target = $region36
        $region35: #{tpu_custom_call.1} parent=31 // pred_region
          %p211 = scmp.lt.s32.totalorder %s15, 1
          %s212 = scalar_select %p211, %s15, 1
          %s213 = smul.addr %s212, 8
          %s214 = scalar_lea.vmem %s0, %s213
        $region36: #{tpu_custom_call.1} parent=31 // pred_fallthru
          _
        // Predicated region
        $region37: #{tpu_custom_call.1} parent=31 // pred_check
          %p215 = pneg %p61
        $region38: #{tpu_custom_call.1} parent=31 // pred_check_branch
          %217 = sbr.rel (%p215) target = $region40
        $region39: #{tpu_custom_call.1} parent=31 // pred_region
          %p218 = scmp.lt.s32.totalorder %s15, 1
          %s219 = scalar_select %p218, %s15, 1
          %s220 = smul.addr %s219, 8
          %s221 = scalar_lea.vmem %s1, %s220
        $region40: #{tpu_custom_call.1} parent=31 // pred_fallthru
          _
      $region32: #{tpu_custom_call.1} parent=5 // pred_fallthru
        _
      %p222 = scmp.le.s32.totalorder 1, %s15
      %p223 = scmp.lt.s32.totalorder %s15, 3
      %p224 = pnand %p222, %p223
      %p225 = pneg %p224
      // Predicated region
      $region41: #{tpu_custom_call.1} parent=5 // pred_check
        _
      $region42: #{tpu_custom_call.1} parent=5 // pred_check_branch
        %227 = sbr.rel (%p224) target = $region44
      $region43: #{tpu_custom_call.1} parent=5 // pred_region
        %s228 = ssub.s32 %s15, 1
        %p229 = scmp.lt.s32.totalorder %s20, 1
        %s230 = scalar_select %p229, %s20, 1
        %s231 = smul.addr %s230, 8
        %s232 = scalar_lea.vmem %s0, %s231
        %p233 = pneg %p41
        %p234 = pneg %p38
        %p235 = scmp.lt.s32.totalorder %s20, 1
        %s236 = scalar_select %p235, %s20, 1
        %s237 = smul.addr %s236, 8
        %s238 = scalar_lea.vmem %s1, %s237
        %p239 = pneg %p67
        %p240 = pneg %p64
        %p241 = pneg %p88
        %p242 = pneg %p85
        %p243 = pneg %p109
        %p244 = pneg %p106
        %p245 = pneg %p130
        %p246 = pneg %p127
        %p247 = pneg %p151
        %p248 = pneg %p148
        %p249 = pneg %p177
        %p250 = pneg %p174
        %s251 = sand.u32 %s164, 1
        %s252 = scalar_lea.sflag [#allocation3], %s251
        %s253 = sand.u32 %s164, 1
        %s254 = smul.addr %s253, 64
        %s255 = scalar_lea.vmem [#allocation2], %s254
        %p256 = scmp.lt.s32.totalorder %s20, 1
        %s257 = scalar_select %p256, %s20, 1
        %s258 = smul.addr %s257, 8
        %s259 = scalar_lea.vmem %s0, %s258
        %p260 = scmp.lt.s32.totalorder %s20, 1
        %s261 = scalar_select %p260, %s20, 1
        %s262 = smul.addr %s261, 8
        %s263 = scalar_lea.vmem %s1, %s262
        %v265 = vld [vmem:[%s259] sm:$0xff]
        %v266 = vld [vmem:[%s263] sm:$0xff]
        %vm267 = vcmp.gt.f32.partialorder %v266, 0.0
        %v268 = vpack.c.bf16 %v265, %v265
        %v269 = vld [vmem:[%s2] sm:$0xf]
        %v270 = vld [vmem:[%s2 + $0x4] sm:$0xf]
        %v273 = vunpack.c.l.b16 %v269
        %v274 = vunpack.c.l.b16 %v270
        %v275 = vpack.c.b16 %v274, %v273
        %vm277 = vcmask 130048
        %v279 = vsel %vm277, %v268, 0
        %281 = vmatprep.subr.bf16.mxu0 0
        %282 = vmatpush1.bf16.msra.mxu0 0
        %283 = vmatprep.subr.bf16.mxu0 0
        %284 = vmatpush1.bf16.msra.mxu0 0
        %285 = vmatprep.subr.bf16.mxu0 0
        %286 = vmatpush1.bf16.msra.mxu0 0
        %287 = vmatprep.subr.bf16.mxu0 0
        %288 = vmatpush1.bf16.msra.mxu0 0
        %289 = vmatprep.subr.bf16.mxu0 0
        %290 = vmatpush1.bf16.msra.mxu0 0
        %291 = vmatprep.subr.bf16.mxu0 0
        %292 = vmatpush1.bf16.msra.mxu0 0
        %293 = vmatprep.subr.bf16.mxu0 0
        %294 = vmatpush1.bf16.msra.mxu0 0
        %295 = vmatprep.subr.bf16.mxu0 0
        %296 = vmatpush1.bf16.msra.mxu0 %v275
        %297 = vmatprep.subr.bf16.mxu0 0
        %298 = vmatpush2.bf16.msra.mxu0 0
        %299 = vmatprep.subr.bf16.mxu0 0
        %300 = vmatpush2.bf16.msra.mxu0 0
        %301 = vmatprep.subr.bf16.mxu0 0
        %302 = vmatpush2.bf16.msra.mxu0 0
        %303 = vmatprep.subr.bf16.mxu0 0
        %304 = vmatpush2.bf16.msra.mxu0 0
        %305 = vmatprep.subr.bf16.mxu0 0
        %306 = vmatpush2.bf16.msra.mxu0 0
        %307 = vmatprep.subr.bf16.mxu0 0
        %308 = vmatpush2.bf16.msra.mxu0 0
        %309 = vmatprep.subr.bf16.mxu0 0
        %310 = vmatpush2.bf16.msra.mxu0 0
        %311 = vmatprep.subr.bf16.mxu0 0
        %312 = vmatpush2.bf16.msra.mxu0 0
        %313 = vmatprep.mubr.bf16.mxu0 0
        %314 = vmatmul.mubr.bf16.gmra.mxu0 %v279
        %v315 = vpop.f32.mrf.mxu0
        %v316 = vadd.f32 0.0, %v315
        %v317 = vpop.f32.mrf.mxu0
        %v318 = vpop.f32.mrf.mxu0
        %v319 = vpop.f32.mrf.mxu0
        %320 = vdwg.mxu0
        %v321 = vld [vmem:[%s3] sm:$0xf]
        %v322 = vld [vmem:[%s3 + $0x4] sm:$0xf]
        %v323 = vld [vmem:[%s3 + $0x8] sm:$0xf]
        %v324 = vld [vmem:[%s3 + $0xc] sm:$0xf]
        %v325 = vpack.c.bf16 %v316, %v316
        %v330 = vunpack.c.l.b16 %v321
        %v331 = vunpack.c.l.b16 %v322
        %v332 = vunpack.c.l.b16 %v323
        %v333 = vunpack.c.l.b16 %v324
        %v334 = vpack.c.b16 %v331, %v330
        %v335 = vpack.c.b16 %v333, %v332
        %vm338 = vcmask 261120
        %v340 = vsel %vm338, %v325, 0
        %342 = vmatprep.subr.bf16.mxu0 0
        %343 = vmatpush1.bf16.msra.mxu0 0
        %344 = vmatprep.subr.bf16.mxu0 0
        %345 = vmatpush1.bf16.msra.mxu0 0
        %346 = vmatprep.subr.bf16.mxu0 0
        %347 = vmatpush1.bf16.msra.mxu0 0
        %348 = vmatprep.subr.bf16.mxu0 0
        %349 = vmatpush1.bf16.msra.mxu0 0
        %350 = vmatprep.subr.bf16.mxu0 0
        %351 = vmatpush1.bf16.msra.mxu0 0
        %352 = vmatprep.subr.bf16.mxu0 0
        %353 = vmatpush1.bf16.msra.mxu0 0
        %354 = vmatprep.subr.bf16.mxu0 0
        %355 = vmatpush1.bf16.msra.mxu0 %v335
        %356 = vmatprep.subr.bf16.mxu0 0
        %357 = vmatpush1.bf16.msra.mxu0 %v334
        %358 = vmatprep.subr.bf16.mxu0 0
        %359 = vmatpush2.bf16.msra.mxu0 0
        %360 = vmatprep.subr.bf16.mxu0 0
        %361 = vmatpush2.bf16.msra.mxu0 0
        %362 = vmatprep.subr.bf16.mxu0 0
        %363 = vmatpush2.bf16.msra.mxu0 0
        %364 = vmatprep.subr.bf16.mxu0 0
        %365 = vmatpush2.bf16.msra.mxu0 0
        %366 = vmatprep.subr.bf16.mxu0 0
        %367 = vmatpush2.bf16.msra.mxu0 0
        %368 = vmatprep.subr.bf16.mxu0 0
        %369 = vmatpush2.bf16.msra.mxu0 0
        %370 = vmatprep.subr.bf16.mxu0 0
        %371 = vmatpush2.bf16.msra.mxu0 0
        %372 = vmatprep.subr.bf16.mxu0 0
        %373 = vmatpush2.bf16.msra.mxu0 0
        %374 = vmatprep.mubr.bf16.mxu0 0
        %375 = vmatmul.mubr.bf16.gmra.mxu0 %v340
        %v376 = vpop.f32.mrf.mxu0
        %v377 = vadd.f32 0.0, %v376
        %v378 = vpop.f32.mrf.mxu0
        %v379 = vpop.f32.mrf.mxu0
        %v380 = vpop.f32.mrf.mxu0
        %381 = vdwg.mxu0
        %383 = vrot.lane.b32.xlu0 %v377, 127
        %v384 = vpop.permute.xlu0 %383
        %386 = vxpose.xlu0.b32.start [1/16] %v384, 128
        %387 = vxpose.xlu0.b32.cont [2/16] 0.0, 128
        %388 = vxpose.xlu0.b32.cont [3/16] 0.0, 128
        %389 = vxpose.xlu0.b32.cont [4/16] 0.0, 128
        %390 = vxpose.xlu0.b32.cont [5/16] 0.0, 128
        %391 = vxpose.xlu0.b32.cont [6/16] 0.0, 128
        %392 = vxpose.xlu0.b32.cont [7/16] 0.0, 128
        %393 = vxpose.xlu0.b32.cont [8/16] 0.0, 128
        %394 = vxpose.xlu0.b32.cont [9/16] 0.0, 128
        %395 = vxpose.xlu0.b32.cont [10/16] 0.0, 128
        %396 = vxpose.xlu0.b32.cont [11/16] 0.0, 128
        %397 = vxpose.xlu0.b32.cont [12/16] 0.0, 128
        %398 = vxpose.xlu0.b32.cont [13/16] 0.0, 128
        %399 = vxpose.xlu0.b32.cont [14/16] 0.0, 128
        %400 = vxpose.xlu0.b32.cont [15/16] 0.0, 128
        %401 = vxpose.xlu0.b32.end [16/16] 0.0, 128
        %v402 = vpop.trf.xlu0
        %v403 = vpop.trf.xlu0
        %v404 = vpop.trf.xlu0
        %v405 = vpop.trf.xlu0
        %v406 = vpop.trf.xlu0
        %v407 = vpop.trf.xlu0
        %v408 = vpop.trf.xlu0
        %v409 = vpop.trf.xlu0
        %v410 = vpop.trf.xlu0
        %v411 = vpop.trf.xlu0
        %v412 = vpop.trf.xlu0
        %v413 = vpop.trf.xlu0
        %v414 = vpop.trf.xlu0
        %v415 = vpop.trf.xlu0
        %v416 = vpop.trf.xlu0
        %v417 = vpop.trf.xlu0
        %418 = vset.pattern.permute.xlu0 0
        %419 = vperm.xlu0 %418, %v377
        %v420 = vpop.permute.xlu0 %419
        %v422 = vlaneseq
        %v423 = vshrl.u32 %v422, 7
        %v424 = vsub.s32 0, %v423
        %v425 = vrot.slane %v402, %v424
        %v426 = vadd.f32 %v420, %v425
        %vm427 = vcmp.gt.f32.partialorder %v426, 0.0
        %v428 = vmul.f32 %v426, 0.2
        %v429 = vsel %vm427, %v426, %v428
        %v430 = vsel %vm267, %v429, -1e+30
        %vm431 = vcmask 64512
        %v432 = vsel %vm431, %v430, -inf
        %433 = vmax.xlane.f32.xlu0 %v432
        %v434 = vpop.xlane.xlu0 %433
        %v435 = vsub.f32 %v430, %v434
        %v436 = vmul.f32 %v435, 1.442695
        %v437 = vpow.pop %v436
        %v438 = vsel %vm267, %v437, 0.0
        %v439 = vsel %vm431, %v438, 0.0
        %440 = vadd.xlane.f32.xlu0 %v439
        %v441 = vpop.xlane.xlu0 %440
        %v442 = vadd.f32 %v441, 1e-09
        %v443 = vrcp.pop %v442
        %v444 = vmul.f32 %v438, %v443
        %v445 = vpack.c.bf16 %v444, %v444
        %v447 = vsel %vm431, %v445, 0
        %vm449 = vcmask 1043456
        %v450 = vsel %vm449, %v325, 0
        %452 = vmatprep.subr.bf16.mxu0 0
        %453 = vmatpush1.bf16.msra.mxu0 0
        %454 = vmatprep.subr.bf16.mxu0 0
        %455 = vmatpush1.bf16.msra.mxu0 0
        %456 = vmatprep.subr.bf16.mxu0 0
        %457 = vmatpush1.bf16.msra.mxu0 0
        %458 = vmatprep.subr.bf16.mxu0 0
        %459 = vmatpush1.bf16.msra.mxu0 0
        %460 = vmatprep.subr.bf16.mxu0 0
        %461 = vmatpush1.bf16.msra.mxu0 0
        %462 = vmatprep.subr.bf16.mxu0 0
        %463 = vmatpush1.bf16.msra.mxu0 0
        %464 = vmatprep.subr.bf16.mxu0 0
        %465 = vmatpush1.bf16.msra.mxu0 0
        %466 = vmatprep.subr.bf16.mxu0 0
        %467 = vmatpush1.bf16.msra.mxu0 %v450
        %468 = vmatprep.subr.bf16.mxu0 0
        %469 = vmatpush2.bf16.msra.mxu0 0
        %470 = vmatprep.subr.bf16.mxu0 0
        %471 = vmatpush2.bf16.msra.mxu0 0
        %472 = vmatprep.subr.bf16.mxu0 0
        %473 = vmatpush2.bf16.msra.mxu0 0
        %474 = vmatprep.subr.bf16.mxu0 0
        %475 = vmatpush2.bf16.msra.mxu0 0
        %476 = vmatprep.subr.bf16.mxu0 0
        %477 = vmatpush2.bf16.msra.mxu0 0
        %478 = vmatprep.subr.bf16.mxu0 0
        %479 = vmatpush2.bf16.msra.mxu0 0
        %480 = vmatprep.subr.bf16.mxu0 0
        %481 = vmatpush2.bf16.msra.mxu0 0
        %482 = vmatprep.subr.bf16.mxu0 0
        %483 = vmatpush2.bf16.msra.mxu0 0
        %484 = vmatprep.mubr.bf16.mxu0 0
        %485 = vmatmul.mubr.bf16.gmra.mxu0 %v447
        %v486 = vpop.f32.mrf.mxu0
        %v487 = vadd.f32 0.0, %v486
        %v488 = vpop.f32.mrf.mxu0
        %v489 = vpop.f32.mrf.mxu0
        %v490 = vpop.f32.mrf.mxu0
        %491 = vdwg.mxu0
        %s492 = scalar_lea.vmem %s2, 8
        %v493 = vld [vmem:[%s492] sm:$0xf]
        %v494 = vld [vmem:[%s492 + $0x4] sm:$0xf]
        %v497 = vunpack.c.l.b16 %v493
        %v498 = vunpack.c.l.b16 %v494
        %v499 = vpack.c.b16 %v498, %v497
        %501 = vmatprep.subr.bf16.mxu0 0
        %502 = vmatpush1.bf16.msra.mxu0 0
        %503 = vmatprep.subr.bf16.mxu0 0
        %504 = vmatpush1.bf16.msra.mxu0 0
        %505 = vmatprep.subr.bf16.mxu0 0
        %506 = vmatpush1.bf16.msra.mxu0 0
        %507 = vmatprep.subr.bf16.mxu0 0
        %508 = vmatpush1.bf16.msra.mxu0 0
        %509 = vmatprep.subr.bf16.mxu0 0
        %510 = vmatpush1.bf16.msra.mxu0 0
        %511 = vmatprep.subr.bf16.mxu0 0
        %512 = vmatpush1.bf16.msra.mxu0 0
        %513 = vmatprep.subr.bf16.mxu0 0
        %514 = vmatpush1.bf16.msra.mxu0 0
        %515 = vmatprep.subr.bf16.mxu0 0
        %516 = vmatpush1.bf16.msra.mxu0 %v499
        %517 = vmatprep.subr.bf16.mxu0 0
        %518 = vmatpush2.bf16.msra.mxu0 0
        %519 = vmatprep.subr.bf16.mxu0 0
        %520 = vmatpush2.bf16.msra.mxu0 0
        %521 = vmatprep.subr.bf16.mxu0 0
        %522 = vmatpush2.bf16.msra.mxu0 0
        %523 = vmatprep.subr.bf16.mxu0 0
        %524 = vmatpush2.bf16.msra.mxu0 0
        %525 = vmatprep.subr.bf16.mxu0 0
        %526 = vmatpush2.bf16.msra.mxu0 0
        %527 = vmatprep.subr.bf16.mxu0 0
        %528 = vmatpush2.bf16.msra.mxu0 0
        %529 = vmatprep.subr.bf16.mxu0 0
        %530 = vmatpush2.bf16.msra.mxu0 0
        %531 = vmatprep.subr.bf16.mxu0 0
        %532 = vmatpush2.bf16.msra.mxu0 0
        %533 = vmatprep.mubr.bf16.mxu0 0
        %534 = vmatmul.mubr.bf16.gmra.mxu0 %v279
        %v535 = vpop.f32.mrf.mxu0
        %v536 = vadd.f32 0.0, %v535
        %v537 = vpop.f32.mrf.mxu0
        %v538 = vpop.f32.mrf.mxu0
        %v539 = vpop.f32.mrf.mxu0
        %540 = vdwg.mxu0
        %s541 = scalar_lea.vmem %s3, 16
        %v542 = vld [vmem:[%s541] sm:$0xf]
        %v543 = vld [vmem:[%s541 + $0x4] sm:$0xf]
        %v544 = vld [vmem:[%s541 + $0x8] sm:$0xf]
        %v545 = vld [vmem:[%s541 + $0xc] sm:$0xf]
        %v546 = vpack.c.bf16 %v536, %v536
        %v551 = vunpack.c.l.b16 %v542
        %v552 = vunpack.c.l.b16 %v543
        %v553 = vunpack.c.l.b16 %v544
        %v554 = vunpack.c.l.b16 %v545
        %v555 = vpack.c.b16 %v552, %v551
        %v556 = vpack.c.b16 %v554, %v553
        %v560 = vsel %vm338, %v546, 0
        %562 = vmatprep.subr.bf16.mxu0 0
        %563 = vmatpush1.bf16.msra.mxu0 0
        %564 = vmatprep.subr.bf16.mxu0 0
        %565 = vmatpush1.bf16.msra.mxu0 0
        %566 = vmatprep.subr.bf16.mxu0 0
        %567 = vmatpush1.bf16.msra.mxu0 0
        %568 = vmatprep.subr.bf16.mxu0 0
        %569 = vmatpush1.bf16.msra.mxu0 0
        %570 = vmatprep.subr.bf16.mxu0 0
        %571 = vmatpush1.bf16.msra.mxu0 0
        %572 = vmatprep.subr.bf16.mxu0 0
        %573 = vmatpush1.bf16.msra.mxu0 0
        %574 = vmatprep.subr.bf16.mxu0 0
        %575 = vmatpush1.bf16.msra.mxu0 %v556
        %576 = vmatprep.subr.bf16.mxu0 0
        %577 = vmatpush1.bf16.msra.mxu0 %v555
        %578 = vmatprep.subr.bf16.mxu0 0
        %579 = vmatpush2.bf16.msra.mxu0 0
        %580 = vmatprep.subr.bf16.mxu0 0
        %581 = vmatpush2.bf16.msra.mxu0 0
        %582 = vmatprep.subr.bf16.mxu0 0
        %583 = vmatpush2.bf16.msra.mxu0 0
        %584 = vmatprep.subr.bf16.mxu0 0
        %585 = vmatpush2.bf16.msra.mxu0 0
        %586 = vmatprep.subr.bf16.mxu0 0
        %587 = vmatpush2.bf16.msra.mxu0 0
        %588 = vmatprep.subr.bf16.mxu0 0
        %589 = vmatpush2.bf16.msra.mxu0 0
        %590 = vmatprep.subr.bf16.mxu0 0
        %591 = vmatpush2.bf16.msra.mxu0 0
        %592 = vmatprep.subr.bf16.mxu0 0
        %593 = vmatpush2.bf16.msra.mxu0 0
        %594 = vmatprep.mubr.bf16.mxu0 0
        %595 = vmatmul.mubr.bf16.gmra.mxu0 %v560
        %v596 = vpop.f32.mrf.mxu0
        %v597 = vadd.f32 0.0, %v596
        %v598 = vpop.f32.mrf.mxu0
        %v599 = vpop.f32.mrf.mxu0
        %v600 = vpop.f32.mrf.mxu0
        %601 = vdwg.mxu0
        %603 = vrot.lane.b32.xlu0 %v597, 127
        %v604 = vpop.permute.xlu0 %603
        %606 = vxpose.xlu0.b32.start [1/16] %v604, 128
        %607 = vxpose.xlu0.b32.cont [2/16] 0.0, 128
        %608 = vxpose.xlu0.b32.cont [3/16] 0.0, 128
        %609 = vxpose.xlu0.b32.cont [4/16] 0.0, 128
        %610 = vxpose.xlu0.b32.cont [5/16] 0.0, 128
        %611 = vxpose.xlu0.b32.cont [6/16] 0.0, 128
        %612 = vxpose.xlu0.b32.cont [7/16] 0.0, 128
        %613 = vxpose.xlu0.b32.cont [8/16] 0.0, 128
        %614 = vxpose.xlu0.b32.cont [9/16] 0.0, 128
        %615 = vxpose.xlu0.b32.cont [10/16] 0.0, 128
        %616 = vxpose.xlu0.b32.cont [11/16] 0.0, 128
        %617 = vxpose.xlu0.b32.cont [12/16] 0.0, 128
        %618 = vxpose.xlu0.b32.cont [13/16] 0.0, 128
        %619 = vxpose.xlu0.b32.cont [14/16] 0.0, 128
        %620 = vxpose.xlu0.b32.cont [15/16] 0.0, 128
        %621 = vxpose.xlu0.b32.end [16/16] 0.0, 128
        %v622 = vpop.trf.xlu0
        %v623 = vpop.trf.xlu0
        %v624 = vpop.trf.xlu0
        %v625 = vpop.trf.xlu0
        %v626 = vpop.trf.xlu0
        %v627 = vpop.trf.xlu0
        %v628 = vpop.trf.xlu0
        %v629 = vpop.trf.xlu0
        %v630 = vpop.trf.xlu0
        %v631 = vpop.trf.xlu0
        %v632 = vpop.trf.xlu0
        %v633 = vpop.trf.xlu0
        %v634 = vpop.trf.xlu0
        %v635 = vpop.trf.xlu0
        %v636 = vpop.trf.xlu0
        %v637 = vpop.trf.xlu0
        %638 = vset.pattern.permute.xlu0 0
        %639 = vperm.xlu0 %638, %v597
        %v640 = vpop.permute.xlu0 %639
        %v642 = vlaneseq
        %v643 = vshrl.u32 %v642, 7
        %v644 = vsub.s32 0, %v643
        %v645 = vrot.slane %v622, %v644
        %v646 = vadd.f32 %v640, %v645
        %vm647 = vcmp.gt.f32.partialorder %v646, 0.0
        %v648 = vmul.f32 %v646, 0.2
        %v649 = vsel %vm647, %v646, %v648
        %v650 = vsel %vm267, %v649, -1e+30
        %v651 = vsel %vm431, %v650, -inf
        %652 = vmax.xlane.f32.xlu0 %v651
        %v653 = vpop.xlane.xlu0 %652
        %v654 = vsub.f32 %v650, %v653
        %v655 = vmul.f32 %v654, 1.442695
        %v656 = vpow.pop %v655
        %v657 = vsel %vm267, %v656, 0.0
        %v658 = vsel %vm431, %v657, 0.0
        %659 = vadd.xlane.f32.xlu0 %v658
        %v660 = vpop.xlane.xlu0 %659
        %v661 = vadd.f32 %v660, 1e-09
        %v662 = vrcp.pop %v661
        %v663 = vmul.f32 %v657, %v662
        %v664 = vpack.c.bf16 %v663, %v663
        %v666 = vsel %vm431, %v664, 0
        %v668 = vsel %vm449, %v546, 0
        %670 = vmatprep.subr.bf16.mxu0 0
        %671 = vmatpush1.bf16.msra.mxu0 0
        %672 = vmatprep.subr.bf16.mxu0 0
        %673 = vmatpush1.bf16.msra.mxu0 0
        %674 = vmatprep.subr.bf16.mxu0 0
        %675 = vmatpush1.bf16.msra.mxu0 0
        %676 = vmatprep.subr.bf16.mxu0 0
        %677 = vmatpush1.bf16.msra.mxu0 0
        %678 = vmatprep.subr.bf16.mxu0 0
        %679 = vmatpush1.bf16.msra.mxu0 0
        %680 = vmatprep.subr.bf16.mxu0 0
        %681 = vmatpush1.bf16.msra.mxu0 0
        %682 = vmatprep.subr.bf16.mxu0 0
        %683 = vmatpush1.bf16.msra.mxu0 0
        %684 = vmatprep.subr.bf16.mxu0 0
        %685 = vmatpush1.bf16.msra.mxu0 %v668
        %686 = vmatprep.subr.bf16.mxu0 0
        %687 = vmatpush2.bf16.msra.mxu0 0
        %688 = vmatprep.subr.bf16.mxu0 0
        %689 = vmatpush2.bf16.msra.mxu0 0
        %690 = vmatprep.subr.bf16.mxu0 0
        %691 = vmatpush2.bf16.msra.mxu0 0
        %692 = vmatprep.subr.bf16.mxu0 0
        %693 = vmatpush2.bf16.msra.mxu0 0
        %694 = vmatprep.subr.bf16.mxu0 0
        %695 = vmatpush2.bf16.msra.mxu0 0
        %696 = vmatprep.subr.bf16.mxu0 0
        %697 = vmatpush2.bf16.msra.mxu0 0
        %698 = vmatprep.subr.bf16.mxu0 0
        %699 = vmatpush2.bf16.msra.mxu0 0
        %700 = vmatprep.subr.bf16.mxu0 0
        %701 = vmatpush2.bf16.msra.mxu0 0
        %702 = vmatprep.mubr.bf16.mxu0 0
        %703 = vmatmul.mubr.bf16.gmra.mxu0 %v666
        %v704 = vpop.f32.mrf.mxu0
        %v705 = vadd.f32 0.0, %v704
        %v706 = vpop.f32.mrf.mxu0
        %v707 = vpop.f32.mrf.mxu0
        %v708 = vpop.f32.mrf.mxu0
        %709 = vdwg.mxu0
        %711 = vrot.lane.b32.xlu0 %v705, 32
        %v712 = vpop.permute.xlu0 %711
        %v714 = vsel %vm338, %v487, %v712
        %v715 = vmax.f32 %v714, 0.0
        %v716 = vpack.c.bf16 %v715, %v715
        %v717 = vld [vmem:[%s4] sm:$0xff]
        %v718 = vld [vmem:[%s4 + $0x8] sm:$0xff]
        %v719 = vld [vmem:[%s4 + $0x10] sm:$0xff]
        %v720 = vld [vmem:[%s4 + $0x18] sm:$0xff]
        %v721 = vld [vmem:[%s4 + $0x20] sm:$0xff]
        %v722 = vld [vmem:[%s4 + $0x28] sm:$0xff]
        %v723 = vld [vmem:[%s4 + $0x30] sm:$0xff]
        %v724 = vld [vmem:[%s4 + $0x38] sm:$0xff]
        %v725 = vld [vmem:[%s4 + $0x40] sm:$0xff]
        %v726 = vld [vmem:[%s4 + $0x48] sm:$0xff]
        %v727 = vld [vmem:[%s4 + $0x50] sm:$0xff]
        %v728 = vld [vmem:[%s4 + $0x58] sm:$0xff]
        %v729 = vld [vmem:[%s4 + $0x60] sm:$0xff]
        %v730 = vld [vmem:[%s4 + $0x68] sm:$0xff]
        %v731 = vld [vmem:[%s4 + $0x70] sm:$0xff]
        %v732 = vld [vmem:[%s4 + $0x78] sm:$0xff]
        %v733 = vld [vmem:[%s4 + $0x80] sm:$0xff]
        %v734 = vld [vmem:[%s4 + $0x88] sm:$0xff]
        %v735 = vld [vmem:[%s4 + $0x90] sm:$0xff]
        %v736 = vld [vmem:[%s4 + $0x98] sm:$0xff]
        %v737 = vld [vmem:[%s4 + $0xa0] sm:$0xff]
        %v738 = vld [vmem:[%s4 + $0xa8] sm:$0xff]
        %v739 = vld [vmem:[%s4 + $0xb0] sm:$0xff]
        %v740 = vld [vmem:[%s4 + $0xb8] sm:$0xff]
        %v741 = vld [vmem:[%s4 + $0xc0] sm:$0xff]
        %v742 = vld [vmem:[%s4 + $0xc8] sm:$0xff]
        %v743 = vld [vmem:[%s4 + $0xd0] sm:$0xff]
        %v744 = vld [vmem:[%s4 + $0xd8] sm:$0xff]
        %v745 = vld [vmem:[%s4 + $0xe0] sm:$0xff]
        %v746 = vld [vmem:[%s4 + $0xe8] sm:$0xff]
        %v747 = vld [vmem:[%s4 + $0xf0] sm:$0xff]
        %v748 = vld [vmem:[%s4 + $0xf8] sm:$0xff]
        %v781 = vunpack.c.l.b16 %v717
        %v782 = vunpack.c.h.b16 %v717
        %v783 = vunpack.c.l.b16 %v718
        %v784 = vunpack.c.h.b16 %v718
        %v785 = vunpack.c.l.b16 %v719
        %v786 = vunpack.c.h.b16 %v719
        %v787 = vunpack.c.l.b16 %v720
        %v788 = vunpack.c.h.b16 %v720
        %v789 = vunpack.c.l.b16 %v721
        %v790 = vunpack.c.h.b16 %v721
        %v791 = vunpack.c.l.b16 %v722
        %v792 = vunpack.c.h.b16 %v722
        %v793 = vunpack.c.l.b16 %v723
        %v794 = vunpack.c.h.b16 %v723
        %v795 = vunpack.c.l.b16 %v724
        %v796 = vunpack.c.h.b16 %v724
        %v797 = vunpack.c.l.b16 %v725
        %v798 = vunpack.c.h.b16 %v725
        %v799 = vunpack.c.l.b16 %v726
        %v800 = vunpack.c.h.b16 %v726
        %v801 = vunpack.c.l.b16 %v727
        %v802 = vunpack.c.h.b16 %v727
        %v803 = vunpack.c.l.b16 %v728
        %v804 = vunpack.c.h.b16 %v728
        %v805 = vunpack.c.l.b16 %v729
        %v806 = vunpack.c.h.b16 %v729
        %v807 = vunpack.c.l.b16 %v730
        %v808 = vunpack.c.h.b16 %v730
        %v809 = vunpack.c.l.b16 %v731
        %v810 = vunpack.c.h.b16 %v731
        %v811 = vunpack.c.l.b16 %v732
        %v812 = vunpack.c.h.b16 %v732
        %v813 = vunpack.c.l.b16 %v733
        %v814 = vunpack.c.h.b16 %v733
        %v815 = vunpack.c.l.b16 %v734
        %v816 = vunpack.c.h.b16 %v734
        %v817 = vunpack.c.l.b16 %v735
        %v818 = vunpack.c.h.b16 %v735
        %v819 = vunpack.c.l.b16 %v736
        %v820 = vunpack.c.h.b16 %v736
        %v821 = vunpack.c.l.b16 %v737
        %v822 = vunpack.c.h.b16 %v737
        %v823 = vunpack.c.l.b16 %v738
        %v824 = vunpack.c.h.b16 %v738
        %v825 = vunpack.c.l.b16 %v739
        %v826 = vunpack.c.h.b16 %v739
        %v827 = vunpack.c.l.b16 %v740
        %v828 = vunpack.c.h.b16 %v740
        %v829 = vunpack.c.l.b16 %v741
        %v830 = vunpack.c.h.b16 %v741
        %v831 = vunpack.c.l.b16 %v742
        %v832 = vunpack.c.h.b16 %v742
        %v833 = vunpack.c.l.b16 %v743
        %v834 = vunpack.c.h.b16 %v743
        %v835 = vunpack.c.l.b16 %v744
        %v836 = vunpack.c.h.b16 %v744
        %v837 = vunpack.c.l.b16 %v745
        %v838 = vunpack.c.h.b16 %v745
        %v839 = vunpack.c.l.b16 %v746
        %v840 = vunpack.c.h.b16 %v746
        %v841 = vunpack.c.l.b16 %v747
        %v842 = vunpack.c.h.b16 %v747
        %v843 = vunpack.c.l.b16 %v748
        %v844 = vunpack.c.h.b16 %v748
        %v845 = vpack.c.b16 %v789, %v781
        %v846 = vpack.c.b16 %v790, %v782
        %v847 = vpack.c.b16 %v791, %v783
        %v848 = vpack.c.b16 %v792, %v784
        %v849 = vpack.c.b16 %v793, %v785
        %v850 = vpack.c.b16 %v794, %v786
        %v851 = vpack.c.b16 %v795, %v787
        %v852 = vpack.c.b16 %v796, %v788
        %v853 = vpack.c.b16 %v805, %v797
        %v854 = vpack.c.b16 %v806, %v798
        %v855 = vpack.c.b16 %v807, %v799
        %v856 = vpack.c.b16 %v808, %v800
        %v857 = vpack.c.b16 %v809, %v801
        %v858 = vpack.c.b16 %v810, %v802
        %v859 = vpack.c.b16 %v811, %v803
        %v860 = vpack.c.b16 %v812, %v804
        %v861 = vpack.c.b16 %v821, %v813
        %v862 = vpack.c.b16 %v822, %v814
        %v863 = vpack.c.b16 %v823, %v815
        %v864 = vpack.c.b16 %v824, %v816
        %v865 = vpack.c.b16 %v825, %v817
        %v866 = vpack.c.b16 %v826, %v818
        %v867 = vpack.c.b16 %v827, %v819
        %v868 = vpack.c.b16 %v828, %v820
        %v869 = vpack.c.b16 %v837, %v829
        %v870 = vpack.c.b16 %v838, %v830
        %v871 = vpack.c.b16 %v839, %v831
        %v872 = vpack.c.b16 %v840, %v832
        %v873 = vpack.c.b16 %v841, %v833
        %v874 = vpack.c.b16 %v842, %v834
        %v875 = vpack.c.b16 %v843, %v835
        %v876 = vpack.c.b16 %v844, %v836
        %vm909 = vcmask 523264
        %v911 = vsel %vm909, %v716, 0
        %913 = vmatprep.subr.bf16.mxu0 0
        %914 = vmatpush1.bf16.msra.mxu0 0
        %915 = vmatprep.subr.bf16.mxu0 0
        %916 = vmatpush1.bf16.msra.mxu0 0
        %917 = vmatprep.subr.bf16.mxu0 0
        %918 = vmatpush1.bf16.msra.mxu0 0
        %919 = vmatprep.subr.bf16.mxu0 0
        %920 = vmatpush1.bf16.msra.mxu0 0
        %921 = vmatprep.subr.bf16.mxu0 %v870
        %922 = vmatpush1.bf16.msra.mxu0 %v869
        %923 = vmatprep.subr.bf16.mxu0 %v862
        %924 = vmatpush1.bf16.msra.mxu0 %v861
        %925 = vmatprep.subr.bf16.mxu0 %v854
        %926 = vmatpush1.bf16.msra.mxu0 %v853
        %927 = vmatprep.subr.bf16.mxu0 %v846
        %928 = vmatpush1.bf16.msra.mxu0 %v845
        %929 = vmatprep.subr.bf16.mxu0 0
        %930 = vmatpush2.bf16.msra.mxu0 0
        %931 = vmatprep.subr.bf16.mxu0 0
        %932 = vmatpush2.bf16.msra.mxu0 0
        %933 = vmatprep.subr.bf16.mxu0 0
        %934 = vmatpush2.bf16.msra.mxu0 0
        %935 = vmatprep.subr.bf16.mxu0 0
        %936 = vmatpush2.bf16.msra.mxu0 0
        %937 = vmatprep.subr.bf16.mxu0 0
        %938 = vmatpush2.bf16.msra.mxu0 0
        %939 = vmatprep.subr.bf16.mxu0 0
        %940 = vmatpush2.bf16.msra.mxu0 0
        %941 = vmatprep.subr.bf16.mxu0 0
        %942 = vmatpush2.bf16.msra.mxu0 0
        %943 = vmatprep.subr.bf16.mxu0 0
        %944 = vmatpush2.bf16.msra.mxu0 0
        %945 = vmatprep.mubr.bf16.mxu0 0
        %946 = vmatmul.mubr.bf16.gmra.mxu0 %v911
        %v947 = vpop.f32.mrf.mxu0
        %v948 = vadd.f32 0.0, %v947
        %v949 = vpop.f32.mrf.mxu0
        %v950 = vadd.f32 0.0, %v949
        %v951 = vpop.f32.mrf.mxu0
        %v952 = vpop.f32.mrf.mxu0
        %953 = vdwg.mxu0
        %954 = vmatprep.subr.bf16.mxu0 0
        %955 = vmatpush1.bf16.msra.mxu0 0
        %956 = vmatprep.subr.bf16.mxu0 0
        %957 = vmatpush1.bf16.msra.mxu0 0
        %958 = vmatprep.subr.bf16.mxu0 0
        %959 = vmatpush1.bf16.msra.mxu0 0
        %960 = vmatprep.subr.bf16.mxu0 0
        %961 = vmatpush1.bf16.msra.mxu0 0
        %962 = vmatprep.subr.bf16.mxu0 %v872
        %963 = vmatpush1.bf16.msra.mxu0 %v871
        %964 = vmatprep.subr.bf16.mxu0 %v864
        %965 = vmatpush1.bf16.msra.mxu0 %v863
        %966 = vmatprep.subr.bf16.mxu0 %v856
        %967 = vmatpush1.bf16.msra.mxu0 %v855
        %968 = vmatprep.subr.bf16.mxu0 %v848
        %969 = vmatpush1.bf16.msra.mxu0 %v847
        %970 = vmatprep.subr.bf16.mxu0 0
        %971 = vmatpush2.bf16.msra.mxu0 0
        %972 = vmatprep.subr.bf16.mxu0 0
        %973 = vmatpush2.bf16.msra.mxu0 0
        %974 = vmatprep.subr.bf16.mxu0 0
        %975 = vmatpush2.bf16.msra.mxu0 0
        %976 = vmatprep.subr.bf16.mxu0 0
        %977 = vmatpush2.bf16.msra.mxu0 0
        %978 = vmatprep.subr.bf16.mxu0 0
        %979 = vmatpush2.bf16.msra.mxu0 0
        %980 = vmatprep.subr.bf16.mxu0 0
        %981 = vmatpush2.bf16.msra.mxu0 0
        %982 = vmatprep.subr.bf16.mxu0 0
        %983 = vmatpush2.bf16.msra.mxu0 0
        %984 = vmatprep.subr.bf16.mxu0 0
        %985 = vmatpush2.bf16.msra.mxu0 0
        %986 = vmatprep.mubr.bf16.mxu0 0
        %987 = vmatmul.mubr.bf16.gmra.mxu0 %v911
        %v988 = vpop.f32.mrf.mxu0
        %v989 = vadd.f32 0.0, %v988
        %v990 = vpop.f32.mrf.mxu0
        %v991 = vadd.f32 0.0, %v990
        %v992 = vpop.f32.mrf.mxu0
        %v993 = vpop.f32.mrf.mxu0
        %994 = vdwg.mxu0
        %995 = vmatprep.subr.bf16.mxu0 0
        %996 = vmatpush1.bf16.msra.mxu0 0
        %997 = vmatprep.subr.bf16.mxu0 0
        %998 = vmatpush1.bf16.msra.mxu0 0
        %999 = vmatprep.subr.bf16.mxu0 0
        %1000 = vmatpush1.bf16.msra.mxu0 0
        %1001 = vmatprep.subr.bf16.mxu0 0
        %1002 = vmatpush1.bf16.msra.mxu0 0
        %1003 = vmatprep.subr.bf16.mxu0 %v874
        %1004 = vmatpush1.bf16.msra.mxu0 %v873
        %1005 = vmatprep.subr.bf16.mxu0 %v866
        %1006 = vmatpush1.bf16.msra.mxu0 %v865
        %1007 = vmatprep.subr.bf16.mxu0 %v858
        %1008 = vmatpush1.bf16.msra.mxu0 %v857
        %1009 = vmatprep.subr.bf16.mxu0 %v850
        %1010 = vmatpush1.bf16.msra.mxu0 %v849
        %1011 = vmatprep.subr.bf16.mxu0 0
        %1012 = vmatpush2.bf16.msra.mxu0 0
        %1013 = vmatprep.subr.bf16.mxu0 0
        %1014 = vmatpush2.bf16.msra.mxu0 0
        %1015 = vmatprep.subr.bf16.mxu0 0
        %1016 = vmatpush2.bf16.msra.mxu0 0
        %1017 = vmatprep.subr.bf16.mxu0 0
        %1018 = vmatpush2.bf16.msra.mxu0 0
        %1019 = vmatprep.subr.bf16.mxu0 0
        %1020 = vmatpush2.bf16.msra.mxu0 0
        %1021 = vmatprep.subr.bf16.mxu0 0
        %1022 = vmatpush2.bf16.msra.mxu0 0
        %1023 = vmatprep.subr.bf16.mxu0 0
        %1024 = vmatpush2.bf16.msra.mxu0 0
        %1025 = vmatprep.subr.bf16.mxu0 0
        %1026 = vmatpush2.bf16.msra.mxu0 0
        %1027 = vmatprep.mubr.bf16.mxu0 0
        %1028 = vmatmul.mubr.bf16.gmra.mxu0 %v911
        %v1029 = vpop.f32.mrf.mxu0
        %v1030 = vadd.f32 0.0, %v1029
        %v1031 = vpop.f32.mrf.mxu0
        %v1032 = vadd.f32 0.0, %v1031
        %v1033 = vpop.f32.mrf.mxu0
        %v1034 = vpop.f32.mrf.mxu0
        %1035 = vdwg.mxu0
        %1036 = vmatprep.subr.bf16.mxu0 0
        %1037 = vmatpush1.bf16.msra.mxu0 0
        %1038 = vmatprep.subr.bf16.mxu0 0
        %1039 = vmatpush1.bf16.msra.mxu0 0
        %1040 = vmatprep.subr.bf16.mxu0 0
        %1041 = vmatpush1.bf16.msra.mxu0 0
        %1042 = vmatprep.subr.bf16.mxu0 0
        %1043 = vmatpush1.bf16.msra.mxu0 0
        %1044 = vmatprep.subr.bf16.mxu0 %v876
        %1045 = vmatpush1.bf16.msra.mxu0 %v875
        %1046 = vmatprep.subr.bf16.mxu0 %v868
        %1047 = vmatpush1.bf16.msra.mxu0 %v867
        %1048 = vmatprep.subr.bf16.mxu0 %v860
        %1049 = vmatpush1.bf16.msra.mxu0 %v859
        %1050 = vmatprep.subr.bf16.mxu0 %v852
        %1051 = vmatpush1.bf16.msra.mxu0 %v851
        %1052 = vmatprep.subr.bf16.mxu0 0
        %1053 = vmatpush2.bf16.msra.mxu0 0
        %1054 = vmatprep.subr.bf16.mxu0 0
        %1055 = vmatpush2.bf16.msra.mxu0 0
        %1056 = vmatprep.subr.bf16.mxu0 0
        %1057 = vmatpush2.bf16.msra.mxu0 0
        %1058 = vmatprep.subr.bf16.mxu0 0
        %1059 = vmatpush2.bf16.msra.mxu0 0
        %1060 = vmatprep.subr.bf16.mxu0 0
        %1061 = vmatpush2.bf16.msra.mxu0 0
        %1062 = vmatprep.subr.bf16.mxu0 0
        %1063 = vmatpush2.bf16.msra.mxu0 0
        %1064 = vmatprep.subr.bf16.mxu0 0
        %1065 = vmatpush2.bf16.msra.mxu0 0
        %1066 = vmatprep.subr.bf16.mxu0 0
        %1067 = vmatpush2.bf16.msra.mxu0 0
        %1068 = vmatprep.mubr.bf16.mxu0 0
        %1069 = vmatmul.mubr.bf16.gmra.mxu0 %v911
        %v1070 = vpop.f32.mrf.mxu0
        %v1071 = vadd.f32 0.0, %v1070
        %v1072 = vpop.f32.mrf.mxu0
        %v1073 = vadd.f32 0.0, %v1072
        %v1074 = vpop.f32.mrf.mxu0
        %v1075 = vpop.f32.mrf.mxu0
        %1076 = vdwg.mxu0
        %v1077 = vld [vmem:[%s5] sm:$0xf]
        %v1078 = vld [vmem:[%s5 + $0x4] sm:$0xf]
        %v1079 = vld [vmem:[%s5 + $0x8] sm:$0xf]
        %v1080 = vld [vmem:[%s5 + $0xc] sm:$0xf]
        %v1081 = vld [vmem:[%s5 + $0x10] sm:$0xf]
        %v1082 = vld [vmem:[%s5 + $0x14] sm:$0xf]
        %v1083 = vld [vmem:[%s5 + $0x18] sm:$0xf]
        %v1084 = vld [vmem:[%s5 + $0x1c] sm:$0xf]
        %v1085 = vld [vmem:[%s5 + $0x20] sm:$0xf]
        %v1086 = vld [vmem:[%s5 + $0x24] sm:$0xf]
        %v1087 = vld [vmem:[%s5 + $0x28] sm:$0xf]
        %v1088 = vld [vmem:[%s5 + $0x2c] sm:$0xf]
        %v1089 = vld [vmem:[%s5 + $0x30] sm:$0xf]
        %v1090 = vld [vmem:[%s5 + $0x34] sm:$0xf]
        %v1091 = vld [vmem:[%s5 + $0x38] sm:$0xf]
        %v1092 = vld [vmem:[%s5 + $0x3c] sm:$0xf]
        %v1093 = vld [vmem:[%s5 + $0x40] sm:$0xf]
        %v1094 = vld [vmem:[%s5 + $0x44] sm:$0xf]
        %v1095 = vld [vmem:[%s5 + $0x48] sm:$0xf]
        %v1096 = vld [vmem:[%s5 + $0x4c] sm:$0xf]
        %v1097 = vld [vmem:[%s5 + $0x50] sm:$0xf]
        %v1098 = vld [vmem:[%s5 + $0x54] sm:$0xf]
        %v1099 = vld [vmem:[%s5 + $0x58] sm:$0xf]
        %v1100 = vld [vmem:[%s5 + $0x5c] sm:$0xf]
        %v1101 = vld [vmem:[%s5 + $0x60] sm:$0xf]
        %v1102 = vld [vmem:[%s5 + $0x64] sm:$0xf]
        %v1103 = vld [vmem:[%s5 + $0x68] sm:$0xf]
        %v1104 = vld [vmem:[%s5 + $0x6c] sm:$0xf]
        %v1105 = vld [vmem:[%s5 + $0x70] sm:$0xf]
        %v1106 = vld [vmem:[%s5 + $0x74] sm:$0xf]
        %v1107 = vld [vmem:[%s5 + $0x78] sm:$0xf]
        %v1108 = vld [vmem:[%s5 + $0x7c] sm:$0xf]
        %v1109 = vld [vmem:[%s5 + $0x80] sm:$0xf]
        %v1110 = vld [vmem:[%s5 + $0x84] sm:$0xf]
        %v1111 = vld [vmem:[%s5 + $0x88] sm:$0xf]
        %v1112 = vld [vmem:[%s5 + $0x8c] sm:$0xf]
        %v1113 = vld [vmem:[%s5 + $0x90] sm:$0xf]
        %v1114 = vld [vmem:[%s5 + $0x94] sm:$0xf]
        %v1115 = vld [vmem:[%s5 + $0x98] sm:$0xf]
        %v1116 = vld [vmem:[%s5 + $0x9c] sm:$0xf]
        %v1117 = vld [vmem:[%s5 + $0xa0] sm:$0xf]
        %v1118 = vld [vmem:[%s5 + $0xa4] sm:$0xf]
        %v1119 = vld [vmem:[%s5 + $0xa8] sm:$0xf]
        %v1120 = vld [vmem:[%s5 + $0xac] sm:$0xf]
        %v1121 = vld [vmem:[%s5 + $0xb0] sm:$0xf]
        %v1122 = vld [vmem:[%s5 + $0xb4] sm:$0xf]
        %v1123 = vld [vmem:[%s5 + $0xb8] sm:$0xf]
        %v1124 = vld [vmem:[%s5 + $0xbc] sm:$0xf]
        %v1125 = vld [vmem:[%s5 + $0xc0] sm:$0xf]
        %v1126 = vld [vmem:[%s5 + $0xc4] sm:$0xf]
        %v1127 = vld [vmem:[%s5 + $0xc8] sm:$0xf]
        %v1128 = vld [vmem:[%s5 + $0xcc] sm:$0xf]
        %v1129 = vld [vmem:[%s5 + $0xd0] sm:$0xf]
        %v1130 = vld [vmem:[%s5 + $0xd4] sm:$0xf]
        %v1131 = vld [vmem:[%s5 + $0xd8] sm:$0xf]
        %v1132 = vld [vmem:[%s5 + $0xdc] sm:$0xf]
        %v1133 = vld [vmem:[%s5 + $0xe0] sm:$0xf]
        %v1134 = vld [vmem:[%s5 + $0xe4] sm:$0xf]
        %v1135 = vld [vmem:[%s5 + $0xe8] sm:$0xf]
        %v1136 = vld [vmem:[%s5 + $0xec] sm:$0xf]
        %v1137 = vld [vmem:[%s5 + $0xf0] sm:$0xf]
        %v1138 = vld [vmem:[%s5 + $0xf4] sm:$0xf]
        %v1139 = vld [vmem:[%s5 + $0xf8] sm:$0xf]
        %v1140 = vld [vmem:[%s5 + $0xfc] sm:$0xf]
        %v1141 = vld [vmem:[%s5 + $0x100] sm:$0xf]
        %v1142 = vld [vmem:[%s5 + $0x104] sm:$0xf]
        %v1143 = vld [vmem:[%s5 + $0x108] sm:$0xf]
        %v1144 = vld [vmem:[%s5 + $0x10c] sm:$0xf]
        %v1145 = vld [vmem:[%s5 + $0x110] sm:$0xf]
        %v1146 = vld [vmem:[%s5 + $0x114] sm:$0xf]
        %v1147 = vld [vmem:[%s5 + $0x118] sm:$0xf]
        %v1148 = vld [vmem:[%s5 + $0x11c] sm:$0xf]
        %v1149 = vld [vmem:[%s5 + $0x120] sm:$0xf]
        %v1150 = vld [vmem:[%s5 + $0x124] sm:$0xf]
        %v1151 = vld [vmem:[%s5 + $0x128] sm:$0xf]
        %v1152 = vld [vmem:[%s5 + $0x12c] sm:$0xf]
        %v1153 = vld [vmem:[%s5 + $0x130] sm:$0xf]
        %v1154 = vld [vmem:[%s5 + $0x134] sm:$0xf]
        %v1155 = vld [vmem:[%s5 + $0x138] sm:$0xf]
        %v1156 = vld [vmem:[%s5 + $0x13c] sm:$0xf]
        %v1157 = vld [vmem:[%s5 + $0x140] sm:$0xf]
        %v1158 = vld [vmem:[%s5 + $0x144] sm:$0xf]
        %v1159 = vld [vmem:[%s5 + $0x148] sm:$0xf]
        %v1160 = vld [vmem:[%s5 + $0x14c] sm:$0xf]
        %v1161 = vld [vmem:[%s5 + $0x150] sm:$0xf]
        %v1162 = vld [vmem:[%s5 + $0x154] sm:$0xf]
        %v1163 = vld [vmem:[%s5 + $0x158] sm:$0xf]
        %v1164 = vld [vmem:[%s5 + $0x15c] sm:$0xf]
        %v1165 = vld [vmem:[%s5 + $0x160] sm:$0xf]
        %v1166 = vld [vmem:[%s5 + $0x164] sm:$0xf]
        %v1167 = vld [vmem:[%s5 + $0x168] sm:$0xf]
        %v1168 = vld [vmem:[%s5 + $0x16c] sm:$0xf]
        %v1169 = vld [vmem:[%s5 + $0x170] sm:$0xf]
        %v1170 = vld [vmem:[%s5 + $0x174] sm:$0xf]
        %v1171 = vld [vmem:[%s5 + $0x178] sm:$0xf]
        %v1172 = vld [vmem:[%s5 + $0x17c] sm:$0xf]
        %v1173 = vld [vmem:[%s5 + $0x180] sm:$0xf]
        %v1174 = vld [vmem:[%s5 + $0x184] sm:$0xf]
        %v1175 = vld [vmem:[%s5 + $0x188] sm:$0xf]
        %v1176 = vld [vmem:[%s5 + $0x18c] sm:$0xf]
        %v1177 = vld [vmem:[%s5 + $0x190] sm:$0xf]
        %v1178 = vld [vmem:[%s5 + $0x194] sm:$0xf]
        %v1179 = vld [vmem:[%s5 + $0x198] sm:$0xf]
        %v1180 = vld [vmem:[%s5 + $0x19c] sm:$0xf]
        %v1181 = vld [vmem:[%s5 + $0x1a0] sm:$0xf]
        %v1182 = vld [vmem:[%s5 + $0x1a4] sm:$0xf]
        %v1183 = vld [vmem:[%s5 + $0x1a8] sm:$0xf]
        %v1184 = vld [vmem:[%s5 + $0x1ac] sm:$0xf]
        %v1185 = vld [vmem:[%s5 + $0x1b0] sm:$0xf]
        %v1186 = vld [vmem:[%s5 + $0x1b4] sm:$0xf]
        %v1187 = vld [vmem:[%s5 + $0x1b8] sm:$0xf]
        %v1188 = vld [vmem:[%s5 + $0x1bc] sm:$0xf]
        %v1189 = vld [vmem:[%s5 + $0x1c0] sm:$0xf]
        %v1190 = vld [vmem:[%s5 + $0x1c4] sm:$0xf]
        %v1191 = vld [vmem:[%s5 + $0x1c8] sm:$0xf]
        %v1192 = vld [vmem:[%s5 + $0x1cc] sm:$0xf]
        %v1193 = vld [vmem:[%s5 + $0x1d0] sm:$0xf]
        %v1194 = vld [vmem:[%s5 + $0x1d4] sm:$0xf]
        %v1195 = vld [vmem:[%s5 + $0x1d8] sm:$0xf]
        %v1196 = vld [vmem:[%s5 + $0x1dc] sm:$0xf]
        %v1197 = vld [vmem:[%s5 + $0x1e0] sm:$0xf]
        %v1198 = vld [vmem:[%s5 + $0x1e4] sm:$0xf]
        %v1199 = vld [vmem:[%s5 + $0x1e8] sm:$0xf]
        %v1200 = vld [vmem:[%s5 + $0x1ec] sm:$0xf]
        %v1201 = vld [vmem:[%s5 + $0x1f0] sm:$0xf]
        %v1202 = vld [vmem:[%s5 + $0x1f4] sm:$0xf]
        %v1203 = vld [vmem:[%s5 + $0x1f8] sm:$0xf]
        %v1204 = vld [vmem:[%s5 + $0x1fc] sm:$0xf]
        %v1205 = vpack.c.bf16 %v948, %v948
        %v1206 = vpack.c.bf16 %v950, %v950
        %v1207 = vpack.c.bf16 %v989, %v989
        %v1208 = vpack.c.bf16 %v991, %v991
        %v1209 = vpack.c.bf16 %v1030, %v1030
        %v1210 = vpack.c.bf16 %v1032, %v1032
        %v1211 = vpack.c.bf16 %v1071, %v1071
        %v1212 = vpack.c.bf16 %v1073, %v1073
        %v1341 = vunpack.c.l.b16 %v1077
        %v1342 = vunpack.c.l.b16 %v1078
        %v1343 = vunpack.c.l.b16 %v1079
        %v1344 = vunpack.c.l.b16 %v1080
        %v1345 = vunpack.c.l.b16 %v1081
        %v1346 = vunpack.c.l.b16 %v1082
        %v1347 = vunpack.c.l.b16 %v1083
        %v1348 = vunpack.c.l.b16 %v1084
        %v1349 = vunpack.c.l.b16 %v1085
        %v1350 = vunpack.c.l.b16 %v1086
        %v1351 = vunpack.c.l.b16 %v1087
        %v1352 = vunpack.c.l.b16 %v1088
        %v1353 = vunpack.c.l.b16 %v1089
        %v1354 = vunpack.c.l.b16 %v1090
        %v1355 = vunpack.c.l.b16 %v1091
        %v1356 = vunpack.c.l.b16 %v1092
        %v1357 = vunpack.c.l.b16 %v1093
        %v1358 = vunpack.c.l.b16 %v1094
        %v1359 = vunpack.c.l.b16 %v1095
        %v1360 = vunpack.c.l.b16 %v1096
        %v1361 = vunpack.c.l.b16 %v1097
        %v1362 = vunpack.c.l.b16 %v1098
        %v1363 = vunpack.c.l.b16 %v1099
        %v1364 = vunpack.c.l.b16 %v1100
        %v1365 = vunpack.c.l.b16 %v1101
        %v1366 = vunpack.c.l.b16 %v1102
        %v1367 = vunpack.c.l.b16 %v1103
        %v1368 = vunpack.c.l.b16 %v1104
        %v1369 = vunpack.c.l.b16 %v1105
        %v1370 = vunpack.c.l.b16 %v1106
        %v1371 = vunpack.c.l.b16 %v1107
        %v1372 = vunpack.c.l.b16 %v1108
        %v1373 = vunpack.c.l.b16 %v1109
        %v1374 = vunpack.c.l.b16 %v1110
        %v1375 = vunpack.c.l.b16 %v1111
        %v1376 = vunpack.c.l.b16 %v1112
        %v1377 = vunpack.c.l.b16 %v1113
        %v1378 = vunpack.c.l.b16 %v1114
        %v1379 = vunpack.c.l.b16 %v1115
        %v1380 = vunpack.c.l.b16 %v1116
        %v1381 = vunpack.c.l.b16 %v1117
        %v1382 = vunpack.c.l.b16 %v1118
        %v1383 = vunpack.c.l.b16 %v1119
        %v1384 = vunpack.c.l.b16 %v1120
        %v1385 = vunpack.c.l.b16 %v1121
        %v1386 = vunpack.c.l.b16 %v1122
        %v1387 = vunpack.c.l.b16 %v1123
        %v1388 = vunpack.c.l.b16 %v1124
        %v1389 = vunpack.c.l.b16 %v1125
        %v1390 = vunpack.c.l.b16 %v1126
        %v1391 = vunpack.c.l.b16 %v1127
        %v1392 = vunpack.c.l.b16 %v1128
        %v1393 = vunpack.c.l.b16 %v1129
        %v1394 = vunpack.c.l.b16 %v1130
        %v1395 = vunpack.c.l.b16 %v1131
        %v1396 = vunpack.c.l.b16 %v1132
        %v1397 = vunpack.c.l.b16 %v1133
        %v1398 = vunpack.c.l.b16 %v1134
        %v1399 = vunpack.c.l.b16 %v1135
        %v1400 = vunpack.c.l.b16 %v1136
        %v1401 = vunpack.c.l.b16 %v1137
        %v1402 = vunpack.c.l.b16 %v1138
        %v1403 = vunpack.c.l.b16 %v1139
        %v1404 = vunpack.c.l.b16 %v1140
        %v1405 = vunpack.c.l.b16 %v1141
        %v1406 = vunpack.c.l.b16 %v1142
        %v1407 = vunpack.c.l.b16 %v1143
        %v1408 = vunpack.c.l.b16 %v1144
        %v1409 = vunpack.c.l.b16 %v1145
        %v1410 = vunpack.c.l.b16 %v1146
        %v1411 = vunpack.c.l.b16 %v1147
        %v1412 = vunpack.c.l.b16 %v1148
        %v1413 = vunpack.c.l.b16 %v1149
        %v1414 = vunpack.c.l.b16 %v1150
        %v1415 = vunpack.c.l.b16 %v1151
        %v1416 = vunpack.c.l.b16 %v1152
        %v1417 = vunpack.c.l.b16 %v1153
        %v1418 = vunpack.c.l.b16 %v1154
        %v1419 = vunpack.c.l.b16 %v1155
        %v1420 = vunpack.c.l.b16 %v1156
        %v1421 = vunpack.c.l.b16 %v1157
        %v1422 = vunpack.c.l.b16 %v1158
        %v1423 = vunpack.c.l.b16 %v1159
        %v1424 = vunpack.c.l.b16 %v1160
        %v1425 = vunpack.c.l.b16 %v1161
        %v1426 = vunpack.c.l.b16 %v1162
        %v1427 = vunpack.c.l.b16 %v1163
        %v1428 = vunpack.c.l.b16 %v1164
        %v1429 = vunpack.c.l.b16 %v1165
        %v1430 = vunpack.c.l.b16 %v1166
        %v1431 = vunpack.c.l.b16 %v1167
        %v1432 = vunpack.c.l.b16 %v1168
        %v1433 = vunpack.c.l.b16 %v1169
        %v1434 = vunpack.c.l.b16 %v1170
        %v1435 = vunpack.c.l.b16 %v1171
        %v1436 = vunpack.c.l.b16 %v1172
        %v1437 = vunpack.c.l.b16 %v1173
        %v1438 = vunpack.c.l.b16 %v1174
        %v1439 = vunpack.c.l.b16 %v1175
        %v1440 = vunpack.c.l.b16 %v1176
        %v1441 = vunpack.c.l.b16 %v1177
        %v1442 = vunpack.c.l.b16 %v1178
        %v1443 = vunpack.c.l.b16 %v1179
        %v1444 = vunpack.c.l.b16 %v1180
        %v1445 = vunpack.c.l.b16 %v1181
        %v1446 = vunpack.c.l.b16 %v1182
        %v1447 = vunpack.c.l.b16 %v1183
        %v1448 = vunpack.c.l.b16 %v1184
        %v1449 = vunpack.c.l.b16 %v1185
        %v1450 = vunpack.c.l.b16 %v1186
        %v1451 = vunpack.c.l.b16 %v1187
        %v1452 = vunpack.c.l.b16 %v1188
        %v1453 = vunpack.c.l.b16 %v1189
        %v1454 = vunpack.c.l.b16 %v1190
        %v1455 = vunpack.c.l.b16 %v1191
        %v1456 = vunpack.c.l.b16 %v1192
        %v1457 = vunpack.c.l.b16 %v1193
        %v1458 = vunpack.c.l.b16 %v1194
        %v1459 = vunpack.c.l.b16 %v1195
        %v1460 = vunpack.c.l.b16 %v1196
        %v1461 = vunpack.c.l.b16 %v1197
        %v1462 = vunpack.c.l.b16 %v1198
        %v1463 = vunpack.c.l.b16 %v1199
        %v1464 = vunpack.c.l.b16 %v1200
        %v1465 = vunpack.c.l.b16 %v1201
        %v1466 = vunpack.c.l.b16 %v1202
        %v1467 = vunpack.c.l.b16 %v1203
        %v1468 = vunpack.c.l.b16 %v1204
        %v1469 = vpack.c.b16 %v1342, %v1341
        %v1470 = vpack.c.b16 %v1344, %v1343
        %v1471 = vpack.c.b16 %v1346, %v1345
        %v1472 = vpack.c.b16 %v1348, %v1347
        %v1473 = vpack.c.b16 %v1350, %v1349
        %v1474 = vpack.c.b16 %v1352, %v1351
        %v1475 = vpack.c.b16 %v1354, %v1353
        %v1476 = vpack.c.b16 %v1356, %v1355
        %v1477 = vpack.c.b16 %v1358, %v1357
        %v1478 = vpack.c.b16 %v1360, %v1359
        %v1479 = vpack.c.b16 %v1362, %v1361
        %v1480 = vpack.c.b16 %v1364, %v1363
        %v1481 = vpack.c.b16 %v1366, %v1365
        %v1482 = vpack.c.b16 %v1368, %v1367
        %v1483 = vpack.c.b16 %v1370, %v1369
        %v1484 = vpack.c.b16 %v1372, %v1371
        %v1485 = vpack.c.b16 %v1374, %v1373
        %v1486 = vpack.c.b16 %v1376, %v1375
        %v1487 = vpack.c.b16 %v1378, %v1377
        %v1488 = vpack.c.b16 %v1380, %v1379
        %v1489 = vpack.c.b16 %v1382, %v1381
        %v1490 = vpack.c.b16 %v1384, %v1383
        %v1491 = vpack.c.b16 %v1386, %v1385
        %v1492 = vpack.c.b16 %v1388, %v1387
        %v1493 = vpack.c.b16 %v1390, %v1389
        %v1494 = vpack.c.b16 %v1392, %v1391
        %v1495 = vpack.c.b16 %v1394, %v1393
        %v1496 = vpack.c.b16 %v1396, %v1395
        %v1497 = vpack.c.b16 %v1398, %v1397
        %v1498 = vpack.c.b16 %v1400, %v1399
        %v1499 = vpack.c.b16 %v1402, %v1401
        %v1500 = vpack.c.b16 %v1404, %v1403
        %v1501 = vpack.c.b16 %v1406, %v1405
        %v1502 = vpack.c.b16 %v1408, %v1407
        %v1503 = vpack.c.b16 %v1410, %v1409
        %v1504 = vpack.c.b16 %v1412, %v1411
        %v1505 = vpack.c.b16 %v1414, %v1413
        %v1506 = vpack.c.b16 %v1416, %v1415
        %v1507 = vpack.c.b16 %v1418, %v1417
        %v1508 = vpack.c.b16 %v1420, %v1419
        %v1509 = vpack.c.b16 %v1422, %v1421
        %v1510 = vpack.c.b16 %v1424, %v1423
        %v1511 = vpack.c.b16 %v1426, %v1425
        %v1512 = vpack.c.b16 %v1428, %v1427
        %v1513 = vpack.c.b16 %v1430, %v1429
        %v1514 = vpack.c.b16 %v1432, %v1431
        %v1515 = vpack.c.b16 %v1434, %v1433
        %v1516 = vpack.c.b16 %v1436, %v1435
        %v1517 = vpack.c.b16 %v1438, %v1437
        %v1518 = vpack.c.b16 %v1440, %v1439
        %v1519 = vpack.c.b16 %v1442, %v1441
        %v1520 = vpack.c.b16 %v1444, %v1443
        %v1521 = vpack.c.b16 %v1446, %v1445
        %v1522 = vpack.c.b16 %v1448, %v1447
        %v1523 = vpack.c.b16 %v1450, %v1449
        %v1524 = vpack.c.b16 %v1452, %v1451
        %v1525 = vpack.c.b16 %v1454, %v1453
        %v1526 = vpack.c.b16 %v1456, %v1455
        %v1527 = vpack.c.b16 %v1458, %v1457
        %v1528 = vpack.c.b16 %v1460, %v1459
        %v1529 = vpack.c.b16 %v1462, %v1461
        %v1530 = vpack.c.b16 %v1464, %v1463
        %v1531 = vpack.c.b16 %v1466, %v1465
        %v1532 = vpack.c.b16 %v1468, %v1467
        %1597 = vmatprep.subr.bf16.mxu0 0
        %1598 = vmatpush1.bf16.msra.mxu0 %v1476
        %1599 = vmatprep.subr.bf16.mxu0 0
        %1600 = vmatpush1.bf16.msra.mxu0 %v1475
        %1601 = vmatprep.subr.bf16.mxu0 0
        %1602 = vmatpush1.bf16.msra.mxu0 %v1474
        %1603 = vmatprep.subr.bf16.mxu0 0
        %1604 = vmatpush1.bf16.msra.mxu0 %v1473
        %1605 = vmatprep.subr.bf16.mxu0 0
        %1606 = vmatpush1.bf16.msra.mxu0 %v1472
        %1607 = vmatprep.subr.bf16.mxu0 0
        %1608 = vmatpush1.bf16.msra.mxu0 %v1471
        %1609 = vmatprep.subr.bf16.mxu0 0
        %1610 = vmatpush1.bf16.msra.mxu0 %v1470
        %1611 = vmatprep.subr.bf16.mxu0 0
        %1612 = vmatpush1.bf16.msra.mxu0 %v1469
        %1613 = vmatprep.subr.bf16.mxu0 0
        %1614 = vmatpush2.bf16.msra.mxu0 %v1484
        %1615 = vmatprep.subr.bf16.mxu0 0
        %1616 = vmatpush2.bf16.msra.mxu0 %v1483
        %1617 = vmatprep.subr.bf16.mxu0 0
        %1618 = vmatpush2.bf16.msra.mxu0 %v1482
        %1619 = vmatprep.subr.bf16.mxu0 0
        %1620 = vmatpush2.bf16.msra.mxu0 %v1481
        %1621 = vmatprep.subr.bf16.mxu0 0
        %1622 = vmatpush2.bf16.msra.mxu0 %v1480
        %1623 = vmatprep.subr.bf16.mxu0 0
        %1624 = vmatpush2.bf16.msra.mxu0 %v1479
        %1625 = vmatprep.subr.bf16.mxu0 0
        %1626 = vmatpush2.bf16.msra.mxu0 %v1478
        %1627 = vmatprep.subr.bf16.mxu0 0
        %1628 = vmatpush2.bf16.msra.mxu0 %v1477
        %1629 = vmatprep.mubr.bf16.mxu0 %v1206
        %1630 = vmatmul.mubr.bf16.gmra.mxu0 %v1205
        %v1631 = vpop.f32.mrf.mxu0
        %v1632 = vadd.f32 0.0, %v1631
        %v1633 = vpop.f32.mrf.mxu0
        %v1634 = vpop.f32.mrf.mxu0
        %v1635 = vpop.f32.mrf.mxu0
        %1636 = vdwg.mxu0
        %1637 = vmatprep.subr.bf16.mxu0 0
        %1638 = vmatpush1.bf16.msra.mxu0 %v1492
        %1639 = vmatprep.subr.bf16.mxu0 0
        %1640 = vmatpush1.bf16.msra.mxu0 %v1491
        %1641 = vmatprep.subr.bf16.mxu0 0
        %1642 = vmatpush1.bf16.msra.mxu0 %v1490
        %1643 = vmatprep.subr.bf16.mxu0 0
        %1644 = vmatpush1.bf16.msra.mxu0 %v1489
        %1645 = vmatprep.subr.bf16.mxu0 0
        %1646 = vmatpush1.bf16.msra.mxu0 %v1488
        %1647 = vmatprep.subr.bf16.mxu0 0
        %1648 = vmatpush1.bf16.msra.mxu0 %v1487
        %1649 = vmatprep.subr.bf16.mxu0 0
        %1650 = vmatpush1.bf16.msra.mxu0 %v1486
        %1651 = vmatprep.subr.bf16.mxu0 0
        %1652 = vmatpush1.bf16.msra.mxu0 %v1485
        %1653 = vmatprep.subr.bf16.mxu0 0
        %1654 = vmatpush2.bf16.msra.mxu0 %v1500
        %1655 = vmatprep.subr.bf16.mxu0 0
        %1656 = vmatpush2.bf16.msra.mxu0 %v1499
        %1657 = vmatprep.subr.bf16.mxu0 0
        %1658 = vmatpush2.bf16.msra.mxu0 %v1498
        %1659 = vmatprep.subr.bf16.mxu0 0
        %1660 = vmatpush2.bf16.msra.mxu0 %v1497
        %1661 = vmatprep.subr.bf16.mxu0 0
        %1662 = vmatpush2.bf16.msra.mxu0 %v1496
        %1663 = vmatprep.subr.bf16.mxu0 0
        %1664 = vmatpush2.bf16.msra.mxu0 %v1495
        %1665 = vmatprep.subr.bf16.mxu0 0
        %1666 = vmatpush2.bf16.msra.mxu0 %v1494
        %1667 = vmatprep.subr.bf16.mxu0 0
        %1668 = vmatpush2.bf16.msra.mxu0 %v1493
        %1669 = vmatprep.mubr.bf16.mxu0 %v1208
        %1670 = vmatmul.mubr.bf16.gmra.mxu0 %v1207
        %v1671 = vpop.f32.mrf.mxu0
        %v1672 = vadd.f32 %v1632, %v1671
        %v1673 = vpop.f32.mrf.mxu0
        %v1674 = vpop.f32.mrf.mxu0
        %v1675 = vpop.f32.mrf.mxu0
        %1676 = vdwg.mxu0
        %1677 = vmatprep.subr.bf16.mxu0 0
        %1678 = vmatpush1.bf16.msra.mxu0 %v1508
        %1679 = vmatprep.subr.bf16.mxu0 0
        %1680 = vmatpush1.bf16.msra.mxu0 %v1507
        %1681 = vmatprep.subr.bf16.mxu0 0
        %1682 = vmatpush1.bf16.msra.mxu0 %v1506
        %1683 = vmatprep.subr.bf16.mxu0 0
        %1684 = vmatpush1.bf16.msra.mxu0 %v1505
        %1685 = vmatprep.subr.bf16.mxu0 0
        %1686 = vmatpush1.bf16.msra.mxu0 %v1504
        %1687 = vmatprep.subr.bf16.mxu0 0
        %1688 = vmatpush1.bf16.msra.mxu0 %v1503
        %1689 = vmatprep.subr.bf16.mxu0 0
        %1690 = vmatpush1.bf16.msra.mxu0 %v1502
        %1691 = vmatprep.subr.bf16.mxu0 0
        %1692 = vmatpush1.bf16.msra.mxu0 %v1501
        %1693 = vmatprep.subr.bf16.mxu0 0
        %1694 = vmatpush2.bf16.msra.mxu0 %v1516
        %1695 = vmatprep.subr.bf16.mxu0 0
        %1696 = vmatpush2.bf16.msra.mxu0 %v1515
        %1697 = vmatprep.subr.bf16.mxu0 0
        %1698 = vmatpush2.bf16.msra.mxu0 %v1514
        %1699 = vmatprep.subr.bf16.mxu0 0
        %1700 = vmatpush2.bf16.msra.mxu0 %v1513
        %1701 = vmatprep.subr.bf16.mxu0 0
        %1702 = vmatpush2.bf16.msra.mxu0 %v1512
        %1703 = vmatprep.subr.bf16.mxu0 0
        %1704 = vmatpush2.bf16.msra.mxu0 %v1511
        %1705 = vmatprep.subr.bf16.mxu0 0
        %1706 = vmatpush2.bf16.msra.mxu0 %v1510
        %1707 = vmatprep.subr.bf16.mxu0 0
        %1708 = vmatpush2.bf16.msra.mxu0 %v1509
        %1709 = vmatprep.mubr.bf16.mxu0 %v1210
        %1710 = vmatmul.mubr.bf16.gmra.mxu0 %v1209
        %v1711 = vpop.f32.mrf.mxu0
        %v1712 = vadd.f32 %v1672, %v1711
        %v1713 = vpop.f32.mrf.mxu0
        %v1714 = vpop.f32.mrf.mxu0
        %v1715 = vpop.f32.mrf.mxu0
        %1716 = vdwg.mxu0
        %1717 = vmatprep.subr.bf16.mxu0 0
        %1718 = vmatpush1.bf16.msra.mxu0 %v1524
        %1719 = vmatprep.subr.bf16.mxu0 0
        %1720 = vmatpush1.bf16.msra.mxu0 %v1523
        %1721 = vmatprep.subr.bf16.mxu0 0
        %1722 = vmatpush1.bf16.msra.mxu0 %v1522
        %1723 = vmatprep.subr.bf16.mxu0 0
        %1724 = vmatpush1.bf16.msra.mxu0 %v1521
        %1725 = vmatprep.subr.bf16.mxu0 0
        %1726 = vmatpush1.bf16.msra.mxu0 %v1520
        %1727 = vmatprep.subr.bf16.mxu0 0
        %1728 = vmatpush1.bf16.msra.mxu0 %v1519
        %1729 = vmatprep.subr.bf16.mxu0 0
        %1730 = vmatpush1.bf16.msra.mxu0 %v1518
        %1731 = vmatprep.subr.bf16.mxu0 0
        %1732 = vmatpush1.bf16.msra.mxu0 %v1517
        %1733 = vmatprep.subr.bf16.mxu0 0
        %1734 = vmatpush2.bf16.msra.mxu0 %v1532
        %1735 = vmatprep.subr.bf16.mxu0 0
        %1736 = vmatpush2.bf16.msra.mxu0 %v1531
        %1737 = vmatprep.subr.bf16.mxu0 0
        %1738 = vmatpush2.bf16.msra.mxu0 %v1530
        %1739 = vmatprep.subr.bf16.mxu0 0
        %1740 = vmatpush2.bf16.msra.mxu0 %v1529
        %1741 = vmatprep.subr.bf16.mxu0 0
        %1742 = vmatpush2.bf16.msra.mxu0 %v1528
        %1743 = vmatprep.subr.bf16.mxu0 0
        %1744 = vmatpush2.bf16.msra.mxu0 %v1527
        %1745 = vmatprep.subr.bf16.mxu0 0
        %1746 = vmatpush2.bf16.msra.mxu0 %v1526
        %1747 = vmatprep.subr.bf16.mxu0 0
        %1748 = vmatpush2.bf16.msra.mxu0 %v1525
        %1749 = vmatprep.mubr.bf16.mxu0 %v1212
        %1750 = vmatmul.mubr.bf16.gmra.mxu0 %v1211
        %v1751 = vpop.f32.mrf.mxu0
        %v1752 = vadd.f32 %v1712, %v1751
        %v1753 = vpop.f32.mrf.mxu0
        %v1754 = vpop.f32.mrf.mxu0
        %v1755 = vpop.f32.mrf.mxu0
        %1756 = vdwg.mxu0
        %1758 = vrot.lane.b32.xlu0 %v1752, 127
        %v1759 = vpop.permute.xlu0 %1758
        %1761 = vxpose.xlu0.b32.start [1/16] %v1759, 128
        %1762 = vxpose.xlu0.b32.cont [2/16] 0.0, 128
        %1763 = vxpose.xlu0.b32.cont [3/16] 0.0, 128
        %1764 = vxpose.xlu0.b32.cont [4/16] 0.0, 128
        %1765 = vxpose.xlu0.b32.cont [5/16] 0.0, 128
        %1766 = vxpose.xlu0.b32.cont [6/16] 0.0, 128
        %1767 = vxpose.xlu0.b32.cont [7/16] 0.0, 128
        %1768 = vxpose.xlu0.b32.cont [8/16] 0.0, 128
        %1769 = vxpose.xlu0.b32.cont [9/16] 0.0, 128
        %1770 = vxpose.xlu0.b32.cont [10/16] 0.0, 128
        %1771 = vxpose.xlu0.b32.cont [11/16] 0.0, 128
        %1772 = vxpose.xlu0.b32.cont [12/16] 0.0, 128
        %1773 = vxpose.xlu0.b32.cont [13/16] 0.0, 128
        %1774 = vxpose.xlu0.b32.cont [14/16] 0.0, 128
        %1775 = vxpose.xlu0.b32.cont [15/16] 0.0, 128
        %1776 = vxpose.xlu0.b32.end [16/16] 0.0, 128
        %v1777 = vpop.trf.xlu0
        %v1778 = vpop.trf.xlu0
        %v1779 = vpop.trf.xlu0
        %v1780 = vpop.trf.xlu0
        %v1781 = vpop.trf.xlu0
        %v1782 = vpop.trf.xlu0
        %v1783 = vpop.trf.xlu0
        %v1784 = vpop.trf.xlu0
        %v1785 = vpop.trf.xlu0
        %v1786 = vpop.trf.xlu0
        %v1787 = vpop.trf.xlu0
        %v1788 = vpop.trf.xlu0
        %v1789 = vpop.trf.xlu0
        %v1790 = vpop.trf.xlu0
        %v1791 = vpop.trf.xlu0
        %v1792 = vpop.trf.xlu0
        %1793 = vset.pattern.permute.xlu0 0
        %1794 = vperm.xlu0 %1793, %v1752
        %v1795 = vpop.permute.xlu0 %1794
        %v1797 = vlaneseq
        %v1798 = vshrl.u32 %v1797, 7
        %v1799 = vsub.s32 0, %v1798
        %v1800 = vrot.slane %v1777, %v1799
        %v1801 = vadd.f32 %v1795, %v1800
        %vm1802 = vcmp.gt.f32.partialorder %v1801, 0.0
        %v1803 = vmul.f32 %v1801, 0.2
        %v1804 = vsel %vm1802, %v1801, %v1803
        %v1805 = vsel %vm267, %v1804, -1e+30
        %v1806 = vsel %vm431, %v1805, -inf
        %1807 = vmax.xlane.f32.xlu0 %v1806
        %v1808 = vpop.xlane.xlu0 %1807
        %v1809 = vsub.f32 %v1805, %v1808
        %v1810 = vmul.f32 %v1809, 1.442695
        %v1811 = vpow.pop %v1810
        %v1812 = vsel %vm267, %v1811, 0.0
        %v1813 = vsel %vm431, %v1812, 0.0
        %1814 = vadd.xlane.f32.xlu0 %v1813
        %v1815 = vpop.xlane.xlu0 %1814
        %v1816 = vadd.f32 %v1815, 1e-09
        %v1817 = vrcp.pop %v1816
        %v1818 = vmul.f32 %v1812, %v1817
        %v1819 = vpack.c.bf16 %v1818, %v1818
        %s1820 = scalar_lea.vmem %s4, 256
        %v1821 = vld [vmem:[%s1820] sm:$0xff]
        %v1822 = vld [vmem:[%s1820 + $0x8] sm:$0xff]
        %v1823 = vld [vmem:[%s1820 + $0x10] sm:$0xff]
        %v1824 = vld [vmem:[%s1820 + $0x18] sm:$0xff]
        %v1825 = vld [vmem:[%s1820 + $0x20] sm:$0xff]
        %v1826 = vld [vmem:[%s1820 + $0x28] sm:$0xff]
        %v1827 = vld [vmem:[%s1820 + $0x30] sm:$0xff]
        %v1828 = vld [vmem:[%s1820 + $0x38] sm:$0xff]
        %v1829 = vld [vmem:[%s1820 + $0x40] sm:$0xff]
        %v1830 = vld [vmem:[%s1820 + $0x48] sm:$0xff]
        %v1831 = vld [vmem:[%s1820 + $0x50] sm:$0xff]
        %v1832 = vld [vmem:[%s1820 + $0x58] sm:$0xff]
        %v1833 = vld [vmem:[%s1820 + $0x60] sm:$0xff]
        %v1834 = vld [vmem:[%s1820 + $0x68] sm:$0xff]
        %v1835 = vld [vmem:[%s1820 + $0x70] sm:$0xff]
        %v1836 = vld [vmem:[%s1820 + $0x78] sm:$0xff]
        %v1837 = vld [vmem:[%s1820 + $0x80] sm:$0xff]
        %v1838 = vld [vmem:[%s1820 + $0x88] sm:$0xff]
        %v1839 = vld [vmem:[%s1820 + $0x90] sm:$0xff]
        %v1840 = vld [vmem:[%s1820 + $0x98] sm:$0xff]
        %v1841 = vld [vmem:[%s1820 + $0xa0] sm:$0xff]
        %v1842 = vld [vmem:[%s1820 + $0xa8] sm:$0xff]
        %v1843 = vld [vmem:[%s1820 + $0xb0] sm:$0xff]
        %v1844 = vld [vmem:[%s1820 + $0xb8] sm:$0xff]
        %v1845 = vld [vmem:[%s1820 + $0xc0] sm:$0xff]
        %v1846 = vld [vmem:[%s1820 + $0xc8] sm:$0xff]
        %v1847 = vld [vmem:[%s1820 + $0xd0] sm:$0xff]
        %v1848 = vld [vmem:[%s1820 + $0xd8] sm:$0xff]
        %v1849 = vld [vmem:[%s1820 + $0xe0] sm:$0xff]
        %v1850 = vld [vmem:[%s1820 + $0xe8] sm:$0xff]
        %v1851 = vld [vmem:[%s1820 + $0xf0] sm:$0xff]
        %v1852 = vld [vmem:[%s1820 + $0xf8] sm:$0xff]
        %v1885 = vunpack.c.l.b16 %v1821
        %v1886 = vunpack.c.h.b16 %v1821
        %v1887 = vunpack.c.l.b16 %v1822
        %v1888 = vunpack.c.h.b16 %v1822
        %v1889 = vunpack.c.l.b16 %v1823
        %v1890 = vunpack.c.h.b16 %v1823
        %v1891 = vunpack.c.l.b16 %v1824
        %v1892 = vunpack.c.h.b16 %v1824
        %v1893 = vunpack.c.l.b16 %v1825
        %v1894 = vunpack.c.h.b16 %v1825
        %v1895 = vunpack.c.l.b16 %v1826
        %v1896 = vunpack.c.h.b16 %v1826
        %v1897 = vunpack.c.l.b16 %v1827
        %v1898 = vunpack.c.h.b16 %v1827
        %v1899 = vunpack.c.l.b16 %v1828
        %v1900 = vunpack.c.h.b16 %v1828
        %v1901 = vunpack.c.l.b16 %v1829
        %v1902 = vunpack.c.h.b16 %v1829
        %v1903 = vunpack.c.l.b16 %v1830
        %v1904 = vunpack.c.h.b16 %v1830
        %v1905 = vunpack.c.l.b16 %v1831
        %v1906 = vunpack.c.h.b16 %v1831
        %v1907 = vunpack.c.l.b16 %v1832
        %v1908 = vunpack.c.h.b16 %v1832
        %v1909 = vunpack.c.l.b16 %v1833
        %v1910 = vunpack.c.h.b16 %v1833
        %v1911 = vunpack.c.l.b16 %v1834
        %v1912 = vunpack.c.h.b16 %v1834
        %v1913 = vunpack.c.l.b16 %v1835
        %v1914 = vunpack.c.h.b16 %v1835
        %v1915 = vunpack.c.l.b16 %v1836
        %v1916 = vunpack.c.h.b16 %v1836
        %v1917 = vunpack.c.l.b16 %v1837
        %v1918 = vunpack.c.h.b16 %v1837
        %v1919 = vunpack.c.l.b16 %v1838
        %v1920 = vunpack.c.h.b16 %v1838
        %v1921 = vunpack.c.l.b16 %v1839
        %v1922 = vunpack.c.h.b16 %v1839
        %v1923 = vunpack.c.l.b16 %v1840
        %v1924 = vunpack.c.h.b16 %v1840
        %v1925 = vunpack.c.l.b16 %v1841
        %v1926 = vunpack.c.h.b16 %v1841
        %v1927 = vunpack.c.l.b16 %v1842
        %v1928 = vunpack.c.h.b16 %v1842
        %v1929 = vunpack.c.l.b16 %v1843
        %v1930 = vunpack.c.h.b16 %v1843
        %v1931 = vunpack.c.l.b16 %v1844
        %v1932 = vunpack.c.h.b16 %v1844
        %v1933 = vunpack.c.l.b16 %v1845
        %v1934 = vunpack.c.h.b16 %v1845
        %v1935 = vunpack.c.l.b16 %v1846
        %v1936 = vunpack.c.h.b16 %v1846
        %v1937 = vunpack.c.l.b16 %v1847
        %v1938 = vunpack.c.h.b16 %v1847
        %v1939 = vunpack.c.l.b16 %v1848
        %v1940 = vunpack.c.h.b16 %v1848
        %v1941 = vunpack.c.l.b16 %v1849
        %v1942 = vunpack.c.h.b16 %v1849
        %v1943 = vunpack.c.l.b16 %v1850
        %v1944 = vunpack.c.h.b16 %v1850
        %v1945 = vunpack.c.l.b16 %v1851
        %v1946 = vunpack.c.h.b16 %v1851
        %v1947 = vunpack.c.l.b16 %v1852
        %v1948 = vunpack.c.h.b16 %v1852
        %v1949 = vpack.c.b16 %v1893, %v1885
        %v1950 = vpack.c.b16 %v1894, %v1886
        %v1951 = vpack.c.b16 %v1895, %v1887
        %v1952 = vpack.c.b16 %v1896, %v1888
        %v1953 = vpack.c.b16 %v1897, %v1889
        %v1954 = vpack.c.b16 %v1898, %v1890
        %v1955 = vpack.c.b16 %v1899, %v1891
        %v1956 = vpack.c.b16 %v1900, %v1892
        %v1957 = vpack.c.b16 %v1909, %v1901
        %v1958 = vpack.c.b16 %v1910, %v1902
        %v1959 = vpack.c.b16 %v1911, %v1903
        %v1960 = vpack.c.b16 %v1912, %v1904
        %v1961 = vpack.c.b16 %v1913, %v1905
        %v1962 = vpack.c.b16 %v1914, %v1906
        %v1963 = vpack.c.b16 %v1915, %v1907
        %v1964 = vpack.c.b16 %v1916, %v1908
        %v1965 = vpack.c.b16 %v1925, %v1917
        %v1966 = vpack.c.b16 %v1926, %v1918
        %v1967 = vpack.c.b16 %v1927, %v1919
        %v1968 = vpack.c.b16 %v1928, %v1920
        %v1969 = vpack.c.b16 %v1929, %v1921
        %v1970 = vpack.c.b16 %v1930, %v1922
        %v1971 = vpack.c.b16 %v1931, %v1923
        %v1972 = vpack.c.b16 %v1932, %v1924
        %v1973 = vpack.c.b16 %v1941, %v1933
        %v1974 = vpack.c.b16 %v1942, %v1934
        %v1975 = vpack.c.b16 %v1943, %v1935
        %v1976 = vpack.c.b16 %v1944, %v1936
        %v1977 = vpack.c.b16 %v1945, %v1937
        %v1978 = vpack.c.b16 %v1946, %v1938
        %v1979 = vpack.c.b16 %v1947, %v1939
        %v1980 = vpack.c.b16 %v1948, %v1940
        %2013 = vmatprep.subr.bf16.mxu0 0
        %2014 = vmatpush1.bf16.msra.mxu0 0
        %2015 = vmatprep.subr.bf16.mxu0 0
        %2016 = vmatpush1.bf16.msra.mxu0 0
        %2017 = vmatprep.subr.bf16.mxu0 0
        %2018 = vmatpush1.bf16.msra.mxu0 0
        %2019 = vmatprep.subr.bf16.mxu0 0
        %2020 = vmatpush1.bf16.msra.mxu0 0
        %2021 = vmatprep.subr.bf16.mxu0 %v1974
        %2022 = vmatpush1.bf16.msra.mxu0 %v1973
        %2023 = vmatprep.subr.bf16.mxu0 %v1966
        %2024 = vmatpush1.bf16.msra.mxu0 %v1965
        %2025 = vmatprep.subr.bf16.mxu0 %v1958
        %2026 = vmatpush1.bf16.msra.mxu0 %v1957
        %2027 = vmatprep.subr.bf16.mxu0 %v1950
        %2028 = vmatpush1.bf16.msra.mxu0 %v1949
        %2029 = vmatprep.subr.bf16.mxu0 0
        %2030 = vmatpush2.bf16.msra.mxu0 0
        %2031 = vmatprep.subr.bf16.mxu0 0
        %2032 = vmatpush2.bf16.msra.mxu0 0
        %2033 = vmatprep.subr.bf16.mxu0 0
        %2034 = vmatpush2.bf16.msra.mxu0 0
        %2035 = vmatprep.subr.bf16.mxu0 0
        %2036 = vmatpush2.bf16.msra.mxu0 0
        %2037 = vmatprep.subr.bf16.mxu0 0
        %2038 = vmatpush2.bf16.msra.mxu0 0
        %2039 = vmatprep.subr.bf16.mxu0 0
        %2040 = vmatpush2.bf16.msra.mxu0 0
        %2041 = vmatprep.subr.bf16.mxu0 0
        %2042 = vmatpush2.bf16.msra.mxu0 0
        %2043 = vmatprep.subr.bf16.mxu0 0
        %2044 = vmatpush2.bf16.msra.mxu0 0
        %2045 = vmatprep.mubr.bf16.mxu0 0
        %2046 = vmatmul.mubr.bf16.gmra.mxu0 %v911
        %v2047 = vpop.f32.mrf.mxu0
        %v2048 = vadd.f32 0.0, %v2047
        %v2049 = vpop.f32.mrf.mxu0
        %v2050 = vadd.f32 0.0, %v2049
        %v2051 = vpop.f32.mrf.mxu0
        %v2052 = vpop.f32.mrf.mxu0
        %2053 = vdwg.mxu0
        %2054 = vmatprep.subr.bf16.mxu0 0
        %2055 = vmatpush1.bf16.msra.mxu0 0
        %2056 = vmatprep.subr.bf16.mxu0 0
        %2057 = vmatpush1.bf16.msra.mxu0 0
        %2058 = vmatprep.subr.bf16.mxu0 0
        %2059 = vmatpush1.bf16.msra.mxu0 0
        %2060 = vmatprep.subr.bf16.mxu0 0
        %2061 = vmatpush1.bf16.msra.mxu0 0
        %2062 = vmatprep.subr.bf16.mxu0 %v1976
        %2063 = vmatpush1.bf16.msra.mxu0 %v1975
        %2064 = vmatprep.subr.bf16.mxu0 %v1968
        %2065 = vmatpush1.bf16.msra.mxu0 %v1967
        %2066 = vmatprep.subr.bf16.mxu0 %v1960
        %2067 = vmatpush1.bf16.msra.mxu0 %v1959
        %2068 = vmatprep.subr.bf16.mxu0 %v1952
        %2069 = vmatpush1.bf16.msra.mxu0 %v1951
        %2070 = vmatprep.subr.bf16.mxu0 0
        %2071 = vmatpush2.bf16.msra.mxu0 0
        %2072 = vmatprep.subr.bf16.mxu0 0
        %2073 = vmatpush2.bf16.msra.mxu0 0
        %2074 = vmatprep.subr.bf16.mxu0 0
        %2075 = vmatpush2.bf16.msra.mxu0 0
        %2076 = vmatprep.subr.bf16.mxu0 0
        %2077 = vmatpush2.bf16.msra.mxu0 0
        %2078 = vmatprep.subr.bf16.mxu0 0
        %2079 = vmatpush2.bf16.msra.mxu0 0
        %2080 = vmatprep.subr.bf16.mxu0 0
        %2081 = vmatpush2.bf16.msra.mxu0 0
        %2082 = vmatprep.subr.bf16.mxu0 0
        %2083 = vmatpush2.bf16.msra.mxu0 0
        %2084 = vmatprep.subr.bf16.mxu0 0
        %2085 = vmatpush2.bf16.msra.mxu0 0
        %2086 = vmatprep.mubr.bf16.mxu0 0
        %2087 = vmatmul.mubr.bf16.gmra.mxu0 %v911
        %v2088 = vpop.f32.mrf.mxu0
        %v2089 = vadd.f32 0.0, %v2088
        %v2090 = vpop.f32.mrf.mxu0
        %v2091 = vadd.f32 0.0, %v2090
        %v2092 = vpop.f32.mrf.mxu0
        %v2093 = vpop.f32.mrf.mxu0
        %2094 = vdwg.mxu0
        %2095 = vmatprep.subr.bf16.mxu0 0
        %2096 = vmatpush1.bf16.msra.mxu0 0
        %2097 = vmatprep.subr.bf16.mxu0 0
        %2098 = vmatpush1.bf16.msra.mxu0 0
        %2099 = vmatprep.subr.bf16.mxu0 0
        %2100 = vmatpush1.bf16.msra.mxu0 0
        %2101 = vmatprep.subr.bf16.mxu0 0
        %2102 = vmatpush1.bf16.msra.mxu0 0
        %2103 = vmatprep.subr.bf16.mxu0 %v1978
        %2104 = vmatpush1.bf16.msra.mxu0 %v1977
        %2105 = vmatprep.subr.bf16.mxu0 %v1970
        %2106 = vmatpush1.bf16.msra.mxu0 %v1969
        %2107 = vmatprep.subr.bf16.mxu0 %v1962
        %2108 = vmatpush1.bf16.msra.mxu0 %v1961
        %2109 = vmatprep.subr.bf16.mxu0 %v1954
        %2110 = vmatpush1.bf16.msra.mxu0 %v1953
        %2111 = vmatprep.subr.bf16.mxu0 0
        %2112 = vmatpush2.bf16.msra.mxu0 0
        %2113 = vmatprep.subr.bf16.mxu0 0
        %2114 = vmatpush2.bf16.msra.mxu0 0
        %2115 = vmatprep.subr.bf16.mxu0 0
        %2116 = vmatpush2.bf16.msra.mxu0 0
        %2117 = vmatprep.subr.bf16.mxu0 0
        %2118 = vmatpush2.bf16.msra.mxu0 0
        %2119 = vmatprep.subr.bf16.mxu0 0
        %2120 = vmatpush2.bf16.msra.mxu0 0
        %2121 = vmatprep.subr.bf16.mxu0 0
        %2122 = vmatpush2.bf16.msra.mxu0 0
        %2123 = vmatprep.subr.bf16.mxu0 0
        %2124 = vmatpush2.bf16.msra.mxu0 0
        %2125 = vmatprep.subr.bf16.mxu0 0
        %2126 = vmatpush2.bf16.msra.mxu0 0
        %2127 = vmatprep.mubr.bf16.mxu0 0
        %2128 = vmatmul.mubr.bf16.gmra.mxu0 %v911
        %v2129 = vpop.f32.mrf.mxu0
        %v2130 = vadd.f32 0.0, %v2129
        %v2131 = vpop.f32.mrf.mxu0
        %v2132 = vadd.f32 0.0, %v2131
        %v2133 = vpop.f32.mrf.mxu0
        %v2134 = vpop.f32.mrf.mxu0
        %2135 = vdwg.mxu0
        %2136 = vmatprep.subr.bf16.mxu0 0
        %2137 = vmatpush1.bf16.msra.mxu0 0
        %2138 = vmatprep.subr.bf16.mxu0 0
        %2139 = vmatpush1.bf16.msra.mxu0 0
        %2140 = vmatprep.subr.bf16.mxu0 0
        %2141 = vmatpush1.bf16.msra.mxu0 0
        %2142 = vmatprep.subr.bf16.mxu0 0
        %2143 = vmatpush1.bf16.msra.mxu0 0
        %2144 = vmatprep.subr.bf16.mxu0 %v1980
        %2145 = vmatpush1.bf16.msra.mxu0 %v1979
        %2146 = vmatprep.subr.bf16.mxu0 %v1972
        %2147 = vmatpush1.bf16.msra.mxu0 %v1971
        %2148 = vmatprep.subr.bf16.mxu0 %v1964
        %2149 = vmatpush1.bf16.msra.mxu0 %v1963
        %2150 = vmatprep.subr.bf16.mxu0 %v1956
        %2151 = vmatpush1.bf16.msra.mxu0 %v1955
        %2152 = vmatprep.subr.bf16.mxu0 0
        %2153 = vmatpush2.bf16.msra.mxu0 0
        %2154 = vmatprep.subr.bf16.mxu0 0
        %2155 = vmatpush2.bf16.msra.mxu0 0
        %2156 = vmatprep.subr.bf16.mxu0 0
        %2157 = vmatpush2.bf16.msra.mxu0 0
        %2158 = vmatprep.subr.bf16.mxu0 0
        %2159 = vmatpush2.bf16.msra.mxu0 0
        %2160 = vmatprep.subr.bf16.mxu0 0
        %2161 = vmatpush2.bf16.msra.mxu0 0
        %2162 = vmatprep.subr.bf16.mxu0 0
        %2163 = vmatpush2.bf16.msra.mxu0 0
        %2164 = vmatprep.subr.bf16.mxu0 0
        %2165 = vmatpush2.bf16.msra.mxu0 0
        %2166 = vmatprep.subr.bf16.mxu0 0
        %2167 = vmatpush2.bf16.msra.mxu0 0
        %2168 = vmatprep.mubr.bf16.mxu0 0
        %2169 = vmatmul.mubr.bf16.gmra.mxu0 %v911
        %v2170 = vpop.f32.mrf.mxu0
        %v2171 = vadd.f32 0.0, %v2170
        %v2172 = vpop.f32.mrf.mxu0
        %v2173 = vadd.f32 0.0, %v2172
        %v2174 = vpop.f32.mrf.mxu0
        %v2175 = vpop.f32.mrf.mxu0
        %2176 = vdwg.mxu0
        %s2177 = scalar_lea.vmem %s5, 512
        %v2178 = vld [vmem:[%s2177] sm:$0xf]
        %v2179 = vld [vmem:[%s2177 + $0x4] sm:$0xf]
        %v2180 = vld [vmem:[%s2177 + $0x8] sm:$0xf]
        %v2181 = vld [vmem:[%s2177 + $0xc] sm:$0xf]
        %v2182 = vld [vmem:[%s2177 + $0x10] sm:$0xf]
        %v2183 = vld [vmem:[%s2177 + $0x14] sm:$0xf]
        %v2184 = vld [vmem:[%s2177 + $0x18] sm:$0xf]
        %v2185 = vld [vmem:[%s2177 + $0x1c] sm:$0xf]
        %v2186 = vld [vmem:[%s2177 + $0x20] sm:$0xf]
        %v2187 = vld [vmem:[%s2177 + $0x24] sm:$0xf]
        %v2188 = vld [vmem:[%s2177 + $0x28] sm:$0xf]
        %v2189 = vld [vmem:[%s2177 + $0x2c] sm:$0xf]
        %v2190 = vld [vmem:[%s2177 + $0x30] sm:$0xf]
        %v2191 = vld [vmem:[%s2177 + $0x34] sm:$0xf]
        %v2192 = vld [vmem:[%s2177 + $0x38] sm:$0xf]
        %v2193 = vld [vmem:[%s2177 + $0x3c] sm:$0xf]
        %v2194 = vld [vmem:[%s2177 + $0x40] sm:$0xf]
        %v2195 = vld [vmem:[%s2177 + $0x44] sm:$0xf]
        %v2196 = vld [vmem:[%s2177 + $0x48] sm:$0xf]
        %v2197 = vld [vmem:[%s2177 + $0x4c] sm:$0xf]
        %v2198 = vld [vmem:[%s2177 + $0x50] sm:$0xf]
        %v2199 = vld [vmem:[%s2177 + $0x54] sm:$0xf]
        %v2200 = vld [vmem:[%s2177 + $0x58] sm:$0xf]
        %v2201 = vld [vmem:[%s2177 + $0x5c] sm:$0xf]
        %v2202 = vld [vmem:[%s2177 + $0x60] sm:$0xf]
        %v2203 = vld [vmem:[%s2177 + $0x64] sm:$0xf]
        %v2204 = vld [vmem:[%s2177 + $0x68] sm:$0xf]
        %v2205 = vld [vmem:[%s2177 + $0x6c] sm:$0xf]
        %v2206 = vld [vmem:[%s2177 + $0x70] sm:$0xf]
        %v2207 = vld [vmem:[%s2177 + $0x74] sm:$0xf]
        %v2208 = vld [vmem:[%s2177 + $0x78] sm:$0xf]
        %v2209 = vld [vmem:[%s2177 + $0x7c] sm:$0xf]
        %v2210 = vld [vmem:[%s2177 + $0x80] sm:$0xf]
        %v2211 = vld [vmem:[%s2177 + $0x84] sm:$0xf]
        %v2212 = vld [vmem:[%s2177 + $0x88] sm:$0xf]
        %v2213 = vld [vmem:[%s2177 + $0x8c] sm:$0xf]
        %v2214 = vld [vmem:[%s2177 + $0x90] sm:$0xf]
        %v2215 = vld [vmem:[%s2177 + $0x94] sm:$0xf]
        %v2216 = vld [vmem:[%s2177 + $0x98] sm:$0xf]
        %v2217 = vld [vmem:[%s2177 + $0x9c] sm:$0xf]
        %v2218 = vld [vmem:[%s2177 + $0xa0] sm:$0xf]
        %v2219 = vld [vmem:[%s2177 + $0xa4] sm:$0xf]
        %v2220 = vld [vmem:[%s2177 + $0xa8] sm:$0xf]
        %v2221 = vld [vmem:[%s2177 + $0xac] sm:$0xf]
        %v2222 = vld [vmem:[%s2177 + $0xb0] sm:$0xf]
        %v2223 = vld [vmem:[%s2177 + $0xb4] sm:$0xf]
        %v2224 = vld [vmem:[%s2177 + $0xb8] sm:$0xf]
        %v2225 = vld [vmem:[%s2177 + $0xbc] sm:$0xf]
        %v2226 = vld [vmem:[%s2177 + $0xc0] sm:$0xf]
        %v2227 = vld [vmem:[%s2177 + $0xc4] sm:$0xf]
        %v2228 = vld [vmem:[%s2177 + $0xc8] sm:$0xf]
        %v2229 = vld [vmem:[%s2177 + $0xcc] sm:$0xf]
        %v2230 = vld [vmem:[%s2177 + $0xd0] sm:$0xf]
        %v2231 = vld [vmem:[%s2177 + $0xd4] sm:$0xf]
        %v2232 = vld [vmem:[%s2177 + $0xd8] sm:$0xf]
        %v2233 = vld [vmem:[%s2177 + $0xdc] sm:$0xf]
        %v2234 = vld [vmem:[%s2177 + $0xe0] sm:$0xf]
        %v2235 = vld [vmem:[%s2177 + $0xe4] sm:$0xf]
        %v2236 = vld [vmem:[%s2177 + $0xe8] sm:$0xf]
        %v2237 = vld [vmem:[%s2177 + $0xec] sm:$0xf]
        %v2238 = vld [vmem:[%s2177 + $0xf0] sm:$0xf]
        %v2239 = vld [vmem:[%s2177 + $0xf4] sm:$0xf]
        %v2240 = vld [vmem:[%s2177 + $0xf8] sm:$0xf]
        %v2241 = vld [vmem:[%s2177 + $0xfc] sm:$0xf]
        %v2242 = vld [vmem:[%s2177 + $0x100] sm:$0xf]
        %v2243 = vld [vmem:[%s2177 + $0x104] sm:$0xf]
        %v2244 = vld [vmem:[%s2177 + $0x108] sm:$0xf]
        %v2245 = vld [vmem:[%s2177 + $0x10c] sm:$0xf]
        %v2246 = vld [vmem:[%s2177 + $0x110] sm:$0xf]
        %v2247 = vld [vmem:[%s2177 + $0x114] sm:$0xf]
        %v2248 = vld [vmem:[%s2177 + $0x118] sm:$0xf]
        %v2249 = vld [vmem:[%s2177 + $0x11c] sm:$0xf]
        %v2250 = vld [vmem:[%s2177 + $0x120] sm:$0xf]
        %v2251 = vld [vmem:[%s2177 + $0x124] sm:$0xf]
        %v2252 = vld [vmem:[%s2177 + $0x128] sm:$0xf]
        %v2253 = vld [vmem:[%s2177 + $0x12c] sm:$0xf]
        %v2254 = vld [vmem:[%s2177 + $0x130] sm:$0xf]
        %v2255 = vld [vmem:[%s2177 + $0x134] sm:$0xf]
        %v2256 = vld [vmem:[%s2177 + $0x138] sm:$0xf]
        %v2257 = vld [vmem:[%s2177 + $0x13c] sm:$0xf]
        %v2258 = vld [vmem:[%s2177 + $0x140] sm:$0xf]
        %v2259 = vld [vmem:[%s2177 + $0x144] sm:$0xf]
        %v2260 = vld [vmem:[%s2177 + $0x148] sm:$0xf]
        %v2261 = vld [vmem:[%s2177 + $0x14c] sm:$0xf]
        %v2262 = vld [vmem:[%s2177 + $0x150] sm:$0xf]
        %v2263 = vld [vmem:[%s2177 + $0x154] sm:$0xf]
        %v2264 = vld [vmem:[%s2177 + $0x158] sm:$0xf]
        %v2265 = vld [vmem:[%s2177 + $0x15c] sm:$0xf]
        %v2266 = vld [vmem:[%s2177 + $0x160] sm:$0xf]
        %v2267 = vld [vmem:[%s2177 + $0x164] sm:$0xf]
        %v2268 = vld [vmem:[%s2177 + $0x168] sm:$0xf]
        %v2269 = vld [vmem:[%s2177 + $0x16c] sm:$0xf]
        %v2270 = vld [vmem:[%s2177 + $0x170] sm:$0xf]
        %v2271 = vld [vmem:[%s2177 + $0x174] sm:$0xf]
        %v2272 = vld [vmem:[%s2177 + $0x178] sm:$0xf]
        %v2273 = vld [vmem:[%s2177 + $0x17c] sm:$0xf]
        %v2274 = vld [vmem:[%s2177 + $0x180] sm:$0xf]
        %v2275 = vld [vmem:[%s2177 + $0x184] sm:$0xf]
        %v2276 = vld [vmem:[%s2177 + $0x188] sm:$0xf]
        %v2277 = vld [vmem:[%s2177 + $0x18c] sm:$0xf]
        %v2278 = vld [vmem:[%s2177 + $0x190] sm:$0xf]
        %v2279 = vld [vmem:[%s2177 + $0x194] sm:$0xf]
        %v2280 = vld [vmem:[%s2177 + $0x198] sm:$0xf]
        %v2281 = vld [vmem:[%s2177 + $0x19c] sm:$0xf]
        %v2282 = vld [vmem:[%s2177 + $0x1a0] sm:$0xf]
        %v2283 = vld [vmem:[%s2177 + $0x1a4] sm:$0xf]
        %v2284 = vld [vmem:[%s2177 + $0x1a8] sm:$0xf]
        %v2285 = vld [vmem:[%s2177 + $0x1ac] sm:$0xf]
        %v2286 = vld [vmem:[%s2177 + $0x1b0] sm:$0xf]
        %v2287 = vld [vmem:[%s2177 + $0x1b4] sm:$0xf]
        %v2288 = vld [vmem:[%s2177 + $0x1b8] sm:$0xf]
        %v2289 = vld [vmem:[%s2177 + $0x1bc] sm:$0xf]
        %v2290 = vld [vmem:[%s2177 + $0x1c0] sm:$0xf]
        %v2291 = vld [vmem:[%s2177 + $0x1c4] sm:$0xf]
        %v2292 = vld [vmem:[%s2177 + $0x1c8] sm:$0xf]
        %v2293 = vld [vmem:[%s2177 + $0x1cc] sm:$0xf]
        %v2294 = vld [vmem:[%s2177 + $0x1d0] sm:$0xf]
        %v2295 = vld [vmem:[%s2177 + $0x1d4] sm:$0xf]
        %v2296 = vld [vmem:[%s2177 + $0x1d8] sm:$0xf]
        %v2297 = vld [vmem:[%s2177 + $0x1dc] sm:$0xf]
        %v2298 = vld [vmem:[%s2177 + $0x1e0] sm:$0xf]
        %v2299 = vld [vmem:[%s2177 + $0x1e4] sm:$0xf]
        %v2300 = vld [vmem:[%s2177 + $0x1e8] sm:$0xf]
        %v2301 = vld [vmem:[%s2177 + $0x1ec] sm:$0xf]
        %v2302 = vld [vmem:[%s2177 + $0x1f0] sm:$0xf]
        %v2303 = vld [vmem:[%s2177 + $0x1f4] sm:$0xf]
        %v2304 = vld [vmem:[%s2177 + $0x1f8] sm:$0xf]
        %v2305 = vld [vmem:[%s2177 + $0x1fc] sm:$0xf]
        %v2306 = vpack.c.bf16 %v2048, %v2048
        %v2307 = vpack.c.bf16 %v2050, %v2050
        %v2308 = vpack.c.bf16 %v2089, %v2089
        %v2309 = vpack.c.bf16 %v2091, %v2091
        %v2310 = vpack.c.bf16 %v2130, %v2130
        %v2311 = vpack.c.bf16 %v2132, %v2132
        %v2312 = vpack.c.bf16 %v2171, %v2171
        %v2313 = vpack.c.bf16 %v2173, %v2173
        %v2442 = vunpack.c.l.b16 %v2178
        %v2443 = vunpack.c.l.b16 %v2179
        %v2444 = vunpack.c.l.b16 %v2180
        %v2445 = vunpack.c.l.b16 %v2181
        %v2446 = vunpack.c.l.b16 %v2182
        %v2447 = vunpack.c.l.b16 %v2183
        %v2448 = vunpack.c.l.b16 %v2184
        %v2449 = vunpack.c.l.b16 %v2185
        %v2450 = vunpack.c.l.b16 %v2186
        %v2451 = vunpack.c.l.b16 %v2187
        %v2452 = vunpack.c.l.b16 %v2188
        %v2453 = vunpack.c.l.b16 %v2189
        %v2454 = vunpack.c.l.b16 %v2190
        %v2455 = vunpack.c.l.b16 %v2191
        %v2456 = vunpack.c.l.b16 %v2192
        %v2457 = vunpack.c.l.b16 %v2193
        %v2458 = vunpack.c.l.b16 %v2194
        %v2459 = vunpack.c.l.b16 %v2195
        %v2460 = vunpack.c.l.b16 %v2196
        %v2461 = vunpack.c.l.b16 %v2197
        %v2462 = vunpack.c.l.b16 %v2198
        %v2463 = vunpack.c.l.b16 %v2199
        %v2464 = vunpack.c.l.b16 %v2200
        %v2465 = vunpack.c.l.b16 %v2201
        %v2466 = vunpack.c.l.b16 %v2202
        %v2467 = vunpack.c.l.b16 %v2203
        %v2468 = vunpack.c.l.b16 %v2204
        %v2469 = vunpack.c.l.b16 %v2205
        %v2470 = vunpack.c.l.b16 %v2206
        %v2471 = vunpack.c.l.b16 %v2207
        %v2472 = vunpack.c.l.b16 %v2208
        %v2473 = vunpack.c.l.b16 %v2209
        %v2474 = vunpack.c.l.b16 %v2210
        %v2475 = vunpack.c.l.b16 %v2211
        %v2476 = vunpack.c.l.b16 %v2212
        %v2477 = vunpack.c.l.b16 %v2213
        %v2478 = vunpack.c.l.b16 %v2214
        %v2479 = vunpack.c.l.b16 %v2215
        %v2480 = vunpack.c.l.b16 %v2216
        %v2481 = vunpack.c.l.b16 %v2217
        %v2482 = vunpack.c.l.b16 %v2218
        %v2483 = vunpack.c.l.b16 %v2219
        %v2484 = vunpack.c.l.b16 %v2220
        %v2485 = vunpack.c.l.b16 %v2221
        %v2486 = vunpack.c.l.b16 %v2222
        %v2487 = vunpack.c.l.b16 %v2223
        %v2488 = vunpack.c.l.b16 %v2224
        %v2489 = vunpack.c.l.b16 %v2225
        %v2490 = vunpack.c.l.b16 %v2226
        %v2491 = vunpack.c.l.b16 %v2227
        %v2492 = vunpack.c.l.b16 %v2228
        %v2493 = vunpack.c.l.b16 %v2229
        %v2494 = vunpack.c.l.b16 %v2230
        %v2495 = vunpack.c.l.b16 %v2231
        %v2496 = vunpack.c.l.b16 %v2232
        %v2497 = vunpack.c.l.b16 %v2233
        %v2498 = vunpack.c.l.b16 %v2234
        %v2499 = vunpack.c.l.b16 %v2235
        %v2500 = vunpack.c.l.b16 %v2236
        %v2501 = vunpack.c.l.b16 %v2237
        %v2502 = vunpack.c.l.b16 %v2238
        %v2503 = vunpack.c.l.b16 %v2239
        %v2504 = vunpack.c.l.b16 %v2240
        %v2505 = vunpack.c.l.b16 %v2241
        %v2506 = vunpack.c.l.b16 %v2242
        %v2507 = vunpack.c.l.b16 %v2243
        %v2508 = vunpack.c.l.b16 %v2244
        %v2509 = vunpack.c.l.b16 %v2245
        %v2510 = vunpack.c.l.b16 %v2246
        %v2511 = vunpack.c.l.b16 %v2247
        %v2512 = vunpack.c.l.b16 %v2248
        %v2513 = vunpack.c.l.b16 %v2249
        %v2514 = vunpack.c.l.b16 %v2250
        %v2515 = vunpack.c.l.b16 %v2251
        %v2516 = vunpack.c.l.b16 %v2252
        %v2517 = vunpack.c.l.b16 %v2253
        %v2518 = vunpack.c.l.b16 %v2254
        %v2519 = vunpack.c.l.b16 %v2255
        %v2520 = vunpack.c.l.b16 %v2256
        %v2521 = vunpack.c.l.b16 %v2257
        %v2522 = vunpack.c.l.b16 %v2258
        %v2523 = vunpack.c.l.b16 %v2259
        %v2524 = vunpack.c.l.b16 %v2260
        %v2525 = vunpack.c.l.b16 %v2261
        %v2526 = vunpack.c.l.b16 %v2262
        %v2527 = vunpack.c.l.b16 %v2263
        %v2528 = vunpack.c.l.b16 %v2264
        %v2529 = vunpack.c.l.b16 %v2265
        %v2530 = vunpack.c.l.b16 %v2266
        %v2531 = vunpack.c.l.b16 %v2267
        %v2532 = vunpack.c.l.b16 %v2268
        %v2533 = vunpack.c.l.b16 %v2269
        %v2534 = vunpack.c.l.b16 %v2270
        %v2535 = vunpack.c.l.b16 %v2271
        %v2536 = vunpack.c.l.b16 %v2272
        %v2537 = vunpack.c.l.b16 %v2273
        %v2538 = vunpack.c.l.b16 %v2274
        %v2539 = vunpack.c.l.b16 %v2275
        %v2540 = vunpack.c.l.b16 %v2276
        %v2541 = vunpack.c.l.b16 %v2277
        %v2542 = vunpack.c.l.b16 %v2278
        %v2543 = vunpack.c.l.b16 %v2279
        %v2544 = vunpack.c.l.b16 %v2280
        %v2545 = vunpack.c.l.b16 %v2281
        %v2546 = vunpack.c.l.b16 %v2282
        %v2547 = vunpack.c.l.b16 %v2283
        %v2548 = vunpack.c.l.b16 %v2284
        %v2549 = vunpack.c.l.b16 %v2285
        %v2550 = vunpack.c.l.b16 %v2286
        %v2551 = vunpack.c.l.b16 %v2287
        %v2552 = vunpack.c.l.b16 %v2288
        %v2553 = vunpack.c.l.b16 %v2289
        %v2554 = vunpack.c.l.b16 %v2290
        %v2555 = vunpack.c.l.b16 %v2291
        %v2556 = vunpack.c.l.b16 %v2292
        %v2557 = vunpack.c.l.b16 %v2293
        %v2558 = vunpack.c.l.b16 %v2294
        %v2559 = vunpack.c.l.b16 %v2295
        %v2560 = vunpack.c.l.b16 %v2296
        %v2561 = vunpack.c.l.b16 %v2297
        %v2562 = vunpack.c.l.b16 %v2298
        %v2563 = vunpack.c.l.b16 %v2299
        %v2564 = vunpack.c.l.b16 %v2300
        %v2565 = vunpack.c.l.b16 %v2301
        %v2566 = vunpack.c.l.b16 %v2302
        %v2567 = vunpack.c.l.b16 %v2303
        %v2568 = vunpack.c.l.b16 %v2304
        %v2569 = vunpack.c.l.b16 %v2305
        %v2570 = vpack.c.b16 %v2443, %v2442
        %v2571 = vpack.c.b16 %v2445, %v2444
        %v2572 = vpack.c.b16 %v2447, %v2446
        %v2573 = vpack.c.b16 %v2449, %v2448
        %v2574 = vpack.c.b16 %v2451, %v2450
        %v2575 = vpack.c.b16 %v2453, %v2452
        %v2576 = vpack.c.b16 %v2455, %v2454
        %v2577 = vpack.c.b16 %v2457, %v2456
        %v2578 = vpack.c.b16 %v2459, %v2458
        %v2579 = vpack.c.b16 %v2461, %v2460
        %v2580 = vpack.c.b16 %v2463, %v2462
        %v2581 = vpack.c.b16 %v2465, %v2464
        %v2582 = vpack.c.b16 %v2467, %v2466
        %v2583 = vpack.c.b16 %v2469, %v2468
        %v2584 = vpack.c.b16 %v2471, %v2470
        %v2585 = vpack.c.b16 %v2473, %v2472
        %v2586 = vpack.c.b16 %v2475, %v2474
        %v2587 = vpack.c.b16 %v2477, %v2476
        %v2588 = vpack.c.b16 %v2479, %v2478
        %v2589 = vpack.c.b16 %v2481, %v2480
        %v2590 = vpack.c.b16 %v2483, %v2482
        %v2591 = vpack.c.b16 %v2485, %v2484
        %v2592 = vpack.c.b16 %v2487, %v2486
        %v2593 = vpack.c.b16 %v2489, %v2488
        %v2594 = vpack.c.b16 %v2491, %v2490
        %v2595 = vpack.c.b16 %v2493, %v2492
        %v2596 = vpack.c.b16 %v2495, %v2494
        %v2597 = vpack.c.b16 %v2497, %v2496
        %v2598 = vpack.c.b16 %v2499, %v2498
        %v2599 = vpack.c.b16 %v2501, %v2500
        %v2600 = vpack.c.b16 %v2503, %v2502
        %v2601 = vpack.c.b16 %v2505, %v2504
        %v2602 = vpack.c.b16 %v2507, %v2506
        %v2603 = vpack.c.b16 %v2509, %v2508
        %v2604 = vpack.c.b16 %v2511, %v2510
        %v2605 = vpack.c.b16 %v2513, %v2512
        %v2606 = vpack.c.b16 %v2515, %v2514
        %v2607 = vpack.c.b16 %v2517, %v2516
        %v2608 = vpack.c.b16 %v2519, %v2518
        %v2609 = vpack.c.b16 %v2521, %v2520
        %v2610 = vpack.c.b16 %v2523, %v2522
        %v2611 = vpack.c.b16 %v2525, %v2524
        %v2612 = vpack.c.b16 %v2527, %v2526
        %v2613 = vpack.c.b16 %v2529, %v2528
        %v2614 = vpack.c.b16 %v2531, %v2530
        %v2615 = vpack.c.b16 %v2533, %v2532
        %v2616 = vpack.c.b16 %v2535, %v2534
        %v2617 = vpack.c.b16 %v2537, %v2536
        %v2618 = vpack.c.b16 %v2539, %v2538
        %v2619 = vpack.c.b16 %v2541, %v2540
        %v2620 = vpack.c.b16 %v2543, %v2542
        %v2621 = vpack.c.b16 %v2545, %v2544
        %v2622 = vpack.c.b16 %v2547, %v2546
        %v2623 = vpack.c.b16 %v2549, %v2548
        %v2624 = vpack.c.b16 %v2551, %v2550
        %v2625 = vpack.c.b16 %v2553, %v2552
        %v2626 = vpack.c.b16 %v2555, %v2554
        %v2627 = vpack.c.b16 %v2557, %v2556
        %v2628 = vpack.c.b16 %v2559, %v2558
        %v2629 = vpack.c.b16 %v2561, %v2560
        %v2630 = vpack.c.b16 %v2563, %v2562
        %v2631 = vpack.c.b16 %v2565, %v2564
        %v2632 = vpack.c.b16 %v2567, %v2566
        %v2633 = vpack.c.b16 %v2569, %v2568
        %2698 = vmatprep.subr.bf16.mxu0 0
        %2699 = vmatpush1.bf16.msra.mxu0 %v2577
        %2700 = vmatprep.subr.bf16.mxu0 0
        %2701 = vmatpush1.bf16.msra.mxu0 %v2576
        %2702 = vmatprep.subr.bf16.mxu0 0
        %2703 = vmatpush1.bf16.msra.mxu0 %v2575
        %2704 = vmatprep.subr.bf16.mxu0 0
        %2705 = vmatpush1.bf16.msra.mxu0 %v2574
        %2706 = vmatprep.subr.bf16.mxu0 0
        %2707 = vmatpush1.bf16.msra.mxu0 %v2573
        %2708 = vmatprep.subr.bf16.mxu0 0
        %2709 = vmatpush1.bf16.msra.mxu0 %v2572
        %2710 = vmatprep.subr.bf16.mxu0 0
        %2711 = vmatpush1.bf16.msra.mxu0 %v2571
        %2712 = vmatprep.subr.bf16.mxu0 0
        %2713 = vmatpush1.bf16.msra.mxu0 %v2570
        %2714 = vmatprep.subr.bf16.mxu0 0
        %2715 = vmatpush2.bf16.msra.mxu0 %v2585
        %2716 = vmatprep.subr.bf16.mxu0 0
        %2717 = vmatpush2.bf16.msra.mxu0 %v2584
        %2718 = vmatprep.subr.bf16.mxu0 0
        %2719 = vmatpush2.bf16.msra.mxu0 %v2583
        %2720 = vmatprep.subr.bf16.mxu0 0
        %2721 = vmatpush2.bf16.msra.mxu0 %v2582
        %2722 = vmatprep.subr.bf16.mxu0 0
        %2723 = vmatpush2.bf16.msra.mxu0 %v2581
        %2724 = vmatprep.subr.bf16.mxu0 0
        %2725 = vmatpush2.bf16.msra.mxu0 %v2580
        %2726 = vmatprep.subr.bf16.mxu0 0
        %2727 = vmatpush2.bf16.msra.mxu0 %v2579
        %2728 = vmatprep.subr.bf16.mxu0 0
        %2729 = vmatpush2.bf16.msra.mxu0 %v2578
        %2730 = vmatprep.mubr.bf16.mxu0 %v2307
        %2731 = vmatmul.mubr.bf16.gmra.mxu0 %v2306
        %v2732 = vpop.f32.mrf.mxu0
        %v2733 = vadd.f32 0.0, %v2732
        %v2734 = vpop.f32.mrf.mxu0
        %v2735 = vpop.f32.mrf.mxu0
        %v2736 = vpop.f32.mrf.mxu0
        %2737 = vdwg.mxu0
        %2738 = vmatprep.subr.bf16.mxu0 0
        %2739 = vmatpush1.bf16.msra.mxu0 %v2593
        %2740 = vmatprep.subr.bf16.mxu0 0
        %2741 = vmatpush1.bf16.msra.mxu0 %v2592
        %2742 = vmatprep.subr.bf16.mxu0 0
        %2743 = vmatpush1.bf16.msra.mxu0 %v2591
        %2744 = vmatprep.subr.bf16.mxu0 0
        %2745 = vmatpush1.bf16.msra.mxu0 %v2590
        %2746 = vmatprep.subr.bf16.mxu0 0
        %2747 = vmatpush1.bf16.msra.mxu0 %v2589
        %2748 = vmatprep.subr.bf16.mxu0 0
        %2749 = vmatpush1.bf16.msra.mxu0 %v2588
        %2750 = vmatprep.subr.bf16.mxu0 0
        %2751 = vmatpush1.bf16.msra.mxu0 %v2587
        %2752 = vmatprep.subr.bf16.mxu0 0
        %2753 = vmatpush1.bf16.msra.mxu0 %v2586
        %2754 = vmatprep.subr.bf16.mxu0 0
        %2755 = vmatpush2.bf16.msra.mxu0 %v2601
        %2756 = vmatprep.subr.bf16.mxu0 0
        %2757 = vmatpush2.bf16.msra.mxu0 %v2600
        %2758 = vmatprep.subr.bf16.mxu0 0
        %2759 = vmatpush2.bf16.msra.mxu0 %v2599
        %2760 = vmatprep.subr.bf16.mxu0 0
        %2761 = vmatpush2.bf16.msra.mxu0 %v2598
        %2762 = vmatprep.subr.bf16.mxu0 0
        %2763 = vmatpush2.bf16.msra.mxu0 %v2597
        %2764 = vmatprep.subr.bf16.mxu0 0
        %2765 = vmatpush2.bf16.msra.mxu0 %v2596
        %2766 = vmatprep.subr.bf16.mxu0 0
        %2767 = vmatpush2.bf16.msra.mxu0 %v2595
        %2768 = vmatprep.subr.bf16.mxu0 0
        %2769 = vmatpush2.bf16.msra.mxu0 %v2594
        %2770 = vmatprep.mubr.bf16.mxu0 %v2309
        %2771 = vmatmul.mubr.bf16.gmra.mxu0 %v2308
        %v2772 = vpop.f32.mrf.mxu0
        %v2773 = vadd.f32 %v2733, %v2772
        %v2774 = vpop.f32.mrf.mxu0
        %v2775 = vpop.f32.mrf.mxu0
        %v2776 = vpop.f32.mrf.mxu0
        %2777 = vdwg.mxu0
        %2778 = vmatprep.subr.bf16.mxu0 0
        %2779 = vmatpush1.bf16.msra.mxu0 %v2609
        %2780 = vmatprep.subr.bf16.mxu0 0
        %2781 = vmatpush1.bf16.msra.mxu0 %v2608
        %2782 = vmatprep.subr.bf16.mxu0 0
        %2783 = vmatpush1.bf16.msra.mxu0 %v2607
        %2784 = vmatprep.subr.bf16.mxu0 0
        %2785 = vmatpush1.bf16.msra.mxu0 %v2606
        %2786 = vmatprep.subr.bf16.mxu0 0
        %2787 = vmatpush1.bf16.msra.mxu0 %v2605
        %2788 = vmatprep.subr.bf16.mxu0 0
        %2789 = vmatpush1.bf16.msra.mxu0 %v2604
        %2790 = vmatprep.subr.bf16.mxu0 0
        %2791 = vmatpush1.bf16.msra.mxu0 %v2603
        %2792 = vmatprep.subr.bf16.mxu0 0
        %2793 = vmatpush1.bf16.msra.mxu0 %v2602
        %2794 = vmatprep.subr.bf16.mxu0 0
        %2795 = vmatpush2.bf16.msra.mxu0 %v2617
        %2796 = vmatprep.subr.bf16.mxu0 0
        %2797 = vmatpush2.bf16.msra.mxu0 %v2616
        %2798 = vmatprep.subr.bf16.mxu0 0
        %2799 = vmatpush2.bf16.msra.mxu0 %v2615
        %2800 = vmatprep.subr.bf16.mxu0 0
        %2801 = vmatpush2.bf16.msra.mxu0 %v2614
        %2802 = vmatprep.subr.bf16.mxu0 0
        %2803 = vmatpush2.bf16.msra.mxu0 %v2613
        %2804 = vmatprep.subr.bf16.mxu0 0
        %2805 = vmatpush2.bf16.msra.mxu0 %v2612
        %2806 = vmatprep.subr.bf16.mxu0 0
        %2807 = vmatpush2.bf16.msra.mxu0 %v2611
        %2808 = vmatprep.subr.bf16.mxu0 0
        %2809 = vmatpush2.bf16.msra.mxu0 %v2610
        %2810 = vmatprep.mubr.bf16.mxu0 %v2311
        %2811 = vmatmul.mubr.bf16.gmra.mxu0 %v2310
        %v2812 = vpop.f32.mrf.mxu0
        %v2813 = vadd.f32 %v2773, %v2812
        %v2814 = vpop.f32.mrf.mxu0
        %v2815 = vpop.f32.mrf.mxu0
        %v2816 = vpop.f32.mrf.mxu0
        %2817 = vdwg.mxu0
        %2818 = vmatprep.subr.bf16.mxu0 0
        %2819 = vmatpush1.bf16.msra.mxu0 %v2625
        %2820 = vmatprep.subr.bf16.mxu0 0
        %2821 = vmatpush1.bf16.msra.mxu0 %v2624
        %2822 = vmatprep.subr.bf16.mxu0 0
        %2823 = vmatpush1.bf16.msra.mxu0 %v2623
        %2824 = vmatprep.subr.bf16.mxu0 0
        %2825 = vmatpush1.bf16.msra.mxu0 %v2622
        %2826 = vmatprep.subr.bf16.mxu0 0
        %2827 = vmatpush1.bf16.msra.mxu0 %v2621
        %2828 = vmatprep.subr.bf16.mxu0 0
        %2829 = vmatpush1.bf16.msra.mxu0 %v2620
        %2830 = vmatprep.subr.bf16.mxu0 0
        %2831 = vmatpush1.bf16.msra.mxu0 %v2619
        %2832 = vmatprep.subr.bf16.mxu0 0
        %2833 = vmatpush1.bf16.msra.mxu0 %v2618
        %2834 = vmatprep.subr.bf16.mxu0 0
        %2835 = vmatpush2.bf16.msra.mxu0 %v2633
        %2836 = vmatprep.subr.bf16.mxu0 0
        %2837 = vmatpush2.bf16.msra.mxu0 %v2632
        %2838 = vmatprep.subr.bf16.mxu0 0
        %2839 = vmatpush2.bf16.msra.mxu0 %v2631
        %2840 = vmatprep.subr.bf16.mxu0 0
        %2841 = vmatpush2.bf16.msra.mxu0 %v2630
        %2842 = vmatprep.subr.bf16.mxu0 0
        %2843 = vmatpush2.bf16.msra.mxu0 %v2629
        %2844 = vmatprep.subr.bf16.mxu0 0
        %2845 = vmatpush2.bf16.msra.mxu0 %v2628
        %2846 = vmatprep.subr.bf16.mxu0 0
        %2847 = vmatpush2.bf16.msra.mxu0 %v2627
        %2848 = vmatprep.subr.bf16.mxu0 0
        %2849 = vmatpush2.bf16.msra.mxu0 %v2626
        %2850 = vmatprep.mubr.bf16.mxu0 %v2313
        %2851 = vmatmul.mubr.bf16.gmra.mxu0 %v2312
        %v2852 = vpop.f32.mrf.mxu0
        %v2853 = vadd.f32 %v2813, %v2852
        %v2854 = vpop.f32.mrf.mxu0
        %v2855 = vpop.f32.mrf.mxu0
        %v2856 = vpop.f32.mrf.mxu0
        %2857 = vdwg.mxu0
        %2859 = vrot.lane.b32.xlu0 %v2853, 127
        %v2860 = vpop.permute.xlu0 %2859
        %2862 = vxpose.xlu0.b32.start [1/16] %v2860, 128
        %2863 = vxpose.xlu0.b32.cont [2/16] 0.0, 128
        %2864 = vxpose.xlu0.b32.cont [3/16] 0.0, 128
        %2865 = vxpose.xlu0.b32.cont [4/16] 0.0, 128
        %2866 = vxpose.xlu0.b32.cont [5/16] 0.0, 128
        %2867 = vxpose.xlu0.b32.cont [6/16] 0.0, 128
        %2868 = vxpose.xlu0.b32.cont [7/16] 0.0, 128
        %2869 = vxpose.xlu0.b32.cont [8/16] 0.0, 128
        %2870 = vxpose.xlu0.b32.cont [9/16] 0.0, 128
        %2871 = vxpose.xlu0.b32.cont [10/16] 0.0, 128
        %2872 = vxpose.xlu0.b32.cont [11/16] 0.0, 128
        %2873 = vxpose.xlu0.b32.cont [12/16] 0.0, 128
        %2874 = vxpose.xlu0.b32.cont [13/16] 0.0, 128
        %2875 = vxpose.xlu0.b32.cont [14/16] 0.0, 128
        %2876 = vxpose.xlu0.b32.cont [15/16] 0.0, 128
        %2877 = vxpose.xlu0.b32.end [16/16] 0.0, 128
        %v2878 = vpop.trf.xlu0
        %v2879 = vpop.trf.xlu0
        %v2880 = vpop.trf.xlu0
        %v2881 = vpop.trf.xlu0
        %v2882 = vpop.trf.xlu0
        %v2883 = vpop.trf.xlu0
        %v2884 = vpop.trf.xlu0
        %v2885 = vpop.trf.xlu0
        %v2886 = vpop.trf.xlu0
        %v2887 = vpop.trf.xlu0
        %v2888 = vpop.trf.xlu0
        %v2889 = vpop.trf.xlu0
        %v2890 = vpop.trf.xlu0
        %v2891 = vpop.trf.xlu0
        %v2892 = vpop.trf.xlu0
        %v2893 = vpop.trf.xlu0
        %2894 = vset.pattern.permute.xlu0 0
        %2895 = vperm.xlu0 %2894, %v2853
        %v2896 = vpop.permute.xlu0 %2895
        %v2898 = vlaneseq
        %v2899 = vshrl.u32 %v2898, 7
        %v2900 = vsub.s32 0, %v2899
        %v2901 = vrot.slane %v2878, %v2900
        %v2902 = vadd.f32 %v2896, %v2901
        %vm2903 = vcmp.gt.f32.partialorder %v2902, 0.0
        %v2904 = vmul.f32 %v2902, 0.2
        %v2905 = vsel %vm2903, %v2902, %v2904
        %v2906 = vsel %vm267, %v2905, -1e+30
        %v2907 = vsel %vm431, %v2906, -inf
        %2908 = vmax.xlane.f32.xlu0 %v2907
        %v2909 = vpop.xlane.xlu0 %2908
        %v2910 = vsub.f32 %v2906, %v2909
        %v2911 = vmul.f32 %v2910, 1.442695
        %v2912 = vpow.pop %v2911
        %v2913 = vsel %vm267, %v2912, 0.0
        %v2914 = vsel %vm431, %v2913, 0.0
        %2915 = vadd.xlane.f32.xlu0 %v2914
        %v2916 = vpop.xlane.xlu0 %2915
        %v2917 = vadd.f32 %v2916, 1e-09
        %v2918 = vrcp.pop %v2917
        %v2919 = vmul.f32 %v2913, %v2918
        %v2920 = vpack.c.bf16 %v2919, %v2919
        %v2922 = vsel %vm431, %v2920, 0
        %v2925 = vsel %vm449, %v2306, 0
        %v2928 = vsel %vm449, %v2307, 0
        %v2931 = vsel %vm449, %v2308, 0
        %v2934 = vsel %vm449, %v2309, 0
        %v2937 = vsel %vm449, %v2310, 0
        %v2940 = vsel %vm449, %v2311, 0
        %v2943 = vsel %vm449, %v2312, 0
        %v2946 = vsel %vm449, %v2313, 0
        %2948 = vmatprep.subr.bf16.mxu0 0
        %2949 = vmatpush1.bf16.msra.mxu0 0
        %2950 = vmatprep.subr.bf16.mxu0 0
        %2951 = vmatpush1.bf16.msra.mxu0 0
        %2952 = vmatprep.subr.bf16.mxu0 0
        %2953 = vmatpush1.bf16.msra.mxu0 0
        %2954 = vmatprep.subr.bf16.mxu0 0
        %2955 = vmatpush1.bf16.msra.mxu0 0
        %2956 = vmatprep.subr.bf16.mxu0 0
        %2957 = vmatpush1.bf16.msra.mxu0 0
        %2958 = vmatprep.subr.bf16.mxu0 0
        %2959 = vmatpush1.bf16.msra.mxu0 0
        %2960 = vmatprep.subr.bf16.mxu0 0
        %2961 = vmatpush1.bf16.msra.mxu0 0
        %2962 = vmatprep.subr.bf16.mxu0 %v2928
        %2963 = vmatpush1.bf16.msra.mxu0 %v2925
        %2964 = vmatprep.subr.bf16.mxu0 0
        %2965 = vmatpush2.bf16.msra.mxu0 0
        %2966 = vmatprep.subr.bf16.mxu0 0
        %2967 = vmatpush2.bf16.msra.mxu0 0
        %2968 = vmatprep.subr.bf16.mxu0 0
        %2969 = vmatpush2.bf16.msra.mxu0 0
        %2970 = vmatprep.subr.bf16.mxu0 0
        %2971 = vmatpush2.bf16.msra.mxu0 0
        %2972 = vmatprep.subr.bf16.mxu0 0
        %2973 = vmatpush2.bf16.msra.mxu0 0
        %2974 = vmatprep.subr.bf16.mxu0 0
        %2975 = vmatpush2.bf16.msra.mxu0 0
        %2976 = vmatprep.subr.bf16.mxu0 0
        %2977 = vmatpush2.bf16.msra.mxu0 0
        %2978 = vmatprep.subr.bf16.mxu0 0
        %2979 = vmatpush2.bf16.msra.mxu0 0
        %2980 = vmatprep.mubr.bf16.mxu0 0
        %2981 = vmatmul.mubr.bf16.gmra.mxu0 %v2922
        %v2982 = vpop.f32.mrf.mxu0
        %v2983 = vadd.f32 0.0, %v2982
        %v2984 = vpop.f32.mrf.mxu0
        %v2985 = vadd.f32 0.0, %v2984
        %v2986 = vpop.f32.mrf.mxu0
        %v2987 = vpop.f32.mrf.mxu0
        %2988 = vdwg.mxu0
        %2989 = vmatprep.subr.bf16.mxu0 0
        %2990 = vmatpush1.bf16.msra.mxu0 0
        %2991 = vmatprep.subr.bf16.mxu0 0
        %2992 = vmatpush1.bf16.msra.mxu0 0
        %2993 = vmatprep.subr.bf16.mxu0 0
        %2994 = vmatpush1.bf16.msra.mxu0 0
        %2995 = vmatprep.subr.bf16.mxu0 0
        %2996 = vmatpush1.bf16.msra.mxu0 0
        %2997 = vmatprep.subr.bf16.mxu0 0
        %2998 = vmatpush1.bf16.msra.mxu0 0
        %2999 = vmatprep.subr.bf16.mxu0 0
        %3000 = vmatpush1.bf16.msra.mxu0 0
        %3001 = vmatprep.subr.bf16.mxu0 0
        %3002 = vmatpush1.bf16.msra.mxu0 0
        %3003 = vmatprep.subr.bf16.mxu0 %v2934
        %3004 = vmatpush1.bf16.msra.mxu0 %v2931
        %3005 = vmatprep.subr.bf16.mxu0 0
        %3006 = vmatpush2.bf16.msra.mxu0 0
        %3007 = vmatprep.subr.bf16.mxu0 0
        %3008 = vmatpush2.bf16.msra.mxu0 0
        %3009 = vmatprep.subr.bf16.mxu0 0
        %3010 = vmatpush2.bf16.msra.mxu0 0
        %3011 = vmatprep.subr.bf16.mxu0 0
        %3012 = vmatpush2.bf16.msra.mxu0 0
        %3013 = vmatprep.subr.bf16.mxu0 0
        %3014 = vmatpush2.bf16.msra.mxu0 0
        %3015 = vmatprep.subr.bf16.mxu0 0
        %3016 = vmatpush2.bf16.msra.mxu0 0
        %3017 = vmatprep.subr.bf16.mxu0 0
        %3018 = vmatpush2.bf16.msra.mxu0 0
        %3019 = vmatprep.subr.bf16.mxu0 0
        %3020 = vmatpush2.bf16.msra.mxu0 0
        %3021 = vmatprep.mubr.bf16.mxu0 0
        %3022 = vmatmul.mubr.bf16.gmra.mxu0 %v2922
        %v3023 = vpop.f32.mrf.mxu0
        %v3024 = vadd.f32 0.0, %v3023
        %v3025 = vpop.f32.mrf.mxu0
        %v3026 = vadd.f32 0.0, %v3025
        %v3027 = vpop.f32.mrf.mxu0
        %v3028 = vpop.f32.mrf.mxu0
        %3029 = vdwg.mxu0
        %3030 = vmatprep.subr.bf16.mxu0 0
        %3031 = vmatpush1.bf16.msra.mxu0 0
        %3032 = vmatprep.subr.bf16.mxu0 0
        %3033 = vmatpush1.bf16.msra.mxu0 0
        %3034 = vmatprep.subr.bf16.mxu0 0
        %3035 = vmatpush1.bf16.msra.mxu0 0
        %3036 = vmatprep.subr.bf16.mxu0 0
        %3037 = vmatpush1.bf16.msra.mxu0 0
        %3038 = vmatprep.subr.bf16.mxu0 0
        %3039 = vmatpush1.bf16.msra.mxu0 0
        %3040 = vmatprep.subr.bf16.mxu0 0
        %3041 = vmatpush1.bf16.msra.mxu0 0
        %3042 = vmatprep.subr.bf16.mxu0 0
        %3043 = vmatpush1.bf16.msra.mxu0 0
        %3044 = vmatprep.subr.bf16.mxu0 %v2940
        %3045 = vmatpush1.bf16.msra.mxu0 %v2937
        %3046 = vmatprep.subr.bf16.mxu0 0
        %3047 = vmatpush2.bf16.msra.mxu0 0
        %3048 = vmatprep.subr.bf16.mxu0 0
        %3049 = vmatpush2.bf16.msra.mxu0 0
        %3050 = vmatprep.subr.bf16.mxu0 0
        %3051 = vmatpush2.bf16.msra.mxu0 0
        %3052 = vmatprep.subr.bf16.mxu0 0
        %3053 = vmatpush2.bf16.msra.mxu0 0
        %3054 = vmatprep.subr.bf16.mxu0 0
        %3055 = vmatpush2.bf16.msra.mxu0 0
        %3056 = vmatprep.subr.bf16.mxu0 0
        %3057 = vmatpush2.bf16.msra.mxu0 0
        %3058 = vmatprep.subr.bf16.mxu0 0
        %3059 = vmatpush2.bf16.msra.mxu0 0
        %3060 = vmatprep.subr.bf16.mxu0 0
        %3061 = vmatpush2.bf16.msra.mxu0 0
        %3062 = vmatprep.mubr.bf16.mxu0 0
        %3063 = vmatmul.mubr.bf16.gmra.mxu0 %v2922
        %v3064 = vpop.f32.mrf.mxu0
        %v3065 = vadd.f32 0.0, %v3064
        %v3066 = vpop.f32.mrf.mxu0
        %v3067 = vadd.f32 0.0, %v3066
        %v3068 = vpop.f32.mrf.mxu0
        %v3069 = vpop.f32.mrf.mxu0
        %3070 = vdwg.mxu0
        %3071 = vmatprep.subr.bf16.mxu0 0
        %3072 = vmatpush1.bf16.msra.mxu0 0
        %3073 = vmatprep.subr.bf16.mxu0 0
        %3074 = vmatpush1.bf16.msra.mxu0 0
        %3075 = vmatprep.subr.bf16.mxu0 0
        %3076 = vmatpush1.bf16.msra.mxu0 0
        %3077 = vmatprep.subr.bf16.mxu0 0
        %3078 = vmatpush1.bf16.msra.mxu0 0
        %3079 = vmatprep.subr.bf16.mxu0 0
        %3080 = vmatpush1.bf16.msra.mxu0 0
        %3081 = vmatprep.subr.bf16.mxu0 0
        %3082 = vmatpush1.bf16.msra.mxu0 0
        %3083 = vmatprep.subr.bf16.mxu0 0
        %3084 = vmatpush1.bf16.msra.mxu0 0
        %3085 = vmatprep.subr.bf16.mxu0 %v2946
        %3086 = vmatpush1.bf16.msra.mxu0 %v2943
        %3087 = vmatprep.subr.bf16.mxu0 0
        %3088 = vmatpush2.bf16.msra.mxu0 0
        %3089 = vmatprep.subr.bf16.mxu0 0
        %3090 = vmatpush2.bf16.msra.mxu0 0
        %3091 = vmatprep.subr.bf16.mxu0 0
        %3092 = vmatpush2.bf16.msra.mxu0 0
        %3093 = vmatprep.subr.bf16.mxu0 0
        %3094 = vmatpush2.bf16.msra.mxu0 0
        %3095 = vmatprep.subr.bf16.mxu0 0
        %3096 = vmatpush2.bf16.msra.mxu0 0
        %3097 = vmatprep.subr.bf16.mxu0 0
        %3098 = vmatpush2.bf16.msra.mxu0 0
        %3099 = vmatprep.subr.bf16.mxu0 0
        %3100 = vmatpush2.bf16.msra.mxu0 0
        %3101 = vmatprep.subr.bf16.mxu0 0
        %3102 = vmatpush2.bf16.msra.mxu0 0
        %3103 = vmatprep.mubr.bf16.mxu0 0
        %3104 = vmatmul.mubr.bf16.gmra.mxu0 %v2922
        %v3105 = vpop.f32.mrf.mxu0
        %v3106 = vadd.f32 0.0, %v3105
        %v3107 = vpop.f32.mrf.mxu0
        %v3108 = vadd.f32 0.0, %v3107
        %v3109 = vpop.f32.mrf.mxu0
        %v3110 = vpop.f32.mrf.mxu0
        %3111 = vdwg.mxu0
        %v3113 = vsel %vm431, %v1819, 0
        %v3116 = vsel %vm449, %v1205, 0
        %v3119 = vsel %vm449, %v1206, 0
        %v3122 = vsel %vm449, %v1207, 0
        %v3125 = vsel %vm449, %v1208, 0
        %v3128 = vsel %vm449, %v1209, 0
        %v3131 = vsel %vm449, %v1210, 0
        %v3134 = vsel %vm449, %v1211, 0
        %v3137 = vsel %vm449, %v1212, 0
        %3139 = vmatprep.subr.bf16.mxu0 0
        %3140 = vmatpush1.bf16.msra.mxu0 0
        %3141 = vmatprep.subr.bf16.mxu0 0
        %3142 = vmatpush1.bf16.msra.mxu0 0
        %3143 = vmatprep.subr.bf16.mxu0 0
        %3144 = vmatpush1.bf16.msra.mxu0 0
        %3145 = vmatprep.subr.bf16.mxu0 0
        %3146 = vmatpush1.bf16.msra.mxu0 0
        %3147 = vmatprep.subr.bf16.mxu0 0
        %3148 = vmatpush1.bf16.msra.mxu0 0
        %3149 = vmatprep.subr.bf16.mxu0 0
        %3150 = vmatpush1.bf16.msra.mxu0 0
        %3151 = vmatprep.subr.bf16.mxu0 0
        %3152 = vmatpush1.bf16.msra.mxu0 0
        %3153 = vmatprep.subr.bf16.mxu0 %v3119
        %3154 = vmatpush1.bf16.msra.mxu0 %v3116
        %3155 = vmatprep.subr.bf16.mxu0 0
        %3156 = vmatpush2.bf16.msra.mxu0 0
        %3157 = vmatprep.subr.bf16.mxu0 0
        %3158 = vmatpush2.bf16.msra.mxu0 0
        %3159 = vmatprep.subr.bf16.mxu0 0
        %3160 = vmatpush2.bf16.msra.mxu0 0
        %3161 = vmatprep.subr.bf16.mxu0 0
        %3162 = vmatpush2.bf16.msra.mxu0 0
        %3163 = vmatprep.subr.bf16.mxu0 0
        %3164 = vmatpush2.bf16.msra.mxu0 0
        %3165 = vmatprep.subr.bf16.mxu0 0
        %3166 = vmatpush2.bf16.msra.mxu0 0
        %3167 = vmatprep.subr.bf16.mxu0 0
        %3168 = vmatpush2.bf16.msra.mxu0 0
        %3169 = vmatprep.subr.bf16.mxu0 0
        %3170 = vmatpush2.bf16.msra.mxu0 0
        %3171 = vmatprep.mubr.bf16.mxu0 0
        %3172 = vmatmul.mubr.bf16.gmra.mxu0 %v3113
        %v3173 = vpop.f32.mrf.mxu0
        %v3174 = vadd.f32 %v2983, %v3173
        %v3175 = vpop.f32.mrf.mxu0
        %v3176 = vadd.f32 %v2985, %v3175
        %v3177 = vpop.f32.mrf.mxu0
        %v3178 = vpop.f32.mrf.mxu0
        %3179 = vdwg.mxu0
        %3180 = vmatprep.subr.bf16.mxu0 0
        %3181 = vmatpush1.bf16.msra.mxu0 0
        %3182 = vmatprep.subr.bf16.mxu0 0
        %3183 = vmatpush1.bf16.msra.mxu0 0
        %3184 = vmatprep.subr.bf16.mxu0 0
        %3185 = vmatpush1.bf16.msra.mxu0 0
        %3186 = vmatprep.subr.bf16.mxu0 0
        %3187 = vmatpush1.bf16.msra.mxu0 0
        %3188 = vmatprep.subr.bf16.mxu0 0
        %3189 = vmatpush1.bf16.msra.mxu0 0
        %3190 = vmatprep.subr.bf16.mxu0 0
        %3191 = vmatpush1.bf16.msra.mxu0 0
        %3192 = vmatprep.subr.bf16.mxu0 0
        %3193 = vmatpush1.bf16.msra.mxu0 0
        %3194 = vmatprep.subr.bf16.mxu0 %v3125
        %3195 = vmatpush1.bf16.msra.mxu0 %v3122
        %3196 = vmatprep.subr.bf16.mxu0 0
        %3197 = vmatpush2.bf16.msra.mxu0 0
        %3198 = vmatprep.subr.bf16.mxu0 0
        %3199 = vmatpush2.bf16.msra.mxu0 0
        %3200 = vmatprep.subr.bf16.mxu0 0
        %3201 = vmatpush2.bf16.msra.mxu0 0
        %3202 = vmatprep.subr.bf16.mxu0 0
        %3203 = vmatpush2.bf16.msra.mxu0 0
        %3204 = vmatprep.subr.bf16.mxu0 0
        %3205 = vmatpush2.bf16.msra.mxu0 0
        %3206 = vmatprep.subr.bf16.mxu0 0
        %3207 = vmatpush2.bf16.msra.mxu0 0
        %3208 = vmatprep.subr.bf16.mxu0 0
        %3209 = vmatpush2.bf16.msra.mxu0 0
        %3210 = vmatprep.subr.bf16.mxu0 0
        %3211 = vmatpush2.bf16.msra.mxu0 0
        %3212 = vmatprep.mubr.bf16.mxu0 0
        %3213 = vmatmul.mubr.bf16.gmra.mxu0 %v3113
        %v3214 = vpop.f32.mrf.mxu0
        %v3215 = vadd.f32 %v3024, %v3214
        %v3216 = vpop.f32.mrf.mxu0
        %v3217 = vadd.f32 %v3026, %v3216
        %v3218 = vpop.f32.mrf.mxu0
        %v3219 = vpop.f32.mrf.mxu0
        %3220 = vdwg.mxu0
        %3221 = vmatprep.subr.bf16.mxu0 0
        %3222 = vmatpush1.bf16.msra.mxu0 0
        %3223 = vmatprep.subr.bf16.mxu0 0
        %3224 = vmatpush1.bf16.msra.mxu0 0
        %3225 = vmatprep.subr.bf16.mxu0 0
        %3226 = vmatpush1.bf16.msra.mxu0 0
        %3227 = vmatprep.subr.bf16.mxu0 0
        %3228 = vmatpush1.bf16.msra.mxu0 0
        %3229 = vmatprep.subr.bf16.mxu0 0
        %3230 = vmatpush1.bf16.msra.mxu0 0
        %3231 = vmatprep.subr.bf16.mxu0 0
        %3232 = vmatpush1.bf16.msra.mxu0 0
        %3233 = vmatprep.subr.bf16.mxu0 0
        %3234 = vmatpush1.bf16.msra.mxu0 0
        %3235 = vmatprep.subr.bf16.mxu0 %v3131
        %3236 = vmatpush1.bf16.msra.mxu0 %v3128
        %3237 = vmatprep.subr.bf16.mxu0 0
        %3238 = vmatpush2.bf16.msra.mxu0 0
        %3239 = vmatprep.subr.bf16.mxu0 0
        %3240 = vmatpush2.bf16.msra.mxu0 0
        %3241 = vmatprep.subr.bf16.mxu0 0
        %3242 = vmatpush2.bf16.msra.mxu0 0
        %3243 = vmatprep.subr.bf16.mxu0 0
        %3244 = vmatpush2.bf16.msra.mxu0 0
        %3245 = vmatprep.subr.bf16.mxu0 0
        %3246 = vmatpush2.bf16.msra.mxu0 0
        %3247 = vmatprep.subr.bf16.mxu0 0
        %3248 = vmatpush2.bf16.msra.mxu0 0
        %3249 = vmatprep.subr.bf16.mxu0 0
        %3250 = vmatpush2.bf16.msra.mxu0 0
        %3251 = vmatprep.subr.bf16.mxu0 0
        %3252 = vmatpush2.bf16.msra.mxu0 0
        %3253 = vmatprep.mubr.bf16.mxu0 0
        %3254 = vmatmul.mubr.bf16.gmra.mxu0 %v3113
        %v3255 = vpop.f32.mrf.mxu0
        %v3256 = vadd.f32 %v3065, %v3255
        %v3257 = vpop.f32.mrf.mxu0
        %v3258 = vadd.f32 %v3067, %v3257
        %v3259 = vpop.f32.mrf.mxu0
        %v3260 = vpop.f32.mrf.mxu0
        %3261 = vdwg.mxu0
        %3262 = vmatprep.subr.bf16.mxu0 0
        %3263 = vmatpush1.bf16.msra.mxu0 0
        %3264 = vmatprep.subr.bf16.mxu0 0
        %3265 = vmatpush1.bf16.msra.mxu0 0
        %3266 = vmatprep.subr.bf16.mxu0 0
        %3267 = vmatpush1.bf16.msra.mxu0 0
        %3268 = vmatprep.subr.bf16.mxu0 0
        %3269 = vmatpush1.bf16.msra.mxu0 0
        %3270 = vmatprep.subr.bf16.mxu0 0
        %3271 = vmatpush1.bf16.msra.mxu0 0
        %3272 = vmatprep.subr.bf16.mxu0 0
        %3273 = vmatpush1.bf16.msra.mxu0 0
        %3274 = vmatprep.subr.bf16.mxu0 0
        %3275 = vmatpush1.bf16.msra.mxu0 0
        %3276 = vmatprep.subr.bf16.mxu0 %v3137
        %3277 = vmatpush1.bf16.msra.mxu0 %v3134
        %3278 = vmatprep.subr.bf16.mxu0 0
        %3279 = vmatpush2.bf16.msra.mxu0 0
        %3280 = vmatprep.subr.bf16.mxu0 0
        %3281 = vmatpush2.bf16.msra.mxu0 0
        %3282 = vmatprep.subr.bf16.mxu0 0
        %3283 = vmatpush2.bf16.msra.mxu0 0
        %3284 = vmatprep.subr.bf16.mxu0 0
        %3285 = vmatpush2.bf16.msra.mxu0 0
        %3286 = vmatprep.subr.bf16.mxu0 0
        %3287 = vmatpush2.bf16.msra.mxu0 0
        %3288 = vmatprep.subr.bf16.mxu0 0
        %3289 = vmatpush2.bf16.msra.mxu0 0
        %3290 = vmatprep.subr.bf16.mxu0 0
        %3291 = vmatpush2.bf16.msra.mxu0 0
        %3292 = vmatprep.subr.bf16.mxu0 0
        %3293 = vmatpush2.bf16.msra.mxu0 0
        %3294 = vmatprep.mubr.bf16.mxu0 0
        %3295 = vmatmul.mubr.bf16.gmra.mxu0 %v3113
        %v3296 = vpop.f32.mrf.mxu0
        %v3297 = vadd.f32 %v3106, %v3296
        %v3298 = vpop.f32.mrf.mxu0
        %v3299 = vadd.f32 %v3108, %v3298
        %v3300 = vpop.f32.mrf.mxu0
        %v3301 = vpop.f32.mrf.mxu0
        %3302 = vdwg.mxu0
        %v3303 = vmul.f32 %v3174, 0.5
        %v3304 = vmul.f32 %v3176, 0.5
        %v3305 = vmul.f32 %v3215, 0.5
        %v3306 = vmul.f32 %v3217, 0.5
        %v3307 = vmul.f32 %v3256, 0.5
        %v3308 = vmul.f32 %v3258, 0.5
        %v3309 = vmul.f32 %v3297, 0.5
        %v3310 = vmul.f32 %v3299, 0.5
        %3311 = vst [vmem:[%s255] sm:$0xff] %v3303
        %3312 = vst [vmem:[%s255 + $0x8] sm:$0xff] %v3304
        %3313 = vst [vmem:[%s255 + $0x10] sm:$0xff] %v3305
        %3314 = vst [vmem:[%s255 + $0x18] sm:$0xff] %v3306
        %3315 = vst [vmem:[%s255 + $0x20] sm:$0xff] %v3307
        %3316 = vst [vmem:[%s255 + $0x28] sm:$0xff] %v3308
        %3317 = vst [vmem:[%s255 + $0x30] sm:$0xff] %v3309
        %3318 = vst [vmem:[%s255 + $0x38] sm:$0xff] %v3310
        %s3319 = sand.u32 %s164, 1
        %s3320 = scalar_lea.sflag [#allocation3], %s3319
        %s3321 = sand.u32 %s164, 1
        %s3322 = smul.addr %s3321, 64
        %s3323 = scalar_lea.vmem [#allocation2], %s3322
        // Predicated region
        $region45: #{tpu_custom_call.1} parent=43 // pred_check
          %p3324 = pneg %p174
        $region46: #{tpu_custom_call.1} parent=43 // pred_check_branch
          %3326 = sbr.rel (%p3324) target = $region48
        $region47: #{tpu_custom_call.1} parent=43 // pred_region
          %s3328 = ssub.s32 1024, 1024
          %3329 = vsyncadd %s3320, %s3328
          %s3330 = smul.addr %s20, 8
          %s3331 = smul.addr %s3330, 128
          %s3332 = scalar_lea.hbm %s6, %s3331
          %s3334 = sshll.u32 %s3323, 4
          %s3335 = int_to_ptr.vmem [resolvable:$true] %s3334
          %3337 = dma.vmem_to_hbm [thread:$0]  %s3335, 1024, %s3332, %s3320
        $region48: #{tpu_custom_call.1} parent=43 // pred_fallthru
          _
      $region44: #{tpu_custom_call.1} parent=5 // pred_fallthru
        _
      %p3338 = scmp.le.s32.totalorder 2, %s15
      // Predicated region
      $region49: #{tpu_custom_call.1} parent=5 // pred_check
        %p3339 = pneg %p3338
      $region50: #{tpu_custom_call.1} parent=5 // pred_check_branch
        %3341 = sbr.rel (%p3339) target = $region52
      $region51: #{tpu_custom_call.1} parent=5 // pred_region
        %s3342 = ssub.s32 %s15, 2
        // Predicated region
        $region53: #{tpu_custom_call.1} parent=51 // pred_check
          %p3343 = pneg %p180
        $region54: #{tpu_custom_call.1} parent=51 // pred_check_branch
          %3345 = sbr.rel (%p3343) target = $region56
        $region55: #{tpu_custom_call.1} parent=51 // pred_region
          %s3346 = sand.u32 %s165, 1
          %s3347 = scalar_lea.sflag [#allocation3], %s3346
          %s3348 = sand.u32 %s165, 1
          %s3349 = smul.addr %s3348, 64
          %s3350 = scalar_lea.vmem [#allocation2], %s3349
          %3351 = dma.done %s3347, 1024
        $region56: #{tpu_custom_call.1} parent=51 // pred_fallthru
          _
      $region52: #{tpu_custom_call.1} parent=5 // pred_fallthru
        _
    $region6: #{tpu_custom_call.1} parent=1 // loop_footer
      %s19 = sadd.s32 1, %s15
    $region7: #{tpu_custom_call.1} parent=1 // loop_footer_branch
      %14 = sbr.rel target = $region3
    $region8: #{tpu_custom_call.1} parent=1 // loop_exit
      _
    %3352 = vsyncpa [#allocation3], 1
    %s3353 = scalar_lea.sflag [#allocation3], 1
    %3354 = vsyncpa %s3353, 1

</llo_original>
